<compile_context>
chip_gen: v6e
topology: v6e:2x2x1
jax: 0.10.0
libtpu: 0.0.40
codegen_flags: <defaults>
</compile_context>

<pallas_src>
import functools

import jax
import jax.numpy as jnp
from jax.experimental import pallas as pl
from jax.experimental.pallas import tpu as pltpu


# ------------------------------------------------------------------ fused kernel

def _fused_rnn_with_init_kernel(
    x_ref, x_init_ref,
    w1_ref, b1_ref,
    wih_ref, whh_ref, bias_ref,
    w2_ref, b2_ref,
    wi1_ref, bi1_ref, wi2_ref, bi2_ref, wi3_ref, bi3_ref,
    o_ref,
    seq_ref, gx_ref,
    *, T, B, L, H, compute_dtype):
    """Fused forward.

    x_ref    : [T*B, input_size]   (row = t*B + b)
    x_init   : [B, output_size]
    wih/whh  : [L, H, 4H]   (pre-transposed, gate order i,f,g,o)
    bias     : [L, 1, 4H]   (b_ih + b_hh)
    o_ref    : [T*B, output_size]
    seq_ref  : VMEM [T*B, H]    current layer's input/output sequence
    gx_ref   : VMEM [T*B, 4H]   hoisted input projection (x @ Wih + b) per layer
    """
    cd = compute_dtype
    f32 = jnp.float32

    def mm(a, b):
        # Matmul in compute_dtype (f32 or bf16), always accumulating in f32.
        return jnp.dot(a.astype(cd), b.astype(cd), preferred_element_type=f32)

    # ---- init_net: Linear -> ReLU -> Linear -> ReLU -> Linear   (h0/c0 source)
    xi = x_init_ref[...]                                              # [B, Out]
    t0 = jnp.maximum(mm(xi, wi1_ref[...]) + bi1_ref[...], 0.0)        # [B, H]
    t1 = jnp.maximum(mm(t0, wi2_ref[...]) + bi2_ref[...], 0.0)        # [B, L*H]
    init_out = mm(t1, wi3_ref[...]) + bi3_ref[...]                    # [B, 2*L*H]
    # torch: .view(B, 2, L, H).permute(1, 2, 0, 3)  ==> h0[l], c0[l] are static
    # lane slices of init_out (see below), no data movement needed.

    # ---- linear1 + ReLU over the whole sequence (one GEMM); dropout=0 -> identity
    seq_ref[...] = jnp.maximum(mm(x_ref[...], w1_ref[...]) + b1_ref[...], 0.0)

    # ---- stacked LSTM (layers statically unrolled)
    for l in range(L):
        whh_l = whh_ref[l].astype(cd)                                 # [H, 4H], hoisted

        # Hoist input projection + bias out of the recurrence: ONE [T*B,H]x[H,4H]
        # GEMM per layer instead of T tiny matmuls + T bias adds inside the loop.
        gx_ref[...] = mm(seq_ref[...], wih_ref[l]) + bias_ref[l]

        h0_l = init_out[:, l * H:(l + 1) * H]                         # [B, H]
        c0_l = init_out[:, (L + l) * H:(L + l + 1) * H]               # [B, H]

        def step(t, carry, whh_l=whh_l):
            h, c = carry
            row = pl.multiple_of(t * B, B)
            gates = (jnp.dot(h.astype(cd), whh_l, preferred_element_type=f32)
                     + gx_ref[pl.ds(row, B), :])                      # [B, 4H]
            # Whole-vreg EUP activations, then static lane slices of the results.
            sg = jax.nn.sigmoid(gates)
            tg = jnp.tanh(gates)
            i_g = sg[:, 0 * H:1 * H]
            f_g = sg[:, 1 * H:2 * H]
            g_g = tg[:, 2 * H:3 * H]
            o_g = sg[:, 3 * H:4 * H]
            c_new = f_g * c + i_g * g_g                               # cell state stays f32
            h_new = o_g * jnp.tanh(c_new)
            seq_ref[pl.ds(row, B), :] = h_new                         # layer output in-place
            return (h_new, c_new)

        # Fully unrolled recurrence (T static) so adjacent steps can interleave.
        jax.lax.fori_loop(0, T, step, (h0_l, c0_l), unroll=True)

    # ---- linear2 over the whole sequence (one GEMM)
    o_ref[...] = mm(seq_ref[...], w2_ref[...]) + b2_ref[...]


# ------------------------------------------------------------------ wrapper

def rnn_with_init_forward(params, x_seq, x_init, num_layers, hidden,
                          compute_dtype=jnp.float32):
    """Matches RNNWithInit.forward for equal-length sequences.

    x_seq:  [T, B, input_size], x_init: [B, output_size].
    Returns a list of length B with [T, output_size] arrays.
    """
    T, B, input_size = x_seq.shape
    out_dim = params["w2"].shape[1]

    kernel = functools.partial(
        _fused_rnn_with_init_kernel,
        T=T, B=B, L=num_layers, H=hidden, compute_dtype=compute_dtype)

    # TODO(synk): for large T/B/H on v7x (64 MiB VMEM) stream the time axis in
    #             chunks (grid over T-tiles, (h,c) carried in scratch) and add a
    #             parallel batch grid axis to use both TensorCores.
    y2d = pl.pallas_call(
        kernel,
        out_shape=jax.ShapeDtypeStruct((T * B, out_dim), jnp.float32),
        scratch_shapes=[
            pltpu.VMEM((T * B, hidden), jnp.float32),       # per-layer sequence buffer
            pltpu.VMEM((T * B, 4 * hidden), jnp.float32),   # hoisted input-projection gates
        ],
        compiler_params=pltpu.CompilerParams(vmem_limit_bytes=32 * 1024 * 1024),
    )(x_seq.reshape(T * B, input_size), x_init,
      params["w1"], params["b1"],
      params["wih"], params["whh"], params["bias"],
      params["w2"], params["b2"],
      params["wi1"], params["bi1"], params["wi2"], params["bi2"],
      params["wi3"], params["bi3"])

    y = y2d.reshape(T, B, out_dim)
    return [y[:, i] for i in range(B)]


# ------------------------------------------------------------------ pure-JAX reference

def reference_forward(params, x_seq, x_init, num_layers, hidden):
    T, B, _ = x_seq.shape
    h = jnp.maximum(x_init @ params["wi1"] + params["bi1"], 0.0)
    h = jnp.maximum(h @ params["wi2"] + params["bi2"], 0.0)
    init_out = h @ params["wi3"] + params["bi3"]
    init_out = init_out.reshape(B, 2, num_layers, hidden).transpose(1, 2, 0, 3)
    h0, c0 = init_out[0], init_out[1]

    x_h = jnp.maximum(x_seq @ params["w1"] + params["b1"][0], 0.0)

    seq = x_h
    for l in range(num_layers):
        wih, whh, b = params["wih"][l], params["whh"][l], params["bias"][l]
        hs, cs = h0[l], c0[l]
        outs = []
        for t in range(T):
            gates = seq[t] @ wih + hs @ whh + b
            i_g = jax.nn.sigmoid(gates[:, 0 * hidden:1 * hidden])
            f_g = jax.nn.sigmoid(gates[:, 1 * hidden:2 * hidden])
            g_g = jnp.tanh(gates[:, 2 * hidden:3 * hidden])
            o_g = jax.nn.sigmoid(gates[:, 3 * hidden:4 * hidden])
            cs = f_g * cs + i_g * g_g
            hs = o_g * jnp.tanh(cs)
            outs.append(hs)
        seq = jnp.stack(outs, axis=0)

    y = seq @ params["w2"] + params["b2"][0]
    return [y[:, i] for i in range(B)]


# ------------------------------------------------------------------ param init

def make_params(key, input_size, output_size, hidden, num_layers):
    ks = jax.random.split(key, 16)
    s = 0.1
    return {
        # linear1: input -> hidden   (stored transposed: [in, out])
        "w1": jax.random.normal(ks[0], (input_size, hidden), jnp.float32) * s,
        "b1": jax.random.normal(ks[1], (1, hidden), jnp.float32) * s,
        # linear2: hidden -> output
        "w2": jax.random.normal(ks[2], (hidden, output_size), jnp.float32) * s,
        "b2": jax.random.normal(ks[3], (1, output_size), jnp.float32) * s,
        # LSTM per-layer weights (input size == hidden for all layers), gate order i,f,g,o
        "wih": jax.random.normal(ks[4], (num_layers, hidden, 4 * hidden), jnp.float32) * s,
        "whh": jax.random.normal(ks[5], (num_layers, hidden, 4 * hidden), jnp.float32) * s,
        "bias": jax.random.normal(ks[6], (num_layers, 1, 4 * hidden), jnp.float32) * s,  # b_ih + b_hh
        # init_net: output -> hidden -> hidden*L -> 2*L*hidden
        "wi1": jax.random.normal(ks[7], (output_size, hidden), jnp.float32) * s,
        "bi1": jax.random.normal(ks[8], (1, hidden), jnp.float32) * s,
        "wi2": jax.random.normal(ks[9], (hidden, hidden * num_layers), jnp.float32) * s,
        "bi2": jax.random.normal(ks[10], (1, hidden * num_layers), jnp.float32) * s,
        "wi3": jax.random.normal(ks[11], (hidden * num_layers, 2 * num_layers * hidden), jnp.float32) * s,
        "bi3": jax.random.normal(ks[12], (1, 2 * num_layers * hidden), jnp.float32) * s,
    }


# ------------------------------------------------------------------ main

if __name__ == "__main__":
    input_size, output_size, hidden, num_layers = 16, 12, 32, 2
    T, B = 8, 2

    key = jax.random.PRNGKey(0)
    kp, kx, ki = jax.random.split(key, 3)

    params = make_params(kp, input_size, output_size, hidden, num_layers)
    x_seq = jax.random.normal(kx, (T, B, input_size), jnp.float32)     # [T, B, input_size]
    x_init = jax.random.normal(ki, (B, output_size), jnp.float32)      # [B, output_size]

    # f32 compute here for a tight correctness check; pass compute_dtype=jnp.bfloat16
    # on v6e/v7x at larger shapes for ~2x MXU throughput (loosen tolerance to ~1e-2).
    outs = rnn_with_init_forward(params, x_seq, x_init, num_layers, hidden,
                                 compute_dtype=jnp.float32)
    outs = [jax.block_until_ready(o) for o in outs]

    refs = reference_forward(params, x_seq, x_init, num_layers, hidden)
    for o, r in zip(outs, refs):
        assert o.shape == (T, output_size)
        err = float(jnp.max(jnp.abs(o - r)))
        assert err < 5e-4, err

    print("KERNEL_OK")
</pallas_src>

<mosaic_0001>
module attributes {stable_mosaic.version = 11 : i64} {
  func.func @_fused_rnn_with_init_kernel(%arg0: memref<16x16xf32, #tpu.memory_space<vmem>>, %arg1: memref<2x12xf32, #tpu.memory_space<vmem>>, %arg2: memref<16x32xf32, #tpu.memory_space<vmem>>, %arg3: memref<1x32xf32, #tpu.memory_space<vmem>>, %arg4: memref<2x32x128xf32, #tpu.memory_space<vmem>>, %arg5: memref<2x32x128xf32, #tpu.memory_space<vmem>>, %arg6: memref<2x1x128xf32, #tpu.memory_space<vmem>>, %arg7: memref<32x12xf32, #tpu.memory_space<vmem>>, %arg8: memref<1x12xf32, #tpu.memory_space<vmem>>, %arg9: memref<12x32xf32, #tpu.memory_space<vmem>>, %arg10: memref<1x32xf32, #tpu.memory_space<vmem>>, %arg11: memref<32x64xf32, #tpu.memory_space<vmem>>, %arg12: memref<1x64xf32, #tpu.memory_space<vmem>>, %arg13: memref<64x128xf32, #tpu.memory_space<vmem>>, %arg14: memref<1x128xf32, #tpu.memory_space<vmem>>, %arg15: memref<16x12xf32, #tpu.memory_space<vmem>>, %arg16: memref<16x32xf32, #tpu.memory_space<vmem>>, %arg17: memref<16x128xf32, #tpu.memory_space<vmem>>) attributes {dimension_semantics = [], scalar_prefetch = 0 : i64, scratch_operands = 2 : i64, tpu.core_type = #tpu.core_type<tc>} {
    %c0 = arith.constant 0 : index
    %c0_0 = arith.constant 0 : index
    %0 = vector.load %arg1[%c0, %c0_0] : memref<2x12xf32, #tpu.memory_space<vmem>>, vector<2x12xf32>
    %c0_1 = arith.constant 0 : index
    %c0_2 = arith.constant 0 : index
    %1 = vector.load %arg9[%c0_1, %c0_2] : memref<12x32xf32, #tpu.memory_space<vmem>>, vector<12x32xf32>
    %cst = arith.constant dense<0.000000e+00> : vector<2x32xf32>
    %2 = tpu.matmul %0, %1, %cst {dimension_numbers = #tpu.dot_dimension_numbers<[1], [0], [0], [1], [0, 0, 1, 1], [], []>} : vector<2x12xf32>, vector<12x32xf32>, vector<2x32xf32> -> vector<2x32xf32>
    %c0_3 = arith.constant 0 : index
    %c0_4 = arith.constant 0 : index
    %3 = vector.load %arg10[%c0_3, %c0_4] : memref<1x32xf32, #tpu.memory_space<vmem>>, vector<1x32xf32>
    %4 = vector.broadcast %3 : vector<1x32xf32> to vector<2x32xf32>
    %5 = arith.addf %2, %4 : vector<2x32xf32>
    %cst_5 = arith.constant 0.000000e+00 : f32
    %6 = vector.broadcast %cst_5 : f32 to vector<2x32xf32>
    %7 = arith.maximumf %5, %6 : vector<2x32xf32>
    %c0_6 = arith.constant 0 : index
    %c0_7 = arith.constant 0 : index
    %8 = vector.load %arg11[%c0_6, %c0_7] : memref<32x64xf32, #tpu.memory_space<vmem>>, vector<32x64xf32>
    %cst_8 = arith.constant dense<0.000000e+00> : vector<2x64xf32>
    %9 = tpu.matmul %7, %8, %cst_8 {dimension_numbers = #tpu.dot_dimension_numbers<[1], [0], [0], [1], [0, 0, 1, 1], [], []>} : vector<2x32xf32>, vector<32x64xf32>, vector<2x64xf32> -> vector<2x64xf32>
    %c0_9 = arith.constant 0 : index
    %c0_10 = arith.constant 0 : index
    %10 = vector.load %arg12[%c0_9, %c0_10] : memref<1x64xf32, #tpu.memory_space<vmem>>, vector<1x64xf32>
    %11 = vector.broadcast %10 : vector<1x64xf32> to vector<2x64xf32>
    %12 = arith.addf %9, %11 : vector<2x64xf32>
    %cst_11 = arith.constant 0.000000e+00 : f32
    %13 = vector.broadcast %cst_11 : f32 to vector<2x64xf32>
    %14 = arith.maximumf %12, %13 : vector<2x64xf32>
    %c0_12 = arith.constant 0 : index
    %c0_13 = arith.constant 0 : index
    %15 = vector.load %arg13[%c0_12, %c0_13] : memref<64x128xf32, #tpu.memory_space<vmem>>, vector<64x128xf32>
    %cst_14 = arith.constant dense<0.000000e+00> : vector<2x128xf32>
    %16 = tpu.matmul %14, %15, %cst_14 {dimension_numbers = #tpu.dot_dimension_numbers<[1], [0], [0], [1], [0, 0, 1, 1], [], []>} : vector<2x64xf32>, vector<64x128xf32>, vector<2x128xf32> -> vector<2x128xf32>
    %c0_15 = arith.constant 0 : index
    %c0_16 = arith.constant 0 : index
    %17 = vector.load %arg14[%c0_15, %c0_16] : memref<1x128xf32, #tpu.memory_space<vmem>>, vector<1x128xf32>
    %18 = vector.broadcast %17 : vector<1x128xf32> to vector<2x128xf32>
    %19 = arith.addf %16, %18 : vector<2x128xf32>
    %c0_17 = arith.constant 0 : index
    %c0_18 = arith.constant 0 : index
    %20 = vector.load %arg0[%c0_17, %c0_18] : memref<16x16xf32, #tpu.memory_space<vmem>>, vector<16x16xf32>
    %c0_19 = arith.constant 0 : index
    %c0_20 = arith.constant 0 : index
    %21 = vector.load %arg2[%c0_19, %c0_20] : memref<16x32xf32, #tpu.memory_space<vmem>>, vector<16x32xf32>
    %cst_21 = arith.constant dense<0.000000e+00> : vector<16x32xf32>
    %22 = tpu.matmul %20, %21, %cst_21 {dimension_numbers = #tpu.dot_dimension_numbers<[1], [0], [0], [1], [0, 0, 1, 1], [], []>} : vector<16x16xf32>, vector<16x32xf32>, vector<16x32xf32> -> vector<16x32xf32>
    %c0_22 = arith.constant 0 : index
    %c0_23 = arith.constant 0 : index
    %23 = vector.load %arg3[%c0_22, %c0_23] : memref<1x32xf32, #tpu.memory_space<vmem>>, vector<1x32xf32>
    %24 = vector.broadcast %23 : vector<1x32xf32> to vector<16x32xf32>
    %25 = arith.addf %22, %24 : vector<16x32xf32>
    %cst_24 = arith.constant 0.000000e+00 : f32
    %26 = vector.broadcast %cst_24 : f32 to vector<16x32xf32>
    %27 = arith.maximumf %25, %26 : vector<16x32xf32>
    %c0_25 = arith.constant 0 : index
    %c0_26 = arith.constant 0 : index
    %28 = vector.load %arg16[%c0_25, %c0_26] : memref<16x32xf32, #tpu.memory_space<vmem>>, vector<16x32xf32>
    tpu.vector_store %arg16[%c0_25, %c0_26], %27 {strides = array<i32>} : memref<16x32xf32, #tpu.memory_space<vmem>>, vector<16x32xf32>,
    %c0_27 = arith.constant 0 : index
    %c0_28 = arith.constant 0 : index
    %c0_29 = arith.constant 0 : index
    %29 = vector.load %arg5[%c0_27, %c0_28, %c0_29] : memref<2x32x128xf32, #tpu.memory_space<vmem>>, vector<1x32x128xf32>
    %30 = vector.shape_cast %29 : vector<1x32x128xf32> to vector<32x128xf32>
    %c0_30 = arith.constant 0 : index
    %c0_31 = arith.constant 0 : index
    %31 = vector.load %arg16[%c0_30, %c0_31] : memref<16x32xf32, #tpu.memory_space<vmem>>, vector<16x32xf32>
    %c0_32 = arith.constant 0 : index
    %c0_33 = arith.constant 0 : index
    %c0_34 = arith.constant 0 : index
    %32 = vector.load %arg4[%c0_32, %c0_33, %c0_34] : memref<2x32x128xf32, #tpu.memory_space<vmem>>, vector<1x32x128xf32>
    %33 = vector.shape_cast %32 : vector<1x32x128xf32> to vector<32x128xf32>
    %cst_35 = arith.constant dense<0.000000e+00> : vector<16x128xf32>
    %34 = tpu.matmul %31, %33, %cst_35 {dimension_numbers = #tpu.dot_dimension_numbers<[1], [0], [0], [1], [0, 0, 1, 1], [], []>} : vector<16x32xf32>, vector<32x128xf32>, vector<16x128xf32> -> vector<16x128xf32>
    %c0_36 = arith.constant 0 : index
    %c0_37 = arith.constant 0 : index
    %c0_38 = arith.constant 0 : index
    %35 = vector.load %arg6[%c0_36, %c0_37, %c0_38] : memref<2x1x128xf32, #tpu.memory_space<vmem>>, vector<1x1x128xf32>
    %36 = vector.shape_cast %35 : vector<1x1x128xf32> to vector<1x128xf32>
    %37 = vector.broadcast %36 : vector<1x128xf32> to vector<16x128xf32>
    %38 = arith.addf %34, %37 : vector<16x128xf32>
    %c0_39 = arith.constant 0 : index
    %c0_40 = arith.constant 0 : index
    %39 = vector.load %arg17[%c0_39, %c0_40] : memref<16x128xf32, #tpu.memory_space<vmem>>, vector<16x128xf32>
    tpu.vector_store %arg17[%c0_39, %c0_40], %38 {strides = array<i32>} : memref<16x128xf32, #tpu.memory_space<vmem>>, vector<16x128xf32>,
    %40 = vector.extract_strided_slice %19 {offsets = [0, 0], sizes = [2, 32], strides = [1, 1]} : vector<2x128xf32> to vector<2x32xf32>
    %41 = vector.extract_strided_slice %19 {offsets = [0, 64], sizes = [2, 32], strides = [1, 1]} : vector<2x128xf32> to vector<2x32xf32>
    %c0_i32 = arith.constant 0 : i32
    %c2_i32 = arith.constant 2 : i32
    %42 = arith.muli %c0_i32, %c2_i32 : i32
    %43 = tpu.assume_multiple %42, 2 : i32
    %cst_41 = arith.constant dense<0.000000e+00> : vector<2x128xf32>
    %44 = tpu.matmul %40, %30, %cst_41 {dimension_numbers = #tpu.dot_dimension_numbers<[1], [0], [0], [1], [0, 0, 1, 1], [], []>} : vector<2x32xf32>, vector<32x128xf32>, vector<2x128xf32> -> vector<2x128xf32>
    %45 = arith.index_cast %43 : i32 to index
    %c0_42 = arith.constant 0 : index
    %46 = vector.load %arg17[%45, %c0_42] : memref<16x128xf32, #tpu.memory_space<vmem>>, vector<2x128xf32>
    %47 = arith.addf %44, %46 : vector<2x128xf32>
    %48 = arith.negf %47 : vector<2x128xf32>
    %49 = math.exp %48 : vector<2x128xf32>
    %cst_43 = arith.constant 1.000000e+00 : f32
    %50 = vector.broadcast %cst_43 : f32 to vector<2x128xf32>
    %51 = arith.addf %50, %49 : vector<2x128xf32>
    %52 = arith.divf %50, %51 : vector<2x128xf32>
    %53 = math.tanh %47 : vector<2x128xf32>
    %54 = vector.extract_strided_slice %52 {offsets = [0, 0], sizes = [2, 32], strides = [1, 1]} : vector<2x128xf32> to vector<2x32xf32>
    %55 = vector.extract_strided_slice %52 {offsets = [0, 32], sizes = [2, 32], strides = [1, 1]} : vector<2x128xf32> to vector<2x32xf32>
    %56 = vector.extract_strided_slice %53 {offsets = [0, 64], sizes = [2, 32], strides = [1, 1]} : vector<2x128xf32> to vector<2x32xf32>
    %57 = vector.extract_strided_slice %52 {offsets = [0, 96], sizes = [2, 32], strides = [1, 1]} : vector<2x128xf32> to vector<2x32xf32>
    %58 = arith.mulf %55, %41 : vector<2x32xf32>
    %59 = arith.mulf %54, %56 : vector<2x32xf32>
    %60 = arith.addf %58, %59 : vector<2x32xf32>
    %61 = math.tanh %60 : vector<2x32xf32>
    %62 = arith.mulf %57, %61 : vector<2x32xf32>
    %63 = arith.index_cast %43 : i32 to index
    %c0_44 = arith.constant 0 : index
    %64 = vector.load %arg16[%63, %c0_44] : memref<16x32xf32, #tpu.memory_space<vmem>>, vector<2x32xf32>
    tpu.vector_store %arg16[%63, %c0_44], %62 {strides = array<i32>} : memref<16x32xf32, #tpu.memory_space<vmem>>, vector<2x32xf32>,
    %c1_i32 = arith.constant 1 : i32
    %c2_i32_45 = arith.constant 2 : i32
    %65 = arith.muli %c1_i32, %c2_i32_45 : i32
    %66 = tpu.assume_multiple %65, 2 : i32
    %cst_46 = arith.constant dense<0.000000e+00> : vector<2x128xf32>
    %67 = tpu.matmul %62, %30, %cst_46 {dimension_numbers = #tpu.dot_dimension_numbers<[1], [0], [0], [1], [0, 0, 1, 1], [], []>} : vector<2x32xf32>, vector<32x128xf32>, vector<2x128xf32> -> vector<2x128xf32>
    %68 = arith.index_cast %66 : i32 to index
    %c0_47 = arith.constant 0 : index
    %69 = vector.load %arg17[%68, %c0_47] : memref<16x128xf32, #tpu.memory_space<vmem>>, vector<2x128xf32>
    %70 = arith.addf %67, %69 : vector<2x128xf32>
    %71 = arith.negf %70 : vector<2x128xf32>
    %72 = math.exp %71 : vector<2x128xf32>
    %cst_48 = arith.constant 1.000000e+00 : f32
    %73 = vector.broadcast %cst_48 : f32 to vector<2x128xf32>
    %74 = arith.addf %73, %72 : vector<2x128xf32>
    %75 = arith.divf %73, %74 : vector<2x128xf32>
    %76 = math.tanh %70 : vector<2x128xf32>
    %77 = vector.extract_strided_slice %75 {offsets = [0, 0], sizes = [2, 32], strides = [1, 1]} : vector<2x128xf32> to vector<2x32xf32>
    %78 = vector.extract_strided_slice %75 {offsets = [0, 32], sizes = [2, 32], strides = [1, 1]} : vector<2x128xf32> to vector<2x32xf32>
    %79 = vector.extract_strided_slice %76 {offsets = [0, 64], sizes = [2, 32], strides = [1, 1]} : vector<2x128xf32> to vector<2x32xf32>
    %80 = vector.extract_strided_slice %75 {offsets = [0, 96], sizes = [2, 32], strides = [1, 1]} : vector<2x128xf32> to vector<2x32xf32>
    %81 = arith.mulf %78, %60 : vector<2x32xf32>
    %82 = arith.mulf %77, %79 : vector<2x32xf32>
    %83 = arith.addf %81, %82 : vector<2x32xf32>
    %84 = math.tanh %83 : vector<2x32xf32>
    %85 = arith.mulf %80, %84 : vector<2x32xf32>
    %86 = arith.index_cast %66 : i32 to index
    %c0_49 = arith.constant 0 : index
    %87 = vector.load %arg16[%86, %c0_49] : memref<16x32xf32, #tpu.memory_space<vmem>>, vector<2x32xf32>
    tpu.vector_store %arg16[%86, %c0_49], %85 {strides = array<i32>} : memref<16x32xf32, #tpu.memory_space<vmem>>, vector<2x32xf32>,
    %c2_i32_50 = arith.constant 2 : i32
    %c2_i32_51 = arith.constant 2 : i32
    %88 = arith.muli %c2_i32_50, %c2_i32_51 : i32
    %89 = tpu.assume_multiple %88, 2 : i32
    %cst_52 = arith.constant dense<0.000000e+00> : vector<2x128xf32>
    %90 = tpu.matmul %85, %30, %cst_52 {dimension_numbers = #tpu.dot_dimension_numbers<[1], [0], [0], [1], [0, 0, 1, 1], [], []>} : vector<2x32xf32>, vector<32x128xf32>, vector<2x128xf32> -> vector<2x128xf32>
    %91 = arith.index_cast %89 : i32 to index
    %c0_53 = arith.constant 0 : index
    %92 = vector.load %arg17[%91, %c0_53] : memref<16x128xf32, #tpu.memory_space<vmem>>, vector<2x128xf32>
    %93 = arith.addf %90, %92 : vector<2x128xf32>
    %94 = arith.negf %93 : vector<2x128xf32>
    %95 = math.exp %94 : vector<2x128xf32>
    %cst_54 = arith.constant 1.000000e+00 : f32
    %96 = vector.broadcast %cst_54 : f32 to vector<2x128xf32>
    %97 = arith.addf %96, %95 : vector<2x128xf32>
    %98 = arith.divf %96, %97 : vector<2x128xf32>
    %99 = math.tanh %93 : vector<2x128xf32>
    %100 = vector.extract_strided_slice %98 {offsets = [0, 0], sizes = [2, 32], strides = [1, 1]} : vector<2x128xf32> to vector<2x32xf32>
    %101 = vector.extract_strided_slice %98 {offsets = [0, 32], sizes = [2, 32], strides = [1, 1]} : vector<2x128xf32> to vector<2x32xf32>
    %102 = vector.extract_strided_slice %99 {offsets = [0, 64], sizes = [2, 32], strides = [1, 1]} : vector<2x128xf32> to vector<2x32xf32>
    %103 = vector.extract_strided_slice %98 {offsets = [0, 96], sizes = [2, 32], strides = [1, 1]} : vector<2x128xf32> to vector<2x32xf32>
    %104 = arith.mulf %101, %83 : vector<2x32xf32>
    %105 = arith.mulf %100, %102 : vector<2x32xf32>
    %106 = arith.addf %104, %105 : vector<2x32xf32>
    %107 = math.tanh %106 : vector<2x32xf32>
    %108 = arith.mulf %103, %107 : vector<2x32xf32>
    %109 = arith.index_cast %89 : i32 to index
    %c0_55 = arith.constant 0 : index
    %110 = vector.load %arg16[%109, %c0_55] : memref<16x32xf32, #tpu.memory_space<vmem>>, vector<2x32xf32>
    tpu.vector_store %arg16[%109, %c0_55], %108 {strides = array<i32>} : memref<16x32xf32, #tpu.memory_space<vmem>>, vector<2x32xf32>,
    %c3_i32 = arith.constant 3 : i32
    %c2_i32_56 = arith.constant 2 : i32
    %111 = arith.muli %c3_i32, %c2_i32_56 : i32
    %112 = tpu.assume_multiple %111, 2 : i32
    %cst_57 = arith.constant dense<0.000000e+00> : vector<2x128xf32>
    %113 = tpu.matmul %108, %30, %cst_57 {dimension_numbers = #tpu.dot_dimension_numbers<[1], [0], [0], [1], [0, 0, 1, 1], [], []>} : vector<2x32xf32>, vector<32x128xf32>, vector<2x128xf32> -> vector<2x128xf32>
    %114 = arith.index_cast %112 : i32 to index
    %c0_58 = arith.constant 0 : index
    %115 = vector.load %arg17[%114, %c0_58] : memref<16x128xf32, #tpu.memory_space<vmem>>, vector<2x128xf32>
    %116 = arith.addf %113, %115 : vector<2x128xf32>
    %117 = arith.negf %116 : vector<2x128xf32>
    %118 = math.exp %117 : vector<2x128xf32>
    %cst_59 = arith.constant 1.000000e+00 : f32
    %119 = vector.broadcast %cst_59 : f32 to vector<2x128xf32>
    %120 = arith.addf %119, %118 : vector<2x128xf32>
    %121 = arith.divf %119, %120 : vector<2x128xf32>
    %122 = math.tanh %116 : vector<2x128xf32>
    %123 = vector.extract_strided_slice %121 {offsets = [0, 0], sizes = [2, 32], strides = [1, 1]} : vector<2x128xf32> to vector<2x32xf32>
    %124 = vector.extract_strided_slice %121 {offsets = [0, 32], sizes = [2, 32], strides = [1, 1]} : vector<2x128xf32> to vector<2x32xf32>
    %125 = vector.extract_strided_slice %122 {offsets = [0, 64], sizes = [2, 32], strides = [1, 1]} : vector<2x128xf32> to vector<2x32xf32>
    %126 = vector.extract_strided_slice %121 {offsets = [0, 96], sizes = [2, 32], strides = [1, 1]} : vector<2x128xf32> to vector<2x32xf32>
    %127 = arith.mulf %124, %106 : vector<2x32xf32>
    %128 = arith.mulf %123, %125 : vector<2x32xf32>
    %129 = arith.addf %127, %128 : vector<2x32xf32>
    %130 = math.tanh %129 : vector<2x32xf32>
    %131 = arith.mulf %126, %130 : vector<2x32xf32>
    %132 = arith.index_cast %112 : i32 to index
    %c0_60 = arith.constant 0 : index
    %133 = vector.load %arg16[%132, %c0_60] : memref<16x32xf32, #tpu.memory_space<vmem>>, vector<2x32xf32>
    tpu.vector_store %arg16[%132, %c0_60], %131 {strides = array<i32>} : memref<16x32xf32, #tpu.memory_space<vmem>>, vector<2x32xf32>,
    %c4_i32 = arith.constant 4 : i32
    %c2_i32_61 = arith.constant 2 : i32
    %134 = arith.muli %c4_i32, %c2_i32_61 : i32
    %135 = tpu.assume_multiple %134, 2 : i32
    %cst_62 = arith.constant dense<0.000000e+00> : vector<2x128xf32>
    %136 = tpu.matmul %131, %30, %cst_62 {dimension_numbers = #tpu.dot_dimension_numbers<[1], [0], [0], [1], [0, 0, 1, 1], [], []>} : vector<2x32xf32>, vector<32x128xf32>, vector<2x128xf32> -> vector<2x128xf32>
    %137 = arith.index_cast %135 : i32 to index
    %c0_63 = arith.constant 0 : index
    %138 = vector.load %arg17[%137, %c0_63] : memref<16x128xf32, #tpu.memory_space<vmem>>, vector<2x128xf32>
    %139 = arith.addf %136, %138 : vector<2x128xf32>
    %140 = arith.negf %139 : vector<2x128xf32>
    %141 = math.exp %140 : vector<2x128xf32>
    %cst_64 = arith.constant 1.000000e+00 : f32
    %142 = vector.broadcast %cst_64 : f32 to vector<2x128xf32>
    %143 = arith.addf %142, %141 : vector<2x128xf32>
    %144 = arith.divf %142, %143 : vector<2x128xf32>
    %145 = math.tanh %139 : vector<2x128xf32>
    %146 = vector.extract_strided_slice %144 {offsets = [0, 0], sizes = [2, 32], strides = [1, 1]} : vector<2x128xf32> to vector<2x32xf32>
    %147 = vector.extract_strided_slice %144 {offsets = [0, 32], sizes = [2, 32], strides = [1, 1]} : vector<2x128xf32> to vector<2x32xf32>
    %148 = vector.extract_strided_slice %145 {offsets = [0, 64], sizes = [2, 32], strides = [1, 1]} : vector<2x128xf32> to vector<2x32xf32>
    %149 = vector.extract_strided_slice %144 {offsets = [0, 96], sizes = [2, 32], strides = [1, 1]} : vector<2x128xf32> to vector<2x32xf32>
    %150 = arith.mulf %147, %129 : vector<2x32xf32>
    %151 = arith.mulf %146, %148 : vector<2x32xf32>
    %152 = arith.addf %150, %151 : vector<2x32xf32>
    %153 = math.tanh %152 : vector<2x32xf32>
    %154 = arith.mulf %149, %153 : vector<2x32xf32>
    %155 = arith.index_cast %135 : i32 to index
    %c0_65 = arith.constant 0 : index
    %156 = vector.load %arg16[%155, %c0_65] : memref<16x32xf32, #tpu.memory_space<vmem>>, vector<2x32xf32>
    tpu.vector_store %arg16[%155, %c0_65], %154 {strides = array<i32>} : memref<16x32xf32, #tpu.memory_space<vmem>>, vector<2x32xf32>,
    %c5_i32 = arith.constant 5 : i32
    %c2_i32_66 = arith.constant 2 : i32
    %157 = arith.muli %c5_i32, %c2_i32_66 : i32
    %158 = tpu.assume_multiple %157, 2 : i32
    %cst_67 = arith.constant dense<0.000000e+00> : vector<2x128xf32>
    %159 = tpu.matmul %154, %30, %cst_67 {dimension_numbers = #tpu.dot_dimension_numbers<[1], [0], [0], [1], [0, 0, 1, 1], [], []>} : vector<2x32xf32>, vector<32x128xf32>, vector<2x128xf32> -> vector<2x128xf32>
    %160 = arith.index_cast %158 : i32 to index
    %c0_68 = arith.constant 0 : index
    %161 = vector.load %arg17[%160, %c0_68] : memref<16x128xf32, #tpu.memory_space<vmem>>, vector<2x128xf32>
    %162 = arith.addf %159, %161 : vector<2x128xf32>
    %163 = arith.negf %162 : vector<2x128xf32>
    %164 = math.exp %163 : vector<2x128xf32>
    %cst_69 = arith.constant 1.000000e+00 : f32
    %165 = vector.broadcast %cst_69 : f32 to vector<2x128xf32>
    %166 = arith.addf %165, %164 : vector<2x128xf32>
    %167 = arith.divf %165, %166 : vector<2x128xf32>
    %168 = math.tanh %162 : vector<2x128xf32>
    %169 = vector.extract_strided_slice %167 {offsets = [0, 0], sizes = [2, 32], strides = [1, 1]} : vector<2x128xf32> to vector<2x32xf32>
    %170 = vector.extract_strided_slice %167 {offsets = [0, 32], sizes = [2, 32], strides = [1, 1]} : vector<2x128xf32> to vector<2x32xf32>
    %171 = vector.extract_strided_slice %168 {offsets = [0, 64], sizes = [2, 32], strides = [1, 1]} : vector<2x128xf32> to vector<2x32xf32>
    %172 = vector.extract_strided_slice %167 {offsets = [0, 96], sizes = [2, 32], strides = [1, 1]} : vector<2x128xf32> to vector<2x32xf32>
    %173 = arith.mulf %170, %152 : vector<2x32xf32>
    %174 = arith.mulf %169, %171 : vector<2x32xf32>
    %175 = arith.addf %173, %174 : vector<2x32xf32>
    %176 = math.tanh %175 : vector<2x32xf32>
    %177 = arith.mulf %172, %176 : vector<2x32xf32>
    %178 = arith.index_cast %158 : i32 to index
    %c0_70 = arith.constant 0 : index
    %179 = vector.load %arg16[%178, %c0_70] : memref<16x32xf32, #tpu.memory_space<vmem>>, vector<2x32xf32>
    tpu.vector_store %arg16[%178, %c0_70], %177 {strides = array<i32>} : memref<16x32xf32, #tpu.memory_space<vmem>>, vector<2x32xf32>,
    %c6_i32 = arith.constant 6 : i32
    %c2_i32_71 = arith.constant 2 : i32
    %180 = arith.muli %c6_i32, %c2_i32_71 : i32
    %181 = tpu.assume_multiple %180, 2 : i32
    %cst_72 = arith.constant dense<0.000000e+00> : vector<2x128xf32>
    %182 = tpu.matmul %177, %30, %cst_72 {dimension_numbers = #tpu.dot_dimension_numbers<[1], [0], [0], [1], [0, 0, 1, 1], [], []>} : vector<2x32xf32>, vector<32x128xf32>, vector<2x128xf32> -> vector<2x128xf32>
    %183 = arith.index_cast %181 : i32 to index
    %c0_73 = arith.constant 0 : index
    %184 = vector.load %arg17[%183, %c0_73] : memref<16x128xf32, #tpu.memory_space<vmem>>, vector<2x128xf32>
    %185 = arith.addf %182, %184 : vector<2x128xf32>
    %186 = arith.negf %185 : vector<2x128xf32>
    %187 = math.exp %186 : vector<2x128xf32>
    %cst_74 = arith.constant 1.000000e+00 : f32
    %188 = vector.broadcast %cst_74 : f32 to vector<2x128xf32>
    %189 = arith.addf %188, %187 : vector<2x128xf32>
    %190 = arith.divf %188, %189 : vector<2x128xf32>
    %191 = math.tanh %185 : vector<2x128xf32>
    %192 = vector.extract_strided_slice %190 {offsets = [0, 0], sizes = [2, 32], strides = [1, 1]} : vector<2x128xf32> to vector<2x32xf32>
    %193 = vector.extract_strided_slice %190 {offsets = [0, 32], sizes = [2, 32], strides = [1, 1]} : vector<2x128xf32> to vector<2x32xf32>
    %194 = vector.extract_strided_slice %191 {offsets = [0, 64], sizes = [2, 32], strides = [1, 1]} : vector<2x128xf32> to vector<2x32xf32>
    %195 = vector.extract_strided_slice %190 {offsets = [0, 96], sizes = [2, 32], strides = [1, 1]} : vector<2x128xf32> to vector<2x32xf32>
    %196 = arith.mulf %193, %175 : vector<2x32xf32>
    %197 = arith.mulf %192, %194 : vector<2x32xf32>
    %198 = arith.addf %196, %197 : vector<2x32xf32>
    %199 = math.tanh %198 : vector<2x32xf32>
    %200 = arith.mulf %195, %199 : vector<2x32xf32>
    %201 = arith.index_cast %181 : i32 to index
    %c0_75 = arith.constant 0 : index
    %202 = vector.load %arg16[%201, %c0_75] : memref<16x32xf32, #tpu.memory_space<vmem>>, vector<2x32xf32>
    tpu.vector_store %arg16[%201, %c0_75], %200 {strides = array<i32>} : memref<16x32xf32, #tpu.memory_space<vmem>>, vector<2x32xf32>,
    %c7_i32 = arith.constant 7 : i32
    %c2_i32_76 = arith.constant 2 : i32
    %203 = arith.muli %c7_i32, %c2_i32_76 : i32
    %204 = tpu.assume_multiple %203, 2 : i32
    %cst_77 = arith.constant dense<0.000000e+00> : vector<2x128xf32>
    %205 = tpu.matmul %200, %30, %cst_77 {dimension_numbers = #tpu.dot_dimension_numbers<[1], [0], [0], [1], [0, 0, 1, 1], [], []>} : vector<2x32xf32>, vector<32x128xf32>, vector<2x128xf32> -> vector<2x128xf32>
    %206 = arith.index_cast %204 : i32 to index
    %c0_78 = arith.constant 0 : index
    %207 = vector.load %arg17[%206, %c0_78] : memref<16x128xf32, #tpu.memory_space<vmem>>, vector<2x128xf32>
    %208 = arith.addf %205, %207 : vector<2x128xf32>
    %209 = arith.negf %208 : vector<2x128xf32>
    %210 = math.exp %209 : vector<2x128xf32>
    %cst_79 = arith.constant 1.000000e+00 : f32
    %211 = vector.broadcast %cst_79 : f32 to vector<2x128xf32>
    %212 = arith.addf %211, %210 : vector<2x128xf32>
    %213 = arith.divf %211, %212 : vector<2x128xf32>
    %214 = math.tanh %208 : vector<2x128xf32>
    %215 = vector.extract_strided_slice %213 {offsets = [0, 0], sizes = [2, 32], strides = [1, 1]} : vector<2x128xf32> to vector<2x32xf32>
    %216 = vector.extract_strided_slice %213 {offsets = [0, 32], sizes = [2, 32], strides = [1, 1]} : vector<2x128xf32> to vector<2x32xf32>
    %217 = vector.extract_strided_slice %214 {offsets = [0, 64], sizes = [2, 32], strides = [1, 1]} : vector<2x128xf32> to vector<2x32xf32>
    %218 = vector.extract_strided_slice %213 {offsets = [0, 96], sizes = [2, 32], strides = [1, 1]} : vector<2x128xf32> to vector<2x32xf32>
    %219 = arith.mulf %216, %198 : vector<2x32xf32>
    %220 = arith.mulf %215, %217 : vector<2x32xf32>
    %221 = arith.addf %219, %220 : vector<2x32xf32>
    %222 = math.tanh %221 : vector<2x32xf32>
    %223 = arith.mulf %218, %222 : vector<2x32xf32>
    %224 = arith.index_cast %204 : i32 to index
    %c0_80 = arith.constant 0 : index
    %225 = vector.load %arg16[%224, %c0_80] : memref<16x32xf32, #tpu.memory_space<vmem>>, vector<2x32xf32>
    tpu.vector_store %arg16[%224, %c0_80], %223 {strides = array<i32>} : memref<16x32xf32, #tpu.memory_space<vmem>>, vector<2x32xf32>,
    %c8_i32 = arith.constant 8 : i32
    %c1 = arith.constant 1 : index
    %c0_81 = arith.constant 0 : index
    %c0_82 = arith.constant 0 : index
    %226 = vector.load %arg5[%c1, %c0_81, %c0_82] : memref<2x32x128xf32, #tpu.memory_space<vmem>>, vector<1x32x128xf32>
    %227 = vector.shape_cast %226 : vector<1x32x128xf32> to vector<32x128xf32>
    %c0_83 = arith.constant 0 : index
    %c0_84 = arith.constant 0 : index
    %228 = vector.load %arg16[%c0_83, %c0_84] : memref<16x32xf32, #tpu.memory_space<vmem>>, vector<16x32xf32>
    %c1_85 = arith.constant 1 : index
    %c0_86 = arith.constant 0 : index
    %c0_87 = arith.constant 0 : index
    %229 = vector.load %arg4[%c1_85, %c0_86, %c0_87] : memref<2x32x128xf32, #tpu.memory_space<vmem>>, vector<1x32x128xf32>
    %230 = vector.shape_cast %229 : vector<1x32x128xf32> to vector<32x128xf32>
    %cst_88 = arith.constant dense<0.000000e+00> : vector<16x128xf32>
    %231 = tpu.matmul %228, %230, %cst_88 {dimension_numbers = #tpu.dot_dimension_numbers<[1], [0], [0], [1], [0, 0, 1, 1], [], []>} : vector<16x32xf32>, vector<32x128xf32>, vector<16x128xf32> -> vector<16x128xf32>
    %c1_89 = arith.constant 1 : index
    %c0_90 = arith.constant 0 : index
    %c0_91 = arith.constant 0 : index
    %232 = vector.load %arg6[%c1_89, %c0_90, %c0_91] : memref<2x1x128xf32, #tpu.memory_space<vmem>>, vector<1x1x128xf32>
    %233 = vector.shape_cast %232 : vector<1x1x128xf32> to vector<1x128xf32>
    %234 = vector.broadcast %233 : vector<1x128xf32> to vector<16x128xf32>
    %235 = arith.addf %231, %234 : vector<16x128xf32>
    %c0_92 = arith.constant 0 : index
    %c0_93 = arith.constant 0 : index
    %236 = vector.load %arg17[%c0_92, %c0_93] : memref<16x128xf32, #tpu.memory_space<vmem>>, vector<16x128xf32>
    tpu.vector_store %arg17[%c0_92, %c0_93], %235 {strides = array<i32>} : memref<16x128xf32, #tpu.memory_space<vmem>>, vector<16x128xf32>,
    %237 = vector.extract_strided_slice %19 {offsets = [0, 32], sizes = [2, 32], strides = [1, 1]} : vector<2x128xf32> to vector<2x32xf32>
    %238 = vector.extract_strided_slice %19 {offsets = [0, 96], sizes = [2, 32], strides = [1, 1]} : vector<2x128xf32> to vector<2x32xf32>
    %c0_i32_94 = arith.constant 0 : i32
    %c2_i32_95 = arith.constant 2 : i32
    %239 = arith.muli %c0_i32_94, %c2_i32_95 : i32
    %240 = tpu.assume_multiple %239, 2 : i32
    %cst_96 = arith.constant dense<0.000000e+00> : vector<2x128xf32>
    %241 = tpu.matmul %237, %227, %cst_96 {dimension_numbers = #tpu.dot_dimension_numbers<[1], [0], [0], [1], [0, 0, 1, 1], [], []>} : vector<2x32xf32>, vector<32x128xf32>, vector<2x128xf32> -> vector<2x128xf32>
    %242 = arith.index_cast %240 : i32 to index
    %c0_97 = arith.constant 0 : index
    %243 = vector.load %arg17[%242, %c0_97] : memref<16x128xf32, #tpu.memory_space<vmem>>, vector<2x128xf32>
    %244 = arith.addf %241, %243 : vector<2x128xf32>
    %245 = arith.negf %244 : vector<2x128xf32>
    %246 = math.exp %245 : vector<2x128xf32>
    %cst_98 = arith.constant 1.000000e+00 : f32
    %247 = vector.broadcast %cst_98 : f32 to vector<2x128xf32>
    %248 = arith.addf %247, %246 : vector<2x128xf32>
    %249 = arith.divf %247, %248 : vector<2x128xf32>
    %250 = math.tanh %244 : vector<2x128xf32>
    %251 = vector.extract_strided_slice %249 {offsets = [0, 0], sizes = [2, 32], strides = [1, 1]} : vector<2x128xf32> to vector<2x32xf32>
    %252 = vector.extract_strided_slice %249 {offsets = [0, 32], sizes = [2, 32], strides = [1, 1]} : vector<2x128xf32> to vector<2x32xf32>
    %253 = vector.extract_strided_slice %250 {offsets = [0, 64], sizes = [2, 32], strides = [1, 1]} : vector<2x128xf32> to vector<2x32xf32>
    %254 = vector.extract_strided_slice %249 {offsets = [0, 96], sizes = [2, 32], strides = [1, 1]} : vector<2x128xf32> to vector<2x32xf32>
    %255 = arith.mulf %252, %238 : vector<2x32xf32>
    %256 = arith.mulf %251, %253 : vector<2x32xf32>
    %257 = arith.addf %255, %256 : vector<2x32xf32>
    %258 = math.tanh %257 : vector<2x32xf32>
    %259 = arith.mulf %254, %258 : vector<2x32xf32>
    %260 = arith.index_cast %240 : i32 to index
    %c0_99 = arith.constant 0 : index
    %261 = vector.load %arg16[%260, %c0_99] : memref<16x32xf32, #tpu.memory_space<vmem>>, vector<2x32xf32>
    tpu.vector_store %arg16[%260, %c0_99], %259 {strides = array<i32>} : memref<16x32xf32, #tpu.memory_space<vmem>>, vector<2x32xf32>,
    %c1_i32_100 = arith.constant 1 : i32
    %c2_i32_101 = arith.constant 2 : i32
    %262 = arith.muli %c1_i32_100, %c2_i32_101 : i32
    %263 = tpu.assume_multiple %262, 2 : i32
    %cst_102 = arith.constant dense<0.000000e+00> : vector<2x128xf32>
    %264 = tpu.matmul %259, %227, %cst_102 {dimension_numbers = #tpu.dot_dimension_numbers<[1], [0], [0], [1], [0, 0, 1, 1], [], []>} : vector<2x32xf32>, vector<32x128xf32>, vector<2x128xf32> -> vector<2x128xf32>
    %265 = arith.index_cast %263 : i32 to index
    %c0_103 = arith.constant 0 : index
    %266 = vector.load %arg17[%265, %c0_103] : memref<16x128xf32, #tpu.memory_space<vmem>>, vector<2x128xf32>
    %267 = arith.addf %264, %266 : vector<2x128xf32>
    %268 = arith.negf %267 : vector<2x128xf32>
    %269 = math.exp %268 : vector<2x128xf32>
    %cst_104 = arith.constant 1.000000e+00 : f32
    %270 = vector.broadcast %cst_104 : f32 to vector<2x128xf32>
    %271 = arith.addf %270, %269 : vector<2x128xf32>
    %272 = arith.divf %270, %271 : vector<2x128xf32>
    %273 = math.tanh %267 : vector<2x128xf32>
    %274 = vector.extract_strided_slice %272 {offsets = [0, 0], sizes = [2, 32], strides = [1, 1]} : vector<2x128xf32> to vector<2x32xf32>
    %275 = vector.extract_strided_slice %272 {offsets = [0, 32], sizes = [2, 32], strides = [1, 1]} : vector<2x128xf32> to vector<2x32xf32>
    %276 = vector.extract_strided_slice %273 {offsets = [0, 64], sizes = [2, 32], strides = [1, 1]} : vector<2x128xf32> to vector<2x32xf32>
    %277 = vector.extract_strided_slice %272 {offsets = [0, 96], sizes = [2, 32], strides = [1, 1]} : vector<2x128xf32> to vector<2x32xf32>
    %278 = arith.mulf %275, %257 : vector<2x32xf32>
    %279 = arith.mulf %274, %276 : vector<2x32xf32>
    %280 = arith.addf %278, %279 : vector<2x32xf32>
    %281 = math.tanh %280 : vector<2x32xf32>
    %282 = arith.mulf %277, %281 : vector<2x32xf32>
    %283 = arith.index_cast %263 : i32 to index
    %c0_105 = arith.constant 0 : index
    %284 = vector.load %arg16[%283, %c0_105] : memref<16x32xf32, #tpu.memory_space<vmem>>, vector<2x32xf32>
    tpu.vector_store %arg16[%283, %c0_105], %282 {strides = array<i32>} : memref<16x32xf32, #tpu.memory_space<vmem>>, vector<2x32xf32>,
    %c2_i32_106 = arith.constant 2 : i32
    %c2_i32_107 = arith.constant 2 : i32
    %285 = arith.muli %c2_i32_106, %c2_i32_107 : i32
    %286 = tpu.assume_multiple %285, 2 : i32
    %cst_108 = arith.constant dense<0.000000e+00> : vector<2x128xf32>
    %287 = tpu.matmul %282, %227, %cst_108 {dimension_numbers = #tpu.dot_dimension_numbers<[1], [0], [0], [1], [0, 0, 1, 1], [], []>} : vector<2x32xf32>, vector<32x128xf32>, vector<2x128xf32> -> vector<2x128xf32>
    %288 = arith.index_cast %286 : i32 to index
    %c0_109 = arith.constant 0 : index
    %289 = vector.load %arg17[%288, %c0_109] : memref<16x128xf32, #tpu.memory_space<vmem>>, vector<2x128xf32>
    %290 = arith.addf %287, %289 : vector<2x128xf32>
    %291 = arith.negf %290 : vector<2x128xf32>
    %292 = math.exp %291 : vector<2x128xf32>
    %cst_110 = arith.constant 1.000000e+00 : f32
    %293 = vector.broadcast %cst_110 : f32 to vector<2x128xf32>
    %294 = arith.addf %293, %292 : vector<2x128xf32>
    %295 = arith.divf %293, %294 : vector<2x128xf32>
    %296 = math.tanh %290 : vector<2x128xf32>
    %297 = vector.extract_strided_slice %295 {offsets = [0, 0], sizes = [2, 32], strides = [1, 1]} : vector<2x128xf32> to vector<2x32xf32>
    %298 = vector.extract_strided_slice %295 {offsets = [0, 32], sizes = [2, 32], strides = [1, 1]} : vector<2x128xf32> to vector<2x32xf32>
    %299 = vector.extract_strided_slice %296 {offsets = [0, 64], sizes = [2, 32], strides = [1, 1]} : vector<2x128xf32> to vector<2x32xf32>
    %300 = vector.extract_strided_slice %295 {offsets = [0, 96], sizes = [2, 32], strides = [1, 1]} : vector<2x128xf32> to vector<2x32xf32>
    %301 = arith.mulf %298, %280 : vector<2x32xf32>
    %302 = arith.mulf %297, %299 : vector<2x32xf32>
    %303 = arith.addf %301, %302 : vector<2x32xf32>
    %304 = math.tanh %303 : vector<2x32xf32>
    %305 = arith.mulf %300, %304 : vector<2x32xf32>
    %306 = arith.index_cast %286 : i32 to index
    %c0_111 = arith.constant 0 : index
    %307 = vector.load %arg16[%306, %c0_111] : memref<16x32xf32, #tpu.memory_space<vmem>>, vector<2x32xf32>
    tpu.vector_store %arg16[%306, %c0_111], %305 {strides = array<i32>} : memref<16x32xf32, #tpu.memory_space<vmem>>, vector<2x32xf32>,
    %c3_i32_112 = arith.constant 3 : i32
    %c2_i32_113 = arith.constant 2 : i32
    %308 = arith.muli %c3_i32_112, %c2_i32_113 : i32
    %309 = tpu.assume_multiple %308, 2 : i32
    %cst_114 = arith.constant dense<0.000000e+00> : vector<2x128xf32>
    %310 = tpu.matmul %305, %227, %cst_114 {dimension_numbers = #tpu.dot_dimension_numbers<[1], [0], [0], [1], [0, 0, 1, 1], [], []>} : vector<2x32xf32>, vector<32x128xf32>, vector<2x128xf32> -> vector<2x128xf32>
    %311 = arith.index_cast %309 : i32 to index
    %c0_115 = arith.constant 0 : index
    %312 = vector.load %arg17[%311, %c0_115] : memref<16x128xf32, #tpu.memory_space<vmem>>, vector<2x128xf32>
    %313 = arith.addf %310, %312 : vector<2x128xf32>
    %314 = arith.negf %313 : vector<2x128xf32>
    %315 = math.exp %314 : vector<2x128xf32>
    %cst_116 = arith.constant 1.000000e+00 : f32
    %316 = vector.broadcast %cst_116 : f32 to vector<2x128xf32>
    %317 = arith.addf %316, %315 : vector<2x128xf32>
    %318 = arith.divf %316, %317 : vector<2x128xf32>
    %319 = math.tanh %313 : vector<2x128xf32>
    %320 = vector.extract_strided_slice %318 {offsets = [0, 0], sizes = [2, 32], strides = [1, 1]} : vector<2x128xf32> to vector<2x32xf32>
    %321 = vector.extract_strided_slice %318 {offsets = [0, 32], sizes = [2, 32], strides = [1, 1]} : vector<2x128xf32> to vector<2x32xf32>
    %322 = vector.extract_strided_slice %319 {offsets = [0, 64], sizes = [2, 32], strides = [1, 1]} : vector<2x128xf32> to vector<2x32xf32>
    %323 = vector.extract_strided_slice %318 {offsets = [0, 96], sizes = [2, 32], strides = [1, 1]} : vector<2x128xf32> to vector<2x32xf32>
    %324 = arith.mulf %321, %303 : vector<2x32xf32>
    %325 = arith.mulf %320, %322 : vector<2x32xf32>
    %326 = arith.addf %324, %325 : vector<2x32xf32>
    %327 = math.tanh %326 : vector<2x32xf32>
    %328 = arith.mulf %323, %327 : vector<2x32xf32>
    %329 = arith.index_cast %309 : i32 to index
    %c0_117 = arith.constant 0 : index
    %330 = vector.load %arg16[%329, %c0_117] : memref<16x32xf32, #tpu.memory_space<vmem>>, vector<2x32xf32>
    tpu.vector_store %arg16[%329, %c0_117], %328 {strides = array<i32>} : memref<16x32xf32, #tpu.memory_space<vmem>>, vector<2x32xf32>,
    %c4_i32_118 = arith.constant 4 : i32
    %c2_i32_119 = arith.constant 2 : i32
    %331 = arith.muli %c4_i32_118, %c2_i32_119 : i32
    %332 = tpu.assume_multiple %331, 2 : i32
    %cst_120 = arith.constant dense<0.000000e+00> : vector<2x128xf32>
    %333 = tpu.matmul %328, %227, %cst_120 {dimension_numbers = #tpu.dot_dimension_numbers<[1], [0], [0], [1], [0, 0, 1, 1], [], []>} : vector<2x32xf32>, vector<32x128xf32>, vector<2x128xf32> -> vector<2x128xf32>
    %334 = arith.index_cast %332 : i32 to index
    %c0_121 = arith.constant 0 : index
    %335 = vector.load %arg17[%334, %c0_121] : memref<16x128xf32, #tpu.memory_space<vmem>>, vector<2x128xf32>
    %336 = arith.addf %333, %335 : vector<2x128xf32>
    %337 = arith.negf %336 : vector<2x128xf32>
    %338 = math.exp %337 : vector<2x128xf32>
    %cst_122 = arith.constant 1.000000e+00 : f32
    %339 = vector.broadcast %cst_122 : f32 to vector<2x128xf32>
    %340 = arith.addf %339, %338 : vector<2x128xf32>
    %341 = arith.divf %339, %340 : vector<2x128xf32>
    %342 = math.tanh %336 : vector<2x128xf32>
    %343 = vector.extract_strided_slice %341 {offsets = [0, 0], sizes = [2, 32], strides = [1, 1]} : vector<2x128xf32> to vector<2x32xf32>
    %344 = vector.extract_strided_slice %341 {offsets = [0, 32], sizes = [2, 32], strides = [1, 1]} : vector<2x128xf32> to vector<2x32xf32>
    %345 = vector.extract_strided_slice %342 {offsets = [0, 64], sizes = [2, 32], strides = [1, 1]} : vector<2x128xf32> to vector<2x32xf32>
    %346 = vector.extract_strided_slice %341 {offsets = [0, 96], sizes = [2, 32], strides = [1, 1]} : vector<2x128xf32> to vector<2x32xf32>
    %347 = arith.mulf %344, %326 : vector<2x32xf32>
    %348 = arith.mulf %343, %345 : vector<2x32xf32>
    %349 = arith.addf %347, %348 : vector<2x32xf32>
    %350 = math.tanh %349 : vector<2x32xf32>
    %351 = arith.mulf %346, %350 : vector<2x32xf32>
    %352 = arith.index_cast %332 : i32 to index
    %c0_123 = arith.constant 0 : index
    %353 = vector.load %arg16[%352, %c0_123] : memref<16x32xf32, #tpu.memory_space<vmem>>, vector<2x32xf32>
    tpu.vector_store %arg16[%352, %c0_123], %351 {strides = array<i32>} : memref<16x32xf32, #tpu.memory_space<vmem>>, vector<2x32xf32>,
    %c5_i32_124 = arith.constant 5 : i32
    %c2_i32_125 = arith.constant 2 : i32
    %354 = arith.muli %c5_i32_124, %c2_i32_125 : i32
    %355 = tpu.assume_multiple %354, 2 : i32
    %cst_126 = arith.constant dense<0.000000e+00> : vector<2x128xf32>
    %356 = tpu.matmul %351, %227, %cst_126 {dimension_numbers = #tpu.dot_dimension_numbers<[1], [0], [0], [1], [0, 0, 1, 1], [], []>} : vector<2x32xf32>, vector<32x128xf32>, vector<2x128xf32> -> vector<2x128xf32>
    %357 = arith.index_cast %355 : i32 to index
    %c0_127 = arith.constant 0 : index
    %358 = vector.load %arg17[%357, %c0_127] : memref<16x128xf32, #tpu.memory_space<vmem>>, vector<2x128xf32>
    %359 = arith.addf %356, %358 : vector<2x128xf32>
    %360 = arith.negf %359 : vector<2x128xf32>
    %361 = math.exp %360 : vector<2x128xf32>
    %cst_128 = arith.constant 1.000000e+00 : f32
    %362 = vector.broadcast %cst_128 : f32 to vector<2x128xf32>
    %363 = arith.addf %362, %361 : vector<2x128xf32>
    %364 = arith.divf %362, %363 : vector<2x128xf32>
    %365 = math.tanh %359 : vector<2x128xf32>
    %366 = vector.extract_strided_slice %364 {offsets = [0, 0], sizes = [2, 32], strides = [1, 1]} : vector<2x128xf32> to vector<2x32xf32>
    %367 = vector.extract_strided_slice %364 {offsets = [0, 32], sizes = [2, 32], strides = [1, 1]} : vector<2x128xf32> to vector<2x32xf32>
    %368 = vector.extract_strided_slice %365 {offsets = [0, 64], sizes = [2, 32], strides = [1, 1]} : vector<2x128xf32> to vector<2x32xf32>
    %369 = vector.extract_strided_slice %364 {offsets = [0, 96], sizes = [2, 32], strides = [1, 1]} : vector<2x128xf32> to vector<2x32xf32>
    %370 = arith.mulf %367, %349 : vector<2x32xf32>
    %371 = arith.mulf %366, %368 : vector<2x32xf32>
    %372 = arith.addf %370, %371 : vector<2x32xf32>
    %373 = math.tanh %372 : vector<2x32xf32>
    %374 = arith.mulf %369, %373 : vector<2x32xf32>
    %375 = arith.index_cast %355 : i32 to index
    %c0_129 = arith.constant 0 : index
    %376 = vector.load %arg16[%375, %c0_129] : memref<16x32xf32, #tpu.memory_space<vmem>>, vector<2x32xf32>
    tpu.vector_store %arg16[%375, %c0_129], %374 {strides = array<i32>} : memref<16x32xf32, #tpu.memory_space<vmem>>, vector<2x32xf32>,
    %c6_i32_130 = arith.constant 6 : i32
    %c2_i32_131 = arith.constant 2 : i32
    %377 = arith.muli %c6_i32_130, %c2_i32_131 : i32
    %378 = tpu.assume_multiple %377, 2 : i32
    %cst_132 = arith.constant dense<0.000000e+00> : vector<2x128xf32>
    %379 = tpu.matmul %374, %227, %cst_132 {dimension_numbers = #tpu.dot_dimension_numbers<[1], [0], [0], [1], [0, 0, 1, 1], [], []>} : vector<2x32xf32>, vector<32x128xf32>, vector<2x128xf32> -> vector<2x128xf32>
    %380 = arith.index_cast %378 : i32 to index
    %c0_133 = arith.constant 0 : index
    %381 = vector.load %arg17[%380, %c0_133] : memref<16x128xf32, #tpu.memory_space<vmem>>, vector<2x128xf32>
    %382 = arith.addf %379, %381 : vector<2x128xf32>
    %383 = arith.negf %382 : vector<2x128xf32>
    %384 = math.exp %383 : vector<2x128xf32>
    %cst_134 = arith.constant 1.000000e+00 : f32
    %385 = vector.broadcast %cst_134 : f32 to vector<2x128xf32>
    %386 = arith.addf %385, %384 : vector<2x128xf32>
    %387 = arith.divf %385, %386 : vector<2x128xf32>
    %388 = math.tanh %382 : vector<2x128xf32>
    %389 = vector.extract_strided_slice %387 {offsets = [0, 0], sizes = [2, 32], strides = [1, 1]} : vector<2x128xf32> to vector<2x32xf32>
    %390 = vector.extract_strided_slice %387 {offsets = [0, 32], sizes = [2, 32], strides = [1, 1]} : vector<2x128xf32> to vector<2x32xf32>
    %391 = vector.extract_strided_slice %388 {offsets = [0, 64], sizes = [2, 32], strides = [1, 1]} : vector<2x128xf32> to vector<2x32xf32>
    %392 = vector.extract_strided_slice %387 {offsets = [0, 96], sizes = [2, 32], strides = [1, 1]} : vector<2x128xf32> to vector<2x32xf32>
    %393 = arith.mulf %390, %372 : vector<2x32xf32>
    %394 = arith.mulf %389, %391 : vector<2x32xf32>
    %395 = arith.addf %393, %394 : vector<2x32xf32>
    %396 = math.tanh %395 : vector<2x32xf32>
    %397 = arith.mulf %392, %396 : vector<2x32xf32>
    %398 = arith.index_cast %378 : i32 to index
    %c0_135 = arith.constant 0 : index
    %399 = vector.load %arg16[%398, %c0_135] : memref<16x32xf32, #tpu.memory_space<vmem>>, vector<2x32xf32>
    tpu.vector_store %arg16[%398, %c0_135], %397 {strides = array<i32>} : memref<16x32xf32, #tpu.memory_space<vmem>>, vector<2x32xf32>,
    %c7_i32_136 = arith.constant 7 : i32
    %c2_i32_137 = arith.constant 2 : i32
    %400 = arith.muli %c7_i32_136, %c2_i32_137 : i32
    %401 = tpu.assume_multiple %400, 2 : i32
    %cst_138 = arith.constant dense<0.000000e+00> : vector<2x128xf32>
    %402 = tpu.matmul %397, %227, %cst_138 {dimension_numbers = #tpu.dot_dimension_numbers<[1], [0], [0], [1], [0, 0, 1, 1], [], []>} : vector<2x32xf32>, vector<32x128xf32>, vector<2x128xf32> -> vector<2x128xf32>
    %403 = arith.index_cast %401 : i32 to index
    %c0_139 = arith.constant 0 : index
    %404 = vector.load %arg17[%403, %c0_139] : memref<16x128xf32, #tpu.memory_space<vmem>>, vector<2x128xf32>
    %405 = arith.addf %402, %404 : vector<2x128xf32>
    %406 = arith.negf %405 : vector<2x128xf32>
    %407 = math.exp %406 : vector<2x128xf32>
    %cst_140 = arith.constant 1.000000e+00 : f32
    %408 = vector.broadcast %cst_140 : f32 to vector<2x128xf32>
    %409 = arith.addf %408, %407 : vector<2x128xf32>
    %410 = arith.divf %408, %409 : vector<2x128xf32>
    %411 = math.tanh %405 : vector<2x128xf32>
    %412 = vector.extract_strided_slice %410 {offsets = [0, 0], sizes = [2, 32], strides = [1, 1]} : vector<2x128xf32> to vector<2x32xf32>
    %413 = vector.extract_strided_slice %410 {offsets = [0, 32], sizes = [2, 32], strides = [1, 1]} : vector<2x128xf32> to vector<2x32xf32>
    %414 = vector.extract_strided_slice %411 {offsets = [0, 64], sizes = [2, 32], strides = [1, 1]} : vector<2x128xf32> to vector<2x32xf32>
    %415 = vector.extract_strided_slice %410 {offsets = [0, 96], sizes = [2, 32], strides = [1, 1]} : vector<2x128xf32> to vector<2x32xf32>
    %416 = arith.mulf %413, %395 : vector<2x32xf32>
    %417 = arith.mulf %412, %414 : vector<2x32xf32>
    %418 = arith.addf %416, %417 : vector<2x32xf32>
    %419 = math.tanh %418 : vector<2x32xf32>
    %420 = arith.mulf %415, %419 : vector<2x32xf32>
    %421 = arith.index_cast %401 : i32 to index
    %c0_141 = arith.constant 0 : index
    %422 = vector.load %arg16[%421, %c0_141] : memref<16x32xf32, #tpu.memory_space<vmem>>, vector<2x32xf32>
    tpu.vector_store %arg16[%421, %c0_141], %420 {strides = array<i32>} : memref<16x32xf32, #tpu.memory_space<vmem>>, vector<2x32xf32>,
    %c8_i32_142 = arith.constant 8 : i32
    %c0_143 = arith.constant 0 : index
    %c0_144 = arith.constant 0 : index
    %423 = vector.load %arg16[%c0_143, %c0_144] : memref<16x32xf32, #tpu.memory_space<vmem>>, vector<16x32xf32>
    %c0_145 = arith.constant 0 : index
    %c0_146 = arith.constant 0 : index
    %424 = vector.load %arg7[%c0_145, %c0_146] : memref<32x12xf32, #tpu.memory_space<vmem>>, vector<32x12xf32>
    %cst_147 = arith.constant dense<0.000000e+00> : vector<16x12xf32>
    %425 = tpu.matmul %423, %424, %cst_147 {dimension_numbers = #tpu.dot_dimension_numbers<[1], [0], [0], [1], [0, 0, 1, 1], [], []>} : vector<16x32xf32>, vector<32x12xf32>, vector<16x12xf32> -> vector<16x12xf32>
    %c0_148 = arith.constant 0 : index
    %c0_149 = arith.constant 0 : index
    %426 = vector.load %arg8[%c0_148, %c0_149] : memref<1x12xf32, #tpu.memory_space<vmem>>, vector<1x12xf32>
    %427 = vector.broadcast %426 : vector<1x12xf32> to vector<16x12xf32>
    %428 = arith.addf %425, %427 : vector<16x12xf32>
    %c0_150 = arith.constant 0 : index
    %c0_151 = arith.constant 0 : index
    %429 = vector.load %arg15[%c0_150, %c0_151] : memref<16x12xf32, #tpu.memory_space<vmem>>, vector<16x12xf32>
    tpu.vector_store %arg15[%c0_150, %c0_151], %428 {strides = array<i32>} : memref<16x12xf32, #tpu.memory_space<vmem>>, vector<16x12xf32>,
    return
  }
}

</mosaic_0001>

<llo_original>
// kernel: tpu_custom_call.1
$region0: #{tpu_custom_call.1}
  #allocation0 [shape = 'u32[]', space=smem, size = 0x4, offset = 0x4, fixed_abs, tag = 'smem constant byte address 0x4 - core index']
  #allocation1 [shape = 'u32[144,128]{1,0:T(1,128)}', space=vmem, size = 0x12000, scoped, tag = 'internal scratch']
  #allocation2 [shape = 'f32[16,32]{1,0:T(8,128)}', space=vmem, size = 0x2000, scoped, tag = 'scratch operand']
  #allocation3 [shape = 'f32[16,128]{1,0:T(8,128)}', space=vmem, size = 0x2000, scoped, tag = 'scratch operand']
  %s0 = inlined_call_operand.hbm [shape: f32[16,16], index: 0, kind: input, shape index: {}]
  %s1 = inlined_call_operand.vmem [shape: f32[2,12], index: 1, kind: input, shape index: {}]
  %s2 = inlined_call_operand.hbm [shape: f32[16,32], index: 2, kind: input, shape index: {}]
  %s3 = inlined_call_operand.vmem [shape: f32[1,32], index: 3, kind: input, shape index: {}]
  %s4 = inlined_call_operand.hbm [shape: f32[2,32,128], index: 4, kind: input, shape index: {}]
  %s5 = inlined_call_operand.hbm [shape: f32[2,32,128], index: 5, kind: input, shape index: {}]
  %s6 = inlined_call_operand.vmem [shape: f32[2,1,128], index: 6, kind: input, shape index: {}]
  %s7 = inlined_call_operand.vmem [shape: f32[32,12], index: 7, kind: input, shape index: {}]
  %s8 = inlined_call_operand.vmem [shape: f32[1,12], index: 8, kind: input, shape index: {}]
  %s9 = inlined_call_operand.hbm [shape: f32[12,32], index: 9, kind: input, shape index: {}]
  %s10 = inlined_call_operand.vmem [shape: f32[1,32], index: 10, kind: input, shape index: {}]
  %s11 = inlined_call_operand.hbm [shape: f32[32,64], index: 11, kind: input, shape index: {}]
  %s12 = inlined_call_operand.hbm [shape: f32[1,64], index: 12, kind: input, shape index: {}]
  %s13 = inlined_call_operand.vmem [shape: f32[64,128], index: 13, kind: input, shape index: {}]
  %s14 = inlined_call_operand.vmem [shape: f32[1,128], index: 14, kind: input, shape index: {}]
  %s15 = inlined_call_operand.hbm [shape: f32[16,12], index: 15, kind: output, shape index: {}]
  %s16 = sld [smem:[#allocation0]]
  $region98: #{tpu_custom_call.1} parent=0
    _
  %s18 = ssub.s32 1, %s16
  %s19 = scalar_select 0, %s18, %s16
  $region1: #{tpu_custom_call.1} parent=0
    #allocation4 [shape = 'u8[8192]{0}', space=vmem, size = 0x2000, scoped, tag = 'input window, operand 0, single buffered']
    #allocation5 [shape = 's32[1]{0}', space=sflag, size = 0x4, scoped, tag = 'scoped memory for tpu_custom_call.1']
    #allocation6 [shape = 's32[1]{0}', space=sflag, size = 0x4, scoped, tag = 'scoped memory for tpu_custom_call.1']
    #allocation7 [shape = 'u8[8192]{0}', space=vmem, size = 0x2000, scoped, tag = 'input window, operand 2, single buffered']
    #allocation8 [shape = 's32[1]{0}', space=sflag, size = 0x4, scoped, tag = 'scoped memory for tpu_custom_call.1']
    #allocation9 [shape = 'u8[32768]{0}', space=vmem, size = 0x8000, scoped, tag = 'input window, operand 4, single buffered']
    #allocation10 [shape = 'u8[32768]{0}', space=vmem, size = 0x8000, scoped, tag = 'input window, operand 5, single buffered']
    #allocation11 [shape = 's32[1]{0}', space=sflag, size = 0x4, scoped, tag = 'scoped memory for tpu_custom_call.1']
    #allocation12 [shape = 'u8[8192]{0}', space=vmem, size = 0x2000, scoped, tag = 'input window, operand 9, single buffered']
    #allocation13 [shape = 'u8[16384]{0}', space=vmem, size = 0x4000, scoped, tag = 'input window, operand 11, single buffered']
    #allocation14 [shape = 's32[1]{0}', space=sflag, size = 0x4, scoped, tag = 'scoped memory for tpu_custom_call.1']
    #allocation15 [shape = 'u8[512]{0}', space=vmem, size = 0x400, scoped, tag = 'input window, operand 12, single buffered']
    #allocation16 [shape = 'u8[8192]{0}', space=vmem, size = 0x2000, scoped, tag = 'output window, operand 0, single buffered']
    %20 = vsyncpa [#allocation5], 0
    %21 = vsyncpa [#allocation8], 0
    %22 = vsyncpa [#allocation11], 0
    %23 = vsyncpa [#allocation14], 0
    %24 = vsyncpa [#allocation6], 0
    // Predicated region
    $region2: #{tpu_custom_call.1} parent=1 // pred_check
      _
    $region3: #{tpu_custom_call.1} parent=1 // pred_check_branch
      %26 = sbr.rel (0) target = $region5
    $region4: #{tpu_custom_call.1} parent=1 // pred_region
      %s28 = ssub.s32 256, 256
      %29 = vsyncadd [#allocation5], %s28
      %s30 = sshll.u32 [#allocation4], 4
      %s31 = int_to_ptr.vmem [resolvable:$true] %s30
      %36 = dma.hbm_to_vmem [thread:$0]  %s0, 256, %s31, [#allocation5], 128, 128, 8
    $region5: #{tpu_custom_call.1} parent=1 // pred_fallthru
      _
    // Predicated region
    $region6: #{tpu_custom_call.1} parent=1 // pred_check
      _
    $region7: #{tpu_custom_call.1} parent=1 // pred_check_branch
      %38 = sbr.rel (0) target = $region9
    $region8: #{tpu_custom_call.1} parent=1 // pred_region
      _
    $region9: #{tpu_custom_call.1} parent=1 // pred_fallthru
      _
    // Predicated region
    $region10: #{tpu_custom_call.1} parent=1 // pred_check
      _
    $region11: #{tpu_custom_call.1} parent=1 // pred_check_branch
      %40 = sbr.rel (0) target = $region13
    $region12: #{tpu_custom_call.1} parent=1 // pred_region
      %s42 = ssub.s32 256, 256
      %43 = vsyncadd [#allocation8], %s42
      %s44 = sshll.u32 [#allocation7], 4
      %s45 = int_to_ptr.vmem [resolvable:$true] %s44
      %50 = dma.hbm_to_vmem [thread:$0]  %s2, 256, %s45, [#allocation8], 128, 128, 8
    $region13: #{tpu_custom_call.1} parent=1 // pred_fallthru
      _
    // Predicated region
    $region14: #{tpu_custom_call.1} parent=1 // pred_check
      _
    $region15: #{tpu_custom_call.1} parent=1 // pred_check_branch
      %52 = sbr.rel (0) target = $region17
    $region16: #{tpu_custom_call.1} parent=1 // pred_region
      _
    $region17: #{tpu_custom_call.1} parent=1 // pred_fallthru
      _
    // Predicated region
    $region18: #{tpu_custom_call.1} parent=1 // pred_check
      _
    $region19: #{tpu_custom_call.1} parent=1 // pred_check_branch
      %54 = sbr.rel (0) target = $region21
    $region20: #{tpu_custom_call.1} parent=1 // pred_region
      %s56 = ssub.s32 1024, 1024
      %57 = vsyncadd [#allocation8], %s56
      %s58 = sshll.u32 [#allocation9], 4
      %s59 = int_to_ptr.vmem [resolvable:$true] %s58
      %64 = dma.hbm_to_vmem [thread:$0]  %s4, 1024, %s59, [#allocation8], 128, 128, 8
    $region21: #{tpu_custom_call.1} parent=1 // pred_fallthru
      _
    // Predicated region
    $region22: #{tpu_custom_call.1} parent=1 // pred_check
      _
    $region23: #{tpu_custom_call.1} parent=1 // pred_check_branch
      %66 = sbr.rel (0) target = $region25
    $region24: #{tpu_custom_call.1} parent=1 // pred_region
      %s68 = ssub.s32 1024, 1024
      %69 = vsyncadd [#allocation11], %s68
      %s70 = sshll.u32 [#allocation10], 4
      %s71 = int_to_ptr.vmem [resolvable:$true] %s70
      %76 = dma.hbm_to_vmem [thread:$0]  %s5, 1024, %s71, [#allocation11], 128, 128, 8
    $region25: #{tpu_custom_call.1} parent=1 // pred_fallthru
      _
    // Predicated region
    $region26: #{tpu_custom_call.1} parent=1 // pred_check
      _
    $region27: #{tpu_custom_call.1} parent=1 // pred_check_branch
      %78 = sbr.rel (0) target = $region29
    $region28: #{tpu_custom_call.1} parent=1 // pred_region
      _
    $region29: #{tpu_custom_call.1} parent=1 // pred_fallthru
      _
    // Predicated region
    $region30: #{tpu_custom_call.1} parent=1 // pred_check
      _
    $region31: #{tpu_custom_call.1} parent=1 // pred_check_branch
      %80 = sbr.rel (0) target = $region33
    $region32: #{tpu_custom_call.1} parent=1 // pred_region
      _
    $region33: #{tpu_custom_call.1} parent=1 // pred_fallthru
      _
    // Predicated region
    $region34: #{tpu_custom_call.1} parent=1 // pred_check
      _
    $region35: #{tpu_custom_call.1} parent=1 // pred_check_branch
      %82 = sbr.rel (0) target = $region37
    $region36: #{tpu_custom_call.1} parent=1 // pred_region
      _
    $region37: #{tpu_custom_call.1} parent=1 // pred_fallthru
      _
    // Predicated region
    $region38: #{tpu_custom_call.1} parent=1 // pred_check
      _
    $region39: #{tpu_custom_call.1} parent=1 // pred_check_branch
      %84 = sbr.rel (0) target = $region41
    $region40: #{tpu_custom_call.1} parent=1 // pred_region
      %s86 = ssub.s32 256, 256
      %87 = vsyncadd [#allocation11], %s86
      %s88 = sshll.u32 [#allocation12], 4
      %s89 = int_to_ptr.vmem [resolvable:$true] %s88
      %94 = dma.hbm_to_vmem [thread:$0]  %s9, 256, %s89, [#allocation11], 128, 128, 8
    $region41: #{tpu_custom_call.1} parent=1 // pred_fallthru
      _
    // Predicated region
    $region42: #{tpu_custom_call.1} parent=1 // pred_check
      _
    $region43: #{tpu_custom_call.1} parent=1 // pred_check_branch
      %96 = sbr.rel (0) target = $region45
    $region44: #{tpu_custom_call.1} parent=1 // pred_region
      _
    $region45: #{tpu_custom_call.1} parent=1 // pred_fallthru
      _
    // Predicated region
    $region46: #{tpu_custom_call.1} parent=1 // pred_check
      _
    $region47: #{tpu_custom_call.1} parent=1 // pred_check_branch
      %98 = sbr.rel (0) target = $region49
    $region48: #{tpu_custom_call.1} parent=1 // pred_region
      %s100 = ssub.s32 512, 512
      %101 = vsyncadd [#allocation14], %s100
      %s102 = sshll.u32 [#allocation13], 4
      %s103 = int_to_ptr.vmem [resolvable:$true] %s102
      %108 = dma.hbm_to_vmem [thread:$0]  %s11, 512, %s103, [#allocation14], 128, 128, 8
    $region49: #{tpu_custom_call.1} parent=1 // pred_fallthru
      _
    // Predicated region
    $region50: #{tpu_custom_call.1} parent=1 // pred_check
      _
    $region51: #{tpu_custom_call.1} parent=1 // pred_check_branch
      %110 = sbr.rel (0) target = $region53
    $region52: #{tpu_custom_call.1} parent=1 // pred_region
      %s112 = ssub.s32 16, 16
      %113 = vsyncadd [#allocation14], %s112
      %s115 = sshll.u32 [#allocation15], 4
      %s116 = int_to_ptr.vmem [resolvable:$true] %s115
      %118 = dma.hbm_to_vmem [thread:$0]  %s12, 16, %s116, [#allocation14]
    $region53: #{tpu_custom_call.1} parent=1 // pred_fallthru
      _
    // Predicated region
    $region54: #{tpu_custom_call.1} parent=1 // pred_check
      _
    $region55: #{tpu_custom_call.1} parent=1 // pred_check_branch
      %120 = sbr.rel (0) target = $region57
    $region56: #{tpu_custom_call.1} parent=1 // pred_region
      _
    $region57: #{tpu_custom_call.1} parent=1 // pred_fallthru
      _
    // Predicated region
    $region58: #{tpu_custom_call.1} parent=1 // pred_check
      _
    $region59: #{tpu_custom_call.1} parent=1 // pred_check_branch
      %122 = sbr.rel (0) target = $region61
    $region60: #{tpu_custom_call.1} parent=1 // pred_region
      _
    $region61: #{tpu_custom_call.1} parent=1 // pred_fallthru
      _
    // Predicated region
    $region62: #{tpu_custom_call.1} parent=1 // pred_check
      _
    $region63: #{tpu_custom_call.1} parent=1 // pred_check_branch
      %124 = sbr.rel (0) target = $region65
    $region64: #{tpu_custom_call.1} parent=1 // pred_region
      %125 = dma.done [#allocation5], 256
    $region65: #{tpu_custom_call.1} parent=1 // pred_fallthru
      _
    // Predicated region
    $region66: #{tpu_custom_call.1} parent=1 // pred_check
      _
    $region67: #{tpu_custom_call.1} parent=1 // pred_check_branch
      %127 = sbr.rel (0) target = $region69
    $region68: #{tpu_custom_call.1} parent=1 // pred_region
      %128 = dma.done [#allocation8], 256
    $region69: #{tpu_custom_call.1} parent=1 // pred_fallthru
      _
    // Predicated region
    $region70: #{tpu_custom_call.1} parent=1 // pred_check
      _
    $region71: #{tpu_custom_call.1} parent=1 // pred_check_branch
      %130 = sbr.rel (0) target = $region73
    $region72: #{tpu_custom_call.1} parent=1 // pred_region
      %131 = dma.done [#allocation8], 1024
    $region73: #{tpu_custom_call.1} parent=1 // pred_fallthru
      _
    // Predicated region
    $region74: #{tpu_custom_call.1} parent=1 // pred_check
      _
    $region75: #{tpu_custom_call.1} parent=1 // pred_check_branch
      %133 = sbr.rel (0) target = $region77
    $region76: #{tpu_custom_call.1} parent=1 // pred_region
      %134 = dma.done [#allocation11], 1024
    $region77: #{tpu_custom_call.1} parent=1 // pred_fallthru
      _
    // Predicated region
    $region78: #{tpu_custom_call.1} parent=1 // pred_check
      _
    $region79: #{tpu_custom_call.1} parent=1 // pred_check_branch
      %136 = sbr.rel (0) target = $region81
    $region80: #{tpu_custom_call.1} parent=1 // pred_region
      %137 = dma.done [#allocation11], 256
    $region81: #{tpu_custom_call.1} parent=1 // pred_fallthru
      _
    // Predicated region
    $region82: #{tpu_custom_call.1} parent=1 // pred_check
      _
    $region83: #{tpu_custom_call.1} parent=1 // pred_check_branch
      %139 = sbr.rel (0) target = $region85
    $region84: #{tpu_custom_call.1} parent=1 // pred_region
      %140 = dma.done [#allocation14], 512
    $region85: #{tpu_custom_call.1} parent=1 // pred_fallthru
      _
    // Predicated region
    $region86: #{tpu_custom_call.1} parent=1 // pred_check
      _
    $region87: #{tpu_custom_call.1} parent=1 // pred_check_branch
      %142 = sbr.rel (0) target = $region89
    $region88: #{tpu_custom_call.1} parent=1 // pred_region
      %143 = dma.done [#allocation14], 16
    $region89: #{tpu_custom_call.1} parent=1 // pred_fallthru
      _
    %v144 = vld [vmem:[%s1] sm:$0x3]
    %v145 = vld [vmem:[#allocation12] sm:$0xff]
    %v146 = vld [vmem:[#allocation12 + $0x8] sm:$0xf]
    %v147 = vld [vmem:[%s10] sm:$0x1]
    %v149 = vlaneseq
    %v150 = vshrl.u32 %v149, 7
    %v151 = vsub.s32 0, %v150
    %v152 = vrot.slane %v147, %v151
    %vm154 = vcmask 97280
    %v156 = vsel %vm154, %v144, 0
    %vm158 = vcmask 1043456
    %v160 = vsel %vm158, %v146, 0
    %162 = vmatprep.subr.mxu0 0.0
    %163 = vmatpush1.msra.mxu0 0.0
    %164 = vmatprep.subr.mxu0 0.0
    %165 = vmatpush1.msra.mxu0 0.0
    %166 = vmatprep.subr.mxu0 0.0
    %167 = vmatpush1.msra.mxu0 0.0
    %168 = vmatprep.subr.mxu0 0.0
    %169 = vmatpush1.msra.mxu0 0.0
    %170 = vmatprep.subr.mxu0 0.0
    %171 = vmatpush1.msra.mxu0 0.0
    %172 = vmatprep.subr.mxu0 0.0
    %173 = vmatpush1.msra.mxu0 0.0
    %174 = vmatprep.subr.mxu0 0.0
    %175 = vmatpush1.msra.mxu0 0.0
    %176 = vmatprep.subr.mxu0 0.0
    %177 = vmatpush1.msra.mxu0 0.0
    %178 = vmatprep.subr.mxu0 0.0
    %179 = vmatpush1.msra.mxu0 0.0
    %180 = vmatprep.subr.mxu0 0.0
    %181 = vmatpush1.msra.mxu0 0.0
    %182 = vmatprep.subr.mxu0 0.0
    %183 = vmatpush1.msra.mxu0 0.0
    %184 = vmatprep.subr.mxu0 0.0
    %185 = vmatpush1.msra.mxu0 0.0
    %186 = vmatprep.subr.mxu0 0.0
    %187 = vmatpush1.msra.mxu0 0.0
    %188 = vmatprep.subr.mxu0 0.0
    %189 = vmatpush1.msra.mxu0 0.0
    %190 = vmatprep.subr.mxu0 0.0
    %191 = vmatpush1.msra.mxu0 %v160
    %192 = vmatprep.subr.mxu0 0.0
    %193 = vmatpush1.msra.mxu0 %v145
    %194 = vmatprep.subr.mxu0 0.0
    %195 = vmatpush2.msra.mxu0 0.0
    %196 = vmatprep.subr.mxu0 0.0
    %197 = vmatpush2.msra.mxu0 0.0
    %198 = vmatprep.subr.mxu0 0.0
    %199 = vmatpush2.msra.mxu0 0.0
    %200 = vmatprep.subr.mxu0 0.0
    %201 = vmatpush2.msra.mxu0 0.0
    %202 = vmatprep.subr.mxu0 0.0
    %203 = vmatpush2.msra.mxu0 0.0
    %204 = vmatprep.subr.mxu0 0.0
    %205 = vmatpush2.msra.mxu0 0.0
    %206 = vmatprep.subr.mxu0 0.0
    %207 = vmatpush2.msra.mxu0 0.0
    %208 = vmatprep.subr.mxu0 0.0
    %209 = vmatpush2.msra.mxu0 0.0
    %210 = vmatprep.subr.mxu0 0.0
    %211 = vmatpush2.msra.mxu0 0.0
    %212 = vmatprep.subr.mxu0 0.0
    %213 = vmatpush2.msra.mxu0 0.0
    %214 = vmatprep.subr.mxu0 0.0
    %215 = vmatpush2.msra.mxu0 0.0
    %216 = vmatprep.subr.mxu0 0.0
    %217 = vmatpush2.msra.mxu0 0.0
    %218 = vmatprep.subr.mxu0 0.0
    %219 = vmatpush2.msra.mxu0 0.0
    %220 = vmatprep.subr.mxu0 0.0
    %221 = vmatpush2.msra.mxu0 0.0
    %222 = vmatprep.subr.mxu0 0.0
    %223 = vmatpush2.msra.mxu0 0.0
    %224 = vmatprep.subr.mxu0 0.0
    %225 = vmatpush2.msra.mxu0 0.0
    %226 = vmatprep.mubr.f32.mxu0 0.0
    %227 = vmatmul.mubr.f32.gmra.mxu0 %v156
    %v228 = vpop.f32.mrf.mxu0
    %v229 = vadd.f32 %v152, %v228
    %v230 = vpop.f32.mrf.mxu0
    %231 = vdwg.mxu0
    %v232 = vmax.f32 %v229, 0.0
    %v233 = vld [vmem:[#allocation13] sm:$0xff]
    %v234 = vld [vmem:[#allocation13 + $0x8] sm:$0xff]
    %v235 = vld [vmem:[#allocation13 + $0x10] sm:$0xff]
    %v236 = vld [vmem:[#allocation13 + $0x18] sm:$0xff]
    %v237 = vld [vmem:[#allocation15] sm:$0x1]
    %v239 = vlaneseq
    %v240 = vshrl.u32 %v239, 7
    %v241 = vsub.s32 0, %v240
    %v242 = vrot.slane %v237, %v241
    %vm244 = vcmask 261120
    %v246 = vsel %vm244, %v232, 0
    %248 = vmatprep.subr.mxu0 0.0
    %249 = vmatpush1.msra.mxu0 0.0
    %250 = vmatprep.subr.mxu0 0.0
    %251 = vmatpush1.msra.mxu0 0.0
    %252 = vmatprep.subr.mxu0 0.0
    %253 = vmatpush1.msra.mxu0 0.0
    %254 = vmatprep.subr.mxu0 0.0
    %255 = vmatpush1.msra.mxu0 0.0
    %256 = vmatprep.subr.mxu0 0.0
    %257 = vmatpush1.msra.mxu0 0.0
    %258 = vmatprep.subr.mxu0 0.0
    %259 = vmatpush1.msra.mxu0 0.0
    %260 = vmatprep.subr.mxu0 0.0
    %261 = vmatpush1.msra.mxu0 0.0
    %262 = vmatprep.subr.mxu0 0.0
    %263 = vmatpush1.msra.mxu0 0.0
    %264 = vmatprep.subr.mxu0 0.0
    %265 = vmatpush1.msra.mxu0 0.0
    %266 = vmatprep.subr.mxu0 0.0
    %267 = vmatpush1.msra.mxu0 0.0
    %268 = vmatprep.subr.mxu0 0.0
    %269 = vmatpush1.msra.mxu0 0.0
    %270 = vmatprep.subr.mxu0 0.0
    %271 = vmatpush1.msra.mxu0 0.0
    %272 = vmatprep.subr.mxu0 0.0
    %273 = vmatpush1.msra.mxu0 %v236
    %274 = vmatprep.subr.mxu0 0.0
    %275 = vmatpush1.msra.mxu0 %v235
    %276 = vmatprep.subr.mxu0 0.0
    %277 = vmatpush1.msra.mxu0 %v234
    %278 = vmatprep.subr.mxu0 0.0
    %279 = vmatpush1.msra.mxu0 %v233
    %280 = vmatprep.subr.mxu0 0.0
    %281 = vmatpush2.msra.mxu0 0.0
    %282 = vmatprep.subr.mxu0 0.0
    %283 = vmatpush2.msra.mxu0 0.0
    %284 = vmatprep.subr.mxu0 0.0
    %285 = vmatpush2.msra.mxu0 0.0
    %286 = vmatprep.subr.mxu0 0.0
    %287 = vmatpush2.msra.mxu0 0.0
    %288 = vmatprep.subr.mxu0 0.0
    %289 = vmatpush2.msra.mxu0 0.0
    %290 = vmatprep.subr.mxu0 0.0
    %291 = vmatpush2.msra.mxu0 0.0
    %292 = vmatprep.subr.mxu0 0.0
    %293 = vmatpush2.msra.mxu0 0.0
    %294 = vmatprep.subr.mxu0 0.0
    %295 = vmatpush2.msra.mxu0 0.0
    %296 = vmatprep.subr.mxu0 0.0
    %297 = vmatpush2.msra.mxu0 0.0
    %298 = vmatprep.subr.mxu0 0.0
    %299 = vmatpush2.msra.mxu0 0.0
    %300 = vmatprep.subr.mxu0 0.0
    %301 = vmatpush2.msra.mxu0 0.0
    %302 = vmatprep.subr.mxu0 0.0
    %303 = vmatpush2.msra.mxu0 0.0
    %304 = vmatprep.subr.mxu0 0.0
    %305 = vmatpush2.msra.mxu0 0.0
    %306 = vmatprep.subr.mxu0 0.0
    %307 = vmatpush2.msra.mxu0 0.0
    %308 = vmatprep.subr.mxu0 0.0
    %309 = vmatpush2.msra.mxu0 0.0
    %310 = vmatprep.subr.mxu0 0.0
    %311 = vmatpush2.msra.mxu0 0.0
    %312 = vmatprep.mubr.f32.mxu0 0.0
    %313 = vmatmul.mubr.f32.gmra.mxu0 %v246
    %v314 = vpop.f32.mrf.mxu0
    %v315 = vadd.f32 %v242, %v314
    %v316 = vpop.f32.mrf.mxu0
    %317 = vdwg.mxu0
    %v318 = vmax.f32 %v315, 0.0
    %v319 = vld [vmem:[%s13] sm:$0xff]
    %v320 = vld [vmem:[%s13 + $0x8] sm:$0xff]
    %v321 = vld [vmem:[%s13 + $0x10] sm:$0xff]
    %v322 = vld [vmem:[%s13 + $0x18] sm:$0xff]
    %v323 = vld [vmem:[%s13 + $0x20] sm:$0xff]
    %v324 = vld [vmem:[%s13 + $0x28] sm:$0xff]
    %v325 = vld [vmem:[%s13 + $0x30] sm:$0xff]
    %v326 = vld [vmem:[%s13 + $0x38] sm:$0xff]
    %v327 = vld [vmem:[%s14] sm:$0x1]
    %v329 = vlaneseq
    %v330 = vshrl.u32 %v329, 7
    %v331 = vsub.s32 0, %v330
    %v332 = vrot.slane %v327, %v331
    %vm334 = vcmask 523264
    %v336 = vsel %vm334, %v318, 0
    %338 = vmatprep.subr.mxu0 0.0
    %339 = vmatpush1.msra.mxu0 0.0
    %340 = vmatprep.subr.mxu0 0.0
    %341 = vmatpush1.msra.mxu0 0.0
    %342 = vmatprep.subr.mxu0 0.0
    %343 = vmatpush1.msra.mxu0 0.0
    %344 = vmatprep.subr.mxu0 0.0
    %345 = vmatpush1.msra.mxu0 0.0
    %346 = vmatprep.subr.mxu0 0.0
    %347 = vmatpush1.msra.mxu0 0.0
    %348 = vmatprep.subr.mxu0 0.0
    %349 = vmatpush1.msra.mxu0 0.0
    %350 = vmatprep.subr.mxu0 0.0
    %351 = vmatpush1.msra.mxu0 0.0
    %352 = vmatprep.subr.mxu0 0.0
    %353 = vmatpush1.msra.mxu0 0.0
    %354 = vmatprep.subr.mxu0 0.0
    %355 = vmatpush1.msra.mxu0 %v326
    %356 = vmatprep.subr.mxu0 0.0
    %357 = vmatpush1.msra.mxu0 %v325
    %358 = vmatprep.subr.mxu0 0.0
    %359 = vmatpush1.msra.mxu0 %v324
    %360 = vmatprep.subr.mxu0 0.0
    %361 = vmatpush1.msra.mxu0 %v323
    %362 = vmatprep.subr.mxu0 0.0
    %363 = vmatpush1.msra.mxu0 %v322
    %364 = vmatprep.subr.mxu0 0.0
    %365 = vmatpush1.msra.mxu0 %v321
    %366 = vmatprep.subr.mxu0 0.0
    %367 = vmatpush1.msra.mxu0 %v320
    %368 = vmatprep.subr.mxu0 0.0
    %369 = vmatpush1.msra.mxu0 %v319
    %370 = vmatprep.subr.mxu0 0.0
    %371 = vmatpush2.msra.mxu0 0.0
    %372 = vmatprep.subr.mxu0 0.0
    %373 = vmatpush2.msra.mxu0 0.0
    %374 = vmatprep.subr.mxu0 0.0
    %375 = vmatpush2.msra.mxu0 0.0
    %376 = vmatprep.subr.mxu0 0.0
    %377 = vmatpush2.msra.mxu0 0.0
    %378 = vmatprep.subr.mxu0 0.0
    %379 = vmatpush2.msra.mxu0 0.0
    %380 = vmatprep.subr.mxu0 0.0
    %381 = vmatpush2.msra.mxu0 0.0
    %382 = vmatprep.subr.mxu0 0.0
    %383 = vmatpush2.msra.mxu0 0.0
    %384 = vmatprep.subr.mxu0 0.0
    %385 = vmatpush2.msra.mxu0 0.0
    %386 = vmatprep.subr.mxu0 0.0
    %387 = vmatpush2.msra.mxu0 0.0
    %388 = vmatprep.subr.mxu0 0.0
    %389 = vmatpush2.msra.mxu0 0.0
    %390 = vmatprep.subr.mxu0 0.0
    %391 = vmatpush2.msra.mxu0 0.0
    %392 = vmatprep.subr.mxu0 0.0
    %393 = vmatpush2.msra.mxu0 0.0
    %394 = vmatprep.subr.mxu0 0.0
    %395 = vmatpush2.msra.mxu0 0.0
    %396 = vmatprep.subr.mxu0 0.0
    %397 = vmatpush2.msra.mxu0 0.0
    %398 = vmatprep.subr.mxu0 0.0
    %399 = vmatpush2.msra.mxu0 0.0
    %400 = vmatprep.subr.mxu0 0.0
    %401 = vmatpush2.msra.mxu0 0.0
    %402 = vmatprep.mubr.f32.mxu0 0.0
    %403 = vmatmul.mubr.f32.gmra.mxu0 %v336
    %v404 = vpop.f32.mrf.mxu0
    %v405 = vadd.f32 %v332, %v404
    %v406 = vpop.f32.mrf.mxu0
    %407 = vdwg.mxu0
    %v408 = vld [vmem:[#allocation4] sm:$0xff]
    %v409 = vld [vmem:[#allocation4 + $0x8] sm:$0xff]
    %v410 = vld [vmem:[#allocation7] sm:$0xff]
    %v411 = vld [vmem:[#allocation7 + $0x8] sm:$0xff]
    %v412 = vld [vmem:[%s3] sm:$0x1]
    %v414 = vlaneseq
    %v415 = vshrl.u32 %v414, 7
    %v416 = vsub.s32 0, %v415
    %v417 = vrot.slane %v412, %v416
    %vm419 = vcmask 130048
    %v421 = vsel %vm419, %v408, 0
    %v424 = vsel %vm419, %v409, 0
    %426 = vmatprep.subr.mxu0 0.0
    %427 = vmatpush1.msra.mxu0 0.0
    %428 = vmatprep.subr.mxu0 0.0
    %429 = vmatpush1.msra.mxu0 0.0
    %430 = vmatprep.subr.mxu0 0.0
    %431 = vmatpush1.msra.mxu0 0.0
    %432 = vmatprep.subr.mxu0 0.0
    %433 = vmatpush1.msra.mxu0 0.0
    %434 = vmatprep.subr.mxu0 0.0
    %435 = vmatpush1.msra.mxu0 0.0
    %436 = vmatprep.subr.mxu0 0.0
    %437 = vmatpush1.msra.mxu0 0.0
    %438 = vmatprep.subr.mxu0 0.0
    %439 = vmatpush1.msra.mxu0 0.0
    %440 = vmatprep.subr.mxu0 0.0
    %441 = vmatpush1.msra.mxu0 0.0
    %442 = vmatprep.subr.mxu0 0.0
    %443 = vmatpush1.msra.mxu0 0.0
    %444 = vmatprep.subr.mxu0 0.0
    %445 = vmatpush1.msra.mxu0 0.0
    %446 = vmatprep.subr.mxu0 0.0
    %447 = vmatpush1.msra.mxu0 0.0
    %448 = vmatprep.subr.mxu0 0.0
    %449 = vmatpush1.msra.mxu0 0.0
    %450 = vmatprep.subr.mxu0 0.0
    %451 = vmatpush1.msra.mxu0 0.0
    %452 = vmatprep.subr.mxu0 0.0
    %453 = vmatpush1.msra.mxu0 0.0
    %454 = vmatprep.subr.mxu0 0.0
    %455 = vmatpush1.msra.mxu0 %v411
    %456 = vmatprep.subr.mxu0 0.0
    %457 = vmatpush1.msra.mxu0 %v410
    %458 = vmatprep.subr.mxu0 0.0
    %459 = vmatpush2.msra.mxu0 0.0
    %460 = vmatprep.subr.mxu0 0.0
    %461 = vmatpush2.msra.mxu0 0.0
    %462 = vmatprep.subr.mxu0 0.0
    %463 = vmatpush2.msra.mxu0 0.0
    %464 = vmatprep.subr.mxu0 0.0
    %465 = vmatpush2.msra.mxu0 0.0
    %466 = vmatprep.subr.mxu0 0.0
    %467 = vmatpush2.msra.mxu0 0.0
    %468 = vmatprep.subr.mxu0 0.0
    %469 = vmatpush2.msra.mxu0 0.0
    %470 = vmatprep.subr.mxu0 0.0
    %471 = vmatpush2.msra.mxu0 0.0
    %472 = vmatprep.subr.mxu0 0.0
    %473 = vmatpush2.msra.mxu0 0.0
    %474 = vmatprep.subr.mxu0 0.0
    %475 = vmatpush2.msra.mxu0 0.0
    %476 = vmatprep.subr.mxu0 0.0
    %477 = vmatpush2.msra.mxu0 0.0
    %478 = vmatprep.subr.mxu0 0.0
    %479 = vmatpush2.msra.mxu0 0.0
    %480 = vmatprep.subr.mxu0 0.0
    %481 = vmatpush2.msra.mxu0 0.0
    %482 = vmatprep.subr.mxu0 0.0
    %483 = vmatpush2.msra.mxu0 0.0
    %484 = vmatprep.subr.mxu0 0.0
    %485 = vmatpush2.msra.mxu0 0.0
    %486 = vmatprep.subr.mxu0 0.0
    %487 = vmatpush2.msra.mxu0 0.0
    %488 = vmatprep.subr.mxu0 0.0
    %489 = vmatpush2.msra.mxu0 0.0
    %490 = vmatprep.mubr.f32.mxu0 0.0
    %491 = vmatmul.mubr.f32.gmra.mxu0 %v421
    %v492 = vpop.f32.mrf.mxu0
    %v493 = vadd.f32 %v417, %v492
    %v494 = vpop.f32.mrf.mxu0
    %495 = vmatprep.mubr.f32.mxu0 0.0
    %496 = vmatmul.mubr.f32.gmra.mxu0 %v424
    %v497 = vpop.f32.mrf.mxu0
    %v498 = vadd.f32 %v417, %v497
    %v499 = vpop.f32.mrf.mxu0
    %500 = vdwg.mxu0
    %v501 = vmax.f32 %v493, 0.0
    %v502 = vmax.f32 %v498, 0.0
    %503 = vst.msk [vmem:[#allocation2] sm:$0xff] %vm244, %v501
    %504 = vst.msk [vmem:[#allocation2 + $0x8] sm:$0xff] %vm244, %v502
    %v505 = vld [vmem:[#allocation10] sm:$0xff]
    %v506 = vld [vmem:[#allocation10 + $0x8] sm:$0xff]
    %v507 = vld [vmem:[#allocation10 + $0x10] sm:$0xff]
    %v508 = vld [vmem:[#allocation10 + $0x18] sm:$0xff]
    %v509 = vld [vmem:[#allocation2] sm:$0xff]
    %v510 = vld [vmem:[#allocation2 + $0x8] sm:$0xff]
    %v511 = vld [vmem:[#allocation9] sm:$0xff]
    %v512 = vld [vmem:[#allocation9 + $0x8] sm:$0xff]
    %v513 = vld [vmem:[#allocation9 + $0x10] sm:$0xff]
    %v514 = vld [vmem:[#allocation9 + $0x18] sm:$0xff]
    %v515 = vld [vmem:[%s6] sm:$0x1]
    %v517 = vlaneseq
    %v518 = vshrl.u32 %v517, 7
    %v519 = vsub.s32 0, %v518
    %v520 = vrot.slane %v515, %v519
    %v523 = vsel %vm244, %v509, 0
    %v526 = vsel %vm244, %v510, 0
    %528 = vmatprep.subr.mxu0 0.0
    %529 = vmatpush1.msra.mxu0 0.0
    %530 = vmatprep.subr.mxu0 0.0
    %531 = vmatpush1.msra.mxu0 0.0
    %532 = vmatprep.subr.mxu0 0.0
    %533 = vmatpush1.msra.mxu0 0.0
    %534 = vmatprep.subr.mxu0 0.0
    %535 = vmatpush1.msra.mxu0 0.0
    %536 = vmatprep.subr.mxu0 0.0
    %537 = vmatpush1.msra.mxu0 0.0
    %538 = vmatprep.subr.mxu0 0.0
    %539 = vmatpush1.msra.mxu0 0.0
    %540 = vmatprep.subr.mxu0 0.0
    %541 = vmatpush1.msra.mxu0 0.0
    %542 = vmatprep.subr.mxu0 0.0
    %543 = vmatpush1.msra.mxu0 0.0
    %544 = vmatprep.subr.mxu0 0.0
    %545 = vmatpush1.msra.mxu0 0.0
    %546 = vmatprep.subr.mxu0 0.0
    %547 = vmatpush1.msra.mxu0 0.0
    %548 = vmatprep.subr.mxu0 0.0
    %549 = vmatpush1.msra.mxu0 0.0
    %550 = vmatprep.subr.mxu0 0.0
    %551 = vmatpush1.msra.mxu0 0.0
    %552 = vmatprep.subr.mxu0 0.0
    %553 = vmatpush1.msra.mxu0 %v514
    %554 = vmatprep.subr.mxu0 0.0
    %555 = vmatpush1.msra.mxu0 %v513
    %556 = vmatprep.subr.mxu0 0.0
    %557 = vmatpush1.msra.mxu0 %v512
    %558 = vmatprep.subr.mxu0 0.0
    %559 = vmatpush1.msra.mxu0 %v511
    %560 = vmatprep.subr.mxu0 0.0
    %561 = vmatpush2.msra.mxu0 0.0
    %562 = vmatprep.subr.mxu0 0.0
    %563 = vmatpush2.msra.mxu0 0.0
    %564 = vmatprep.subr.mxu0 0.0
    %565 = vmatpush2.msra.mxu0 0.0
    %566 = vmatprep.subr.mxu0 0.0
    %567 = vmatpush2.msra.mxu0 0.0
    %568 = vmatprep.subr.mxu0 0.0
    %569 = vmatpush2.msra.mxu0 0.0
    %570 = vmatprep.subr.mxu0 0.0
    %571 = vmatpush2.msra.mxu0 0.0
    %572 = vmatprep.subr.mxu0 0.0
    %573 = vmatpush2.msra.mxu0 0.0
    %574 = vmatprep.subr.mxu0 0.0
    %575 = vmatpush2.msra.mxu0 0.0
    %576 = vmatprep.subr.mxu0 0.0
    %577 = vmatpush2.msra.mxu0 0.0
    %578 = vmatprep.subr.mxu0 0.0
    %579 = vmatpush2.msra.mxu0 0.0
    %580 = vmatprep.subr.mxu0 0.0
    %581 = vmatpush2.msra.mxu0 0.0
    %582 = vmatprep.subr.mxu0 0.0
    %583 = vmatpush2.msra.mxu0 0.0
    %584 = vmatprep.subr.mxu0 0.0
    %585 = vmatpush2.msra.mxu0 0.0
    %586 = vmatprep.subr.mxu0 0.0
    %587 = vmatpush2.msra.mxu0 0.0
    %588 = vmatprep.subr.mxu0 0.0
    %589 = vmatpush2.msra.mxu0 0.0
    %590 = vmatprep.subr.mxu0 0.0
    %591 = vmatpush2.msra.mxu0 0.0
    %592 = vmatprep.mubr.f32.mxu0 0.0
    %593 = vmatmul.mubr.f32.gmra.mxu0 %v523
    %v594 = vpop.f32.mrf.mxu0
    %v595 = vadd.f32 %v520, %v594
    %v596 = vpop.f32.mrf.mxu0
    %597 = vmatprep.mubr.f32.mxu0 0.0
    %598 = vmatmul.mubr.f32.gmra.mxu0 %v526
    %v599 = vpop.f32.mrf.mxu0
    %v600 = vadd.f32 %v520, %v599
    %v601 = vpop.f32.mrf.mxu0
    %602 = vdwg.mxu0
    %603 = vst [vmem:[#allocation3] sm:$0xff] %v595
    %604 = vst [vmem:[#allocation3 + $0x8] sm:$0xff] %v600
    %v605 = vld [vmem:[#allocation3] sm:$0x3]
    %v607 = vsel %vm244, %v405, 0
    %609 = vmatprep.subr.mxu0 0.0
    %610 = vmatpush1.msra.mxu0 0.0
    %611 = vmatprep.subr.mxu0 0.0
    %612 = vmatpush1.msra.mxu0 0.0
    %613 = vmatprep.subr.mxu0 0.0
    %614 = vmatpush1.msra.mxu0 0.0
    %615 = vmatprep.subr.mxu0 0.0
    %616 = vmatpush1.msra.mxu0 0.0
    %617 = vmatprep.subr.mxu0 0.0
    %618 = vmatpush1.msra.mxu0 0.0
    %619 = vmatprep.subr.mxu0 0.0
    %620 = vmatpush1.msra.mxu0 0.0
    %621 = vmatprep.subr.mxu0 0.0
    %622 = vmatpush1.msra.mxu0 0.0
    %623 = vmatprep.subr.mxu0 0.0
    %624 = vmatpush1.msra.mxu0 0.0
    %625 = vmatprep.subr.mxu0 0.0
    %626 = vmatpush1.msra.mxu0 0.0
    %627 = vmatprep.subr.mxu0 0.0
    %628 = vmatpush1.msra.mxu0 0.0
    %629 = vmatprep.subr.mxu0 0.0
    %630 = vmatpush1.msra.mxu0 0.0
    %631 = vmatprep.subr.mxu0 0.0
    %632 = vmatpush1.msra.mxu0 0.0
    %633 = vmatprep.subr.mxu0 0.0
    %634 = vmatpush1.msra.mxu0 %v508
    %635 = vmatprep.subr.mxu0 0.0
    %636 = vmatpush1.msra.mxu0 %v507
    %637 = vmatprep.subr.mxu0 0.0
    %638 = vmatpush1.msra.mxu0 %v506
    %639 = vmatprep.subr.mxu0 0.0
    %640 = vmatpush1.msra.mxu0 %v505
    %641 = vmatprep.subr.mxu0 0.0
    %642 = vmatpush2.msra.mxu0 0.0
    %643 = vmatprep.subr.mxu0 0.0
    %644 = vmatpush2.msra.mxu0 0.0
    %645 = vmatprep.subr.mxu0 0.0
    %646 = vmatpush2.msra.mxu0 0.0
    %647 = vmatprep.subr.mxu0 0.0
    %648 = vmatpush2.msra.mxu0 0.0
    %649 = vmatprep.subr.mxu0 0.0
    %650 = vmatpush2.msra.mxu0 0.0
    %651 = vmatprep.subr.mxu0 0.0
    %652 = vmatpush2.msra.mxu0 0.0
    %653 = vmatprep.subr.mxu0 0.0
    %654 = vmatpush2.msra.mxu0 0.0
    %655 = vmatprep.subr.mxu0 0.0
    %656 = vmatpush2.msra.mxu0 0.0
    %657 = vmatprep.subr.mxu0 0.0
    %658 = vmatpush2.msra.mxu0 0.0
    %659 = vmatprep.subr.mxu0 0.0
    %660 = vmatpush2.msra.mxu0 0.0
    %661 = vmatprep.subr.mxu0 0.0
    %662 = vmatpush2.msra.mxu0 0.0
    %663 = vmatprep.subr.mxu0 0.0
    %664 = vmatpush2.msra.mxu0 0.0
    %665 = vmatprep.subr.mxu0 0.0
    %666 = vmatpush2.msra.mxu0 0.0
    %667 = vmatprep.subr.mxu0 0.0
    %668 = vmatpush2.msra.mxu0 0.0
    %669 = vmatprep.subr.mxu0 0.0
    %670 = vmatpush2.msra.mxu0 0.0
    %671 = vmatprep.subr.mxu0 0.0
    %672 = vmatpush2.msra.mxu0 0.0
    %673 = vmatprep.mubr.f32.mxu0 0.0
    %674 = vmatmul.mubr.f32.gmra.mxu0 %v607
    %v675 = vpop.f32.mrf.mxu0
    %v676 = vadd.f32 %v605, %v675
    %v677 = vpop.f32.mrf.mxu0
    %678 = vdwg.mxu0
    %v679 = vxor.u32 %v676, 2147483648
    %v680 = vmul.f32 %v679, 1.442695
    %v681 = vpow.pop %v680
    %v682 = vadd.f32 %v681, 1.0
    %v683 = vrcp.pop %v682
    %v684 = vmul.f32 1.0, %v683
    %v685 = vtanh.pop %v676
    %686 = vrot.lane.b32.xlu0 %v405, 96
    %v687 = vpop.permute.xlu0 %686
    %v689 = vmul.f32 %v684, %v687
    %691 = vrot.lane.b32.xlu0 %v685, 64
    %v692 = vpop.permute.xlu0 %691
    %v694 = vmul.f32 %v684, %v692
    %696 = vrot.lane.b32.xlu0 %v694, 32
    %v697 = vpop.permute.xlu0 %696
    %v699 = vadd.f32 %v689, %v697
    %v700 = vtanh.pop %v699
    %702 = vrot.lane.b32.xlu0 %v700, 64
    %v703 = vpop.permute.xlu0 %702
    %v705 = vmul.f32 %v684, %v703
    %707 = vrot.lane.b32.xlu0 %v705, 32
    %v708 = vpop.permute.xlu0 %707
    %vm710 = vcmask 254976
    %711 = vst.msk [vmem:[#allocation2] sm:$0x3] %vm710, %v708
    %s712 = scalar_lea.vmem [#allocation3], 2
    %v713 = vld [vmem:[%s712] sm:$0x3]
    %v714 = vsel %vm244, %v708, 0
    %716 = vmatprep.subr.mxu0 0.0
    %717 = vmatpush1.msra.mxu0 0.0
    %718 = vmatprep.subr.mxu0 0.0
    %719 = vmatpush1.msra.mxu0 0.0
    %720 = vmatprep.subr.mxu0 0.0
    %721 = vmatpush1.msra.mxu0 0.0
    %722 = vmatprep.subr.mxu0 0.0
    %723 = vmatpush1.msra.mxu0 0.0
    %724 = vmatprep.subr.mxu0 0.0
    %725 = vmatpush1.msra.mxu0 0.0
    %726 = vmatprep.subr.mxu0 0.0
    %727 = vmatpush1.msra.mxu0 0.0
    %728 = vmatprep.subr.mxu0 0.0
    %729 = vmatpush1.msra.mxu0 0.0
    %730 = vmatprep.subr.mxu0 0.0
    %731 = vmatpush1.msra.mxu0 0.0
    %732 = vmatprep.subr.mxu0 0.0
    %733 = vmatpush1.msra.mxu0 0.0
    %734 = vmatprep.subr.mxu0 0.0
    %735 = vmatpush1.msra.mxu0 0.0
    %736 = vmatprep.subr.mxu0 0.0
    %737 = vmatpush1.msra.mxu0 0.0
    %738 = vmatprep.subr.mxu0 0.0
    %739 = vmatpush1.msra.mxu0 0.0
    %740 = vmatprep.subr.mxu0 0.0
    %741 = vmatpush1.msra.mxu0 %v508
    %742 = vmatprep.subr.mxu0 0.0
    %743 = vmatpush1.msra.mxu0 %v507
    %744 = vmatprep.subr.mxu0 0.0
    %745 = vmatpush1.msra.mxu0 %v506
    %746 = vmatprep.subr.mxu0 0.0
    %747 = vmatpush1.msra.mxu0 %v505
    %748 = vmatprep.subr.mxu0 0.0
    %749 = vmatpush2.msra.mxu0 0.0
    %750 = vmatprep.subr.mxu0 0.0
    %751 = vmatpush2.msra.mxu0 0.0
    %752 = vmatprep.subr.mxu0 0.0
    %753 = vmatpush2.msra.mxu0 0.0
    %754 = vmatprep.subr.mxu0 0.0
    %755 = vmatpush2.msra.mxu0 0.0
    %756 = vmatprep.subr.mxu0 0.0
    %757 = vmatpush2.msra.mxu0 0.0
    %758 = vmatprep.subr.mxu0 0.0
    %759 = vmatpush2.msra.mxu0 0.0
    %760 = vmatprep.subr.mxu0 0.0
    %761 = vmatpush2.msra.mxu0 0.0
    %762 = vmatprep.subr.mxu0 0.0
    %763 = vmatpush2.msra.mxu0 0.0
    %764 = vmatprep.subr.mxu0 0.0
    %765 = vmatpush2.msra.mxu0 0.0
    %766 = vmatprep.subr.mxu0 0.0
    %767 = vmatpush2.msra.mxu0 0.0
    %768 = vmatprep.subr.mxu0 0.0
    %769 = vmatpush2.msra.mxu0 0.0
    %770 = vmatprep.subr.mxu0 0.0
    %771 = vmatpush2.msra.mxu0 0.0
    %772 = vmatprep.subr.mxu0 0.0
    %773 = vmatpush2.msra.mxu0 0.0
    %774 = vmatprep.subr.mxu0 0.0
    %775 = vmatpush2.msra.mxu0 0.0
    %776 = vmatprep.subr.mxu0 0.0
    %777 = vmatpush2.msra.mxu0 0.0
    %778 = vmatprep.subr.mxu0 0.0
    %779 = vmatpush2.msra.mxu0 0.0
    %780 = vmatprep.mubr.f32.mxu0 0.0
    %781 = vmatmul.mubr.f32.gmra.mxu0 %v714
    %v782 = vpop.f32.mrf.mxu0
    %v783 = vadd.f32 %v713, %v782
    %v784 = vpop.f32.mrf.mxu0
    %785 = vdwg.mxu0
    %v786 = vxor.u32 %v783, 2147483648
    %v787 = vmul.f32 %v786, 1.442695
    %v788 = vpow.pop %v787
    %v789 = vadd.f32 %v788, 1.0
    %v790 = vrcp.pop %v789
    %v791 = vmul.f32 1.0, %v790
    %v792 = vtanh.pop %v783
    %v793 = vmul.f32 %v791, %v699
    %795 = vrot.lane.b32.xlu0 %v792, 64
    %v796 = vpop.permute.xlu0 %795
    %v798 = vmul.f32 %v791, %v796
    %800 = vrot.lane.b32.xlu0 %v798, 32
    %v801 = vpop.permute.xlu0 %800
    %v803 = vadd.f32 %v793, %v801
    %v804 = vtanh.pop %v803
    %806 = vrot.lane.b32.xlu0 %v804, 64
    %v807 = vpop.permute.xlu0 %806
    %v809 = vmul.f32 %v791, %v807
    %811 = vrot.lane.b32.xlu0 %v809, 32
    %v812 = vpop.permute.xlu0 %811
    %s814 = scalar_lea.vmem [#allocation2], 2
    %815 = vst.msk [vmem:[%s814] sm:$0x3] %vm710, %v812
    %s816 = scalar_lea.vmem [#allocation3], 4
    %v817 = vld [vmem:[%s816] sm:$0x3]
    %v818 = vsel %vm244, %v812, 0
    %820 = vmatprep.subr.mxu0 0.0
    %821 = vmatpush1.msra.mxu0 0.0
    %822 = vmatprep.subr.mxu0 0.0
    %823 = vmatpush1.msra.mxu0 0.0
    %824 = vmatprep.subr.mxu0 0.0
    %825 = vmatpush1.msra.mxu0 0.0
    %826 = vmatprep.subr.mxu0 0.0
    %827 = vmatpush1.msra.mxu0 0.0
    %828 = vmatprep.subr.mxu0 0.0
    %829 = vmatpush1.msra.mxu0 0.0
    %830 = vmatprep.subr.mxu0 0.0
    %831 = vmatpush1.msra.mxu0 0.0
    %832 = vmatprep.subr.mxu0 0.0
    %833 = vmatpush1.msra.mxu0 0.0
    %834 = vmatprep.subr.mxu0 0.0
    %835 = vmatpush1.msra.mxu0 0.0
    %836 = vmatprep.subr.mxu0 0.0
    %837 = vmatpush1.msra.mxu0 0.0
    %838 = vmatprep.subr.mxu0 0.0
    %839 = vmatpush1.msra.mxu0 0.0
    %840 = vmatprep.subr.mxu0 0.0
    %841 = vmatpush1.msra.mxu0 0.0
    %842 = vmatprep.subr.mxu0 0.0
    %843 = vmatpush1.msra.mxu0 0.0
    %844 = vmatprep.subr.mxu0 0.0
    %845 = vmatpush1.msra.mxu0 %v508
    %846 = vmatprep.subr.mxu0 0.0
    %847 = vmatpush1.msra.mxu0 %v507
    %848 = vmatprep.subr.mxu0 0.0
    %849 = vmatpush1.msra.mxu0 %v506
    %850 = vmatprep.subr.mxu0 0.0
    %851 = vmatpush1.msra.mxu0 %v505
    %852 = vmatprep.subr.mxu0 0.0
    %853 = vmatpush2.msra.mxu0 0.0
    %854 = vmatprep.subr.mxu0 0.0
    %855 = vmatpush2.msra.mxu0 0.0
    %856 = vmatprep.subr.mxu0 0.0
    %857 = vmatpush2.msra.mxu0 0.0
    %858 = vmatprep.subr.mxu0 0.0
    %859 = vmatpush2.msra.mxu0 0.0
    %860 = vmatprep.subr.mxu0 0.0
    %861 = vmatpush2.msra.mxu0 0.0
    %862 = vmatprep.subr.mxu0 0.0
    %863 = vmatpush2.msra.mxu0 0.0
    %864 = vmatprep.subr.mxu0 0.0
    %865 = vmatpush2.msra.mxu0 0.0
    %866 = vmatprep.subr.mxu0 0.0
    %867 = vmatpush2.msra.mxu0 0.0
    %868 = vmatprep.subr.mxu0 0.0
    %869 = vmatpush2.msra.mxu0 0.0
    %870 = vmatprep.subr.mxu0 0.0
    %871 = vmatpush2.msra.mxu0 0.0
    %872 = vmatprep.subr.mxu0 0.0
    %873 = vmatpush2.msra.mxu0 0.0
    %874 = vmatprep.subr.mxu0 0.0
    %875 = vmatpush2.msra.mxu0 0.0
    %876 = vmatprep.subr.mxu0 0.0
    %877 = vmatpush2.msra.mxu0 0.0
    %878 = vmatprep.subr.mxu0 0.0
    %879 = vmatpush2.msra.mxu0 0.0
    %880 = vmatprep.subr.mxu0 0.0
    %881 = vmatpush2.msra.mxu0 0.0
    %882 = vmatprep.subr.mxu0 0.0
    %883 = vmatpush2.msra.mxu0 0.0
    %884 = vmatprep.mubr.f32.mxu0 0.0
    %885 = vmatmul.mubr.f32.gmra.mxu0 %v818
    %v886 = vpop.f32.mrf.mxu0
    %v887 = vadd.f32 %v817, %v886
    %v888 = vpop.f32.mrf.mxu0
    %889 = vdwg.mxu0
    %v890 = vxor.u32 %v887, 2147483648
    %v891 = vmul.f32 %v890, 1.442695
    %v892 = vpow.pop %v891
    %v893 = vadd.f32 %v892, 1.0
    %v894 = vrcp.pop %v893
    %v895 = vmul.f32 1.0, %v894
    %v896 = vtanh.pop %v887
    %v897 = vmul.f32 %v895, %v803
    %899 = vrot.lane.b32.xlu0 %v896, 64
    %v900 = vpop.permute.xlu0 %899
    %v902 = vmul.f32 %v895, %v900
    %904 = vrot.lane.b32.xlu0 %v902, 32
    %v905 = vpop.permute.xlu0 %904
    %v907 = vadd.f32 %v897, %v905
    %v908 = vtanh.pop %v907
    %910 = vrot.lane.b32.xlu0 %v908, 64
    %v911 = vpop.permute.xlu0 %910
    %v913 = vmul.f32 %v895, %v911
    %915 = vrot.lane.b32.xlu0 %v913, 32
    %v916 = vpop.permute.xlu0 %915
    %s918 = scalar_lea.vmem [#allocation2], 4
    %919 = vst.msk [vmem:[%s918] sm:$0x3] %vm710, %v916
    %s920 = scalar_lea.vmem [#allocation3], 6
    %v921 = vld [vmem:[%s920] sm:$0x3]
    %v922 = vsel %vm244, %v916, 0
    %924 = vmatprep.subr.mxu0 0.0
    %925 = vmatpush1.msra.mxu0 0.0
    %926 = vmatprep.subr.mxu0 0.0
    %927 = vmatpush1.msra.mxu0 0.0
    %928 = vmatprep.subr.mxu0 0.0
    %929 = vmatpush1.msra.mxu0 0.0
    %930 = vmatprep.subr.mxu0 0.0
    %931 = vmatpush1.msra.mxu0 0.0
    %932 = vmatprep.subr.mxu0 0.0
    %933 = vmatpush1.msra.mxu0 0.0
    %934 = vmatprep.subr.mxu0 0.0
    %935 = vmatpush1.msra.mxu0 0.0
    %936 = vmatprep.subr.mxu0 0.0
    %937 = vmatpush1.msra.mxu0 0.0
    %938 = vmatprep.subr.mxu0 0.0
    %939 = vmatpush1.msra.mxu0 0.0
    %940 = vmatprep.subr.mxu0 0.0
    %941 = vmatpush1.msra.mxu0 0.0
    %942 = vmatprep.subr.mxu0 0.0
    %943 = vmatpush1.msra.mxu0 0.0
    %944 = vmatprep.subr.mxu0 0.0
    %945 = vmatpush1.msra.mxu0 0.0
    %946 = vmatprep.subr.mxu0 0.0
    %947 = vmatpush1.msra.mxu0 0.0
    %948 = vmatprep.subr.mxu0 0.0
    %949 = vmatpush1.msra.mxu0 %v508
    %950 = vmatprep.subr.mxu0 0.0
    %951 = vmatpush1.msra.mxu0 %v507
    %952 = vmatprep.subr.mxu0 0.0
    %953 = vmatpush1.msra.mxu0 %v506
    %954 = vmatprep.subr.mxu0 0.0
    %955 = vmatpush1.msra.mxu0 %v505
    %956 = vmatprep.subr.mxu0 0.0
    %957 = vmatpush2.msra.mxu0 0.0
    %958 = vmatprep.subr.mxu0 0.0
    %959 = vmatpush2.msra.mxu0 0.0
    %960 = vmatprep.subr.mxu0 0.0
    %961 = vmatpush2.msra.mxu0 0.0
    %962 = vmatprep.subr.mxu0 0.0
    %963 = vmatpush2.msra.mxu0 0.0
    %964 = vmatprep.subr.mxu0 0.0
    %965 = vmatpush2.msra.mxu0 0.0
    %966 = vmatprep.subr.mxu0 0.0
    %967 = vmatpush2.msra.mxu0 0.0
    %968 = vmatprep.subr.mxu0 0.0
    %969 = vmatpush2.msra.mxu0 0.0
    %970 = vmatprep.subr.mxu0 0.0
    %971 = vmatpush2.msra.mxu0 0.0
    %972 = vmatprep.subr.mxu0 0.0
    %973 = vmatpush2.msra.mxu0 0.0
    %974 = vmatprep.subr.mxu0 0.0
    %975 = vmatpush2.msra.mxu0 0.0
    %976 = vmatprep.subr.mxu0 0.0
    %977 = vmatpush2.msra.mxu0 0.0
    %978 = vmatprep.subr.mxu0 0.0
    %979 = vmatpush2.msra.mxu0 0.0
    %980 = vmatprep.subr.mxu0 0.0
    %981 = vmatpush2.msra.mxu0 0.0
    %982 = vmatprep.subr.mxu0 0.0
    %983 = vmatpush2.msra.mxu0 0.0
    %984 = vmatprep.subr.mxu0 0.0
    %985 = vmatpush2.msra.mxu0 0.0
    %986 = vmatprep.subr.mxu0 0.0
    %987 = vmatpush2.msra.mxu0 0.0
    %988 = vmatprep.mubr.f32.mxu0 0.0
    %989 = vmatmul.mubr.f32.gmra.mxu0 %v922
    %v990 = vpop.f32.mrf.mxu0
    %v991 = vadd.f32 %v921, %v990
    %v992 = vpop.f32.mrf.mxu0
    %993 = vdwg.mxu0
    %v994 = vxor.u32 %v991, 2147483648
    %v995 = vmul.f32 %v994, 1.442695
    %v996 = vpow.pop %v995
    %v997 = vadd.f32 %v996, 1.0
    %v998 = vrcp.pop %v997
    %v999 = vmul.f32 1.0, %v998
    %v1000 = vtanh.pop %v991
    %v1001 = vmul.f32 %v999, %v907
    %1003 = vrot.lane.b32.xlu0 %v1000, 64
    %v1004 = vpop.permute.xlu0 %1003
    %v1006 = vmul.f32 %v999, %v1004
    %1008 = vrot.lane.b32.xlu0 %v1006, 32
    %v1009 = vpop.permute.xlu0 %1008
    %v1011 = vadd.f32 %v1001, %v1009
    %v1012 = vtanh.pop %v1011
    %1014 = vrot.lane.b32.xlu0 %v1012, 64
    %v1015 = vpop.permute.xlu0 %1014
    %v1017 = vmul.f32 %v999, %v1015
    %1019 = vrot.lane.b32.xlu0 %v1017, 32
    %v1020 = vpop.permute.xlu0 %1019
    %s1022 = scalar_lea.vmem [#allocation2], 6
    %1023 = vst.msk [vmem:[%s1022] sm:$0x3] %vm710, %v1020
    %s1024 = scalar_lea.vmem [#allocation3], 8
    %v1025 = vld [vmem:[%s1024] sm:$0x3]
    %v1026 = vsel %vm244, %v1020, 0
    %1028 = vmatprep.subr.mxu0 0.0
    %1029 = vmatpush1.msra.mxu0 0.0
    %1030 = vmatprep.subr.mxu0 0.0
    %1031 = vmatpush1.msra.mxu0 0.0
    %1032 = vmatprep.subr.mxu0 0.0
    %1033 = vmatpush1.msra.mxu0 0.0
    %1034 = vmatprep.subr.mxu0 0.0
    %1035 = vmatpush1.msra.mxu0 0.0
    %1036 = vmatprep.subr.mxu0 0.0
    %1037 = vmatpush1.msra.mxu0 0.0
    %1038 = vmatprep.subr.mxu0 0.0
    %1039 = vmatpush1.msra.mxu0 0.0
    %1040 = vmatprep.subr.mxu0 0.0
    %1041 = vmatpush1.msra.mxu0 0.0
    %1042 = vmatprep.subr.mxu0 0.0
    %1043 = vmatpush1.msra.mxu0 0.0
    %1044 = vmatprep.subr.mxu0 0.0
    %1045 = vmatpush1.msra.mxu0 0.0
    %1046 = vmatprep.subr.mxu0 0.0
    %1047 = vmatpush1.msra.mxu0 0.0
    %1048 = vmatprep.subr.mxu0 0.0
    %1049 = vmatpush1.msra.mxu0 0.0
    %1050 = vmatprep.subr.mxu0 0.0
    %1051 = vmatpush1.msra.mxu0 0.0
    %1052 = vmatprep.subr.mxu0 0.0
    %1053 = vmatpush1.msra.mxu0 %v508
    %1054 = vmatprep.subr.mxu0 0.0
    %1055 = vmatpush1.msra.mxu0 %v507
    %1056 = vmatprep.subr.mxu0 0.0
    %1057 = vmatpush1.msra.mxu0 %v506
    %1058 = vmatprep.subr.mxu0 0.0
    %1059 = vmatpush1.msra.mxu0 %v505
    %1060 = vmatprep.subr.mxu0 0.0
    %1061 = vmatpush2.msra.mxu0 0.0
    %1062 = vmatprep.subr.mxu0 0.0
    %1063 = vmatpush2.msra.mxu0 0.0
    %1064 = vmatprep.subr.mxu0 0.0
    %1065 = vmatpush2.msra.mxu0 0.0
    %1066 = vmatprep.subr.mxu0 0.0
    %1067 = vmatpush2.msra.mxu0 0.0
    %1068 = vmatprep.subr.mxu0 0.0
    %1069 = vmatpush2.msra.mxu0 0.0
    %1070 = vmatprep.subr.mxu0 0.0
    %1071 = vmatpush2.msra.mxu0 0.0
    %1072 = vmatprep.subr.mxu0 0.0
    %1073 = vmatpush2.msra.mxu0 0.0
    %1074 = vmatprep.subr.mxu0 0.0
    %1075 = vmatpush2.msra.mxu0 0.0
    %1076 = vmatprep.subr.mxu0 0.0
    %1077 = vmatpush2.msra.mxu0 0.0
    %1078 = vmatprep.subr.mxu0 0.0
    %1079 = vmatpush2.msra.mxu0 0.0
    %1080 = vmatprep.subr.mxu0 0.0
    %1081 = vmatpush2.msra.mxu0 0.0
    %1082 = vmatprep.subr.mxu0 0.0
    %1083 = vmatpush2.msra.mxu0 0.0
    %1084 = vmatprep.subr.mxu0 0.0
    %1085 = vmatpush2.msra.mxu0 0.0
    %1086 = vmatprep.subr.mxu0 0.0
    %1087 = vmatpush2.msra.mxu0 0.0
    %1088 = vmatprep.subr.mxu0 0.0
    %1089 = vmatpush2.msra.mxu0 0.0
    %1090 = vmatprep.subr.mxu0 0.0
    %1091 = vmatpush2.msra.mxu0 0.0
    %1092 = vmatprep.mubr.f32.mxu0 0.0
    %1093 = vmatmul.mubr.f32.gmra.mxu0 %v1026
    %v1094 = vpop.f32.mrf.mxu0
    %v1095 = vadd.f32 %v1025, %v1094
    %v1096 = vpop.f32.mrf.mxu0
    %1097 = vdwg.mxu0
    %v1098 = vxor.u32 %v1095, 2147483648
    %v1099 = vmul.f32 %v1098, 1.442695
    %v1100 = vpow.pop %v1099
    %v1101 = vadd.f32 %v1100, 1.0
    %v1102 = vrcp.pop %v1101
    %v1103 = vmul.f32 1.0, %v1102
    %v1104 = vtanh.pop %v1095
    %v1105 = vmul.f32 %v1103, %v1011
    %1107 = vrot.lane.b32.xlu0 %v1104, 64
    %v1108 = vpop.permute.xlu0 %1107
    %v1110 = vmul.f32 %v1103, %v1108
    %1112 = vrot.lane.b32.xlu0 %v1110, 32
    %v1113 = vpop.permute.xlu0 %1112
    %v1115 = vadd.f32 %v1105, %v1113
    %v1116 = vtanh.pop %v1115
    %1118 = vrot.lane.b32.xlu0 %v1116, 64
    %v1119 = vpop.permute.xlu0 %1118
    %v1121 = vmul.f32 %v1103, %v1119
    %1123 = vrot.lane.b32.xlu0 %v1121, 32
    %v1124 = vpop.permute.xlu0 %1123
    %s1126 = scalar_lea.vmem [#allocation2], 8
    %1127 = vst.msk [vmem:[%s1126] sm:$0x3] %vm710, %v1124
    %s1128 = scalar_lea.vmem [#allocation3], 10
    %v1129 = vld [vmem:[%s1128] sm:$0x3]
    %v1130 = vsel %vm244, %v1124, 0
    %1132 = vmatprep.subr.mxu0 0.0
    %1133 = vmatpush1.msra.mxu0 0.0
    %1134 = vmatprep.subr.mxu0 0.0
    %1135 = vmatpush1.msra.mxu0 0.0
    %1136 = vmatprep.subr.mxu0 0.0
    %1137 = vmatpush1.msra.mxu0 0.0
    %1138 = vmatprep.subr.mxu0 0.0
    %1139 = vmatpush1.msra.mxu0 0.0
    %1140 = vmatprep.subr.mxu0 0.0
    %1141 = vmatpush1.msra.mxu0 0.0
    %1142 = vmatprep.subr.mxu0 0.0
    %1143 = vmatpush1.msra.mxu0 0.0
    %1144 = vmatprep.subr.mxu0 0.0
    %1145 = vmatpush1.msra.mxu0 0.0
    %1146 = vmatprep.subr.mxu0 0.0
    %1147 = vmatpush1.msra.mxu0 0.0
    %1148 = vmatprep.subr.mxu0 0.0
    %1149 = vmatpush1.msra.mxu0 0.0
    %1150 = vmatprep.subr.mxu0 0.0
    %1151 = vmatpush1.msra.mxu0 0.0
    %1152 = vmatprep.subr.mxu0 0.0
    %1153 = vmatpush1.msra.mxu0 0.0
    %1154 = vmatprep.subr.mxu0 0.0
    %1155 = vmatpush1.msra.mxu0 0.0
    %1156 = vmatprep.subr.mxu0 0.0
    %1157 = vmatpush1.msra.mxu0 %v508
    %1158 = vmatprep.subr.mxu0 0.0
    %1159 = vmatpush1.msra.mxu0 %v507
    %1160 = vmatprep.subr.mxu0 0.0
    %1161 = vmatpush1.msra.mxu0 %v506
    %1162 = vmatprep.subr.mxu0 0.0
    %1163 = vmatpush1.msra.mxu0 %v505
    %1164 = vmatprep.subr.mxu0 0.0
    %1165 = vmatpush2.msra.mxu0 0.0
    %1166 = vmatprep.subr.mxu0 0.0
    %1167 = vmatpush2.msra.mxu0 0.0
    %1168 = vmatprep.subr.mxu0 0.0
    %1169 = vmatpush2.msra.mxu0 0.0
    %1170 = vmatprep.subr.mxu0 0.0
    %1171 = vmatpush2.msra.mxu0 0.0
    %1172 = vmatprep.subr.mxu0 0.0
    %1173 = vmatpush2.msra.mxu0 0.0
    %1174 = vmatprep.subr.mxu0 0.0
    %1175 = vmatpush2.msra.mxu0 0.0
    %1176 = vmatprep.subr.mxu0 0.0
    %1177 = vmatpush2.msra.mxu0 0.0
    %1178 = vmatprep.subr.mxu0 0.0
    %1179 = vmatpush2.msra.mxu0 0.0
    %1180 = vmatprep.subr.mxu0 0.0
    %1181 = vmatpush2.msra.mxu0 0.0
    %1182 = vmatprep.subr.mxu0 0.0
    %1183 = vmatpush2.msra.mxu0 0.0
    %1184 = vmatprep.subr.mxu0 0.0
    %1185 = vmatpush2.msra.mxu0 0.0
    %1186 = vmatprep.subr.mxu0 0.0
    %1187 = vmatpush2.msra.mxu0 0.0
    %1188 = vmatprep.subr.mxu0 0.0
    %1189 = vmatpush2.msra.mxu0 0.0
    %1190 = vmatprep.subr.mxu0 0.0
    %1191 = vmatpush2.msra.mxu0 0.0
    %1192 = vmatprep.subr.mxu0 0.0
    %1193 = vmatpush2.msra.mxu0 0.0
    %1194 = vmatprep.subr.mxu0 0.0
    %1195 = vmatpush2.msra.mxu0 0.0
    %1196 = vmatprep.mubr.f32.mxu0 0.0
    %1197 = vmatmul.mubr.f32.gmra.mxu0 %v1130
    %v1198 = vpop.f32.mrf.mxu0
    %v1199 = vadd.f32 %v1129, %v1198
    %v1200 = vpop.f32.mrf.mxu0
    %1201 = vdwg.mxu0
    %v1202 = vxor.u32 %v1199, 2147483648
    %v1203 = vmul.f32 %v1202, 1.442695
    %v1204 = vpow.pop %v1203
    %v1205 = vadd.f32 %v1204, 1.0
    %v1206 = vrcp.pop %v1205
    %v1207 = vmul.f32 1.0, %v1206
    %v1208 = vtanh.pop %v1199
    %v1209 = vmul.f32 %v1207, %v1115
    %1211 = vrot.lane.b32.xlu0 %v1208, 64
    %v1212 = vpop.permute.xlu0 %1211
    %v1214 = vmul.f32 %v1207, %v1212
    %1216 = vrot.lane.b32.xlu0 %v1214, 32
    %v1217 = vpop.permute.xlu0 %1216
    %v1219 = vadd.f32 %v1209, %v1217
    %v1220 = vtanh.pop %v1219
    %1222 = vrot.lane.b32.xlu0 %v1220, 64
    %v1223 = vpop.permute.xlu0 %1222
    %v1225 = vmul.f32 %v1207, %v1223
    %1227 = vrot.lane.b32.xlu0 %v1225, 32
    %v1228 = vpop.permute.xlu0 %1227
    %s1230 = scalar_lea.vmem [#allocation2], 10
    %1231 = vst.msk [vmem:[%s1230] sm:$0x3] %vm710, %v1228
    %s1232 = scalar_lea.vmem [#allocation3], 12
    %v1233 = vld [vmem:[%s1232] sm:$0x3]
    %v1234 = vsel %vm244, %v1228, 0
    %1236 = vmatprep.subr.mxu0 0.0
    %1237 = vmatpush1.msra.mxu0 0.0
    %1238 = vmatprep.subr.mxu0 0.0
    %1239 = vmatpush1.msra.mxu0 0.0
    %1240 = vmatprep.subr.mxu0 0.0
    %1241 = vmatpush1.msra.mxu0 0.0
    %1242 = vmatprep.subr.mxu0 0.0
    %1243 = vmatpush1.msra.mxu0 0.0
    %1244 = vmatprep.subr.mxu0 0.0
    %1245 = vmatpush1.msra.mxu0 0.0
    %1246 = vmatprep.subr.mxu0 0.0
    %1247 = vmatpush1.msra.mxu0 0.0
    %1248 = vmatprep.subr.mxu0 0.0
    %1249 = vmatpush1.msra.mxu0 0.0
    %1250 = vmatprep.subr.mxu0 0.0
    %1251 = vmatpush1.msra.mxu0 0.0
    %1252 = vmatprep.subr.mxu0 0.0
    %1253 = vmatpush1.msra.mxu0 0.0
    %1254 = vmatprep.subr.mxu0 0.0
    %1255 = vmatpush1.msra.mxu0 0.0
    %1256 = vmatprep.subr.mxu0 0.0
    %1257 = vmatpush1.msra.mxu0 0.0
    %1258 = vmatprep.subr.mxu0 0.0
    %1259 = vmatpush1.msra.mxu0 0.0
    %1260 = vmatprep.subr.mxu0 0.0
    %1261 = vmatpush1.msra.mxu0 %v508
    %1262 = vmatprep.subr.mxu0 0.0
    %1263 = vmatpush1.msra.mxu0 %v507
    %1264 = vmatprep.subr.mxu0 0.0
    %1265 = vmatpush1.msra.mxu0 %v506
    %1266 = vmatprep.subr.mxu0 0.0
    %1267 = vmatpush1.msra.mxu0 %v505
    %1268 = vmatprep.subr.mxu0 0.0
    %1269 = vmatpush2.msra.mxu0 0.0
    %1270 = vmatprep.subr.mxu0 0.0
    %1271 = vmatpush2.msra.mxu0 0.0
    %1272 = vmatprep.subr.mxu0 0.0
    %1273 = vmatpush2.msra.mxu0 0.0
    %1274 = vmatprep.subr.mxu0 0.0
    %1275 = vmatpush2.msra.mxu0 0.0
    %1276 = vmatprep.subr.mxu0 0.0
    %1277 = vmatpush2.msra.mxu0 0.0
    %1278 = vmatprep.subr.mxu0 0.0
    %1279 = vmatpush2.msra.mxu0 0.0
    %1280 = vmatprep.subr.mxu0 0.0
    %1281 = vmatpush2.msra.mxu0 0.0
    %1282 = vmatprep.subr.mxu0 0.0
    %1283 = vmatpush2.msra.mxu0 0.0
    %1284 = vmatprep.subr.mxu0 0.0
    %1285 = vmatpush2.msra.mxu0 0.0
    %1286 = vmatprep.subr.mxu0 0.0
    %1287 = vmatpush2.msra.mxu0 0.0
    %1288 = vmatprep.subr.mxu0 0.0
    %1289 = vmatpush2.msra.mxu0 0.0
    %1290 = vmatprep.subr.mxu0 0.0
    %1291 = vmatpush2.msra.mxu0 0.0
    %1292 = vmatprep.subr.mxu0 0.0
    %1293 = vmatpush2.msra.mxu0 0.0
    %1294 = vmatprep.subr.mxu0 0.0
    %1295 = vmatpush2.msra.mxu0 0.0
    %1296 = vmatprep.subr.mxu0 0.0
    %1297 = vmatpush2.msra.mxu0 0.0
    %1298 = vmatprep.subr.mxu0 0.0
    %1299 = vmatpush2.msra.mxu0 0.0
    %1300 = vmatprep.mubr.f32.mxu0 0.0
    %1301 = vmatmul.mubr.f32.gmra.mxu0 %v1234
    %v1302 = vpop.f32.mrf.mxu0
    %v1303 = vadd.f32 %v1233, %v1302
    %v1304 = vpop.f32.mrf.mxu0
    %1305 = vdwg.mxu0
    %v1306 = vxor.u32 %v1303, 2147483648
    %v1307 = vmul.f32 %v1306, 1.442695
    %v1308 = vpow.pop %v1307
    %v1309 = vadd.f32 %v1308, 1.0
    %v1310 = vrcp.pop %v1309
    %v1311 = vmul.f32 1.0, %v1310
    %v1312 = vtanh.pop %v1303
    %v1313 = vmul.f32 %v1311, %v1219
    %1315 = vrot.lane.b32.xlu0 %v1312, 64
    %v1316 = vpop.permute.xlu0 %1315
    %v1318 = vmul.f32 %v1311, %v1316
    %1320 = vrot.lane.b32.xlu0 %v1318, 32
    %v1321 = vpop.permute.xlu0 %1320
    %v1323 = vadd.f32 %v1313, %v1321
    %v1324 = vtanh.pop %v1323
    %1326 = vrot.lane.b32.xlu0 %v1324, 64
    %v1327 = vpop.permute.xlu0 %1326
    %v1329 = vmul.f32 %v1311, %v1327
    %1331 = vrot.lane.b32.xlu0 %v1329, 32
    %v1332 = vpop.permute.xlu0 %1331
    %s1334 = scalar_lea.vmem [#allocation2], 12
    %1335 = vst.msk [vmem:[%s1334] sm:$0x3] %vm710, %v1332
    %s1336 = scalar_lea.vmem [#allocation3], 14
    %v1337 = vld [vmem:[%s1336] sm:$0x3]
    %v1338 = vsel %vm244, %v1332, 0
    %1340 = vmatprep.subr.mxu0 0.0
    %1341 = vmatpush1.msra.mxu0 0.0
    %1342 = vmatprep.subr.mxu0 0.0
    %1343 = vmatpush1.msra.mxu0 0.0
    %1344 = vmatprep.subr.mxu0 0.0
    %1345 = vmatpush1.msra.mxu0 0.0
    %1346 = vmatprep.subr.mxu0 0.0
    %1347 = vmatpush1.msra.mxu0 0.0
    %1348 = vmatprep.subr.mxu0 0.0
    %1349 = vmatpush1.msra.mxu0 0.0
    %1350 = vmatprep.subr.mxu0 0.0
    %1351 = vmatpush1.msra.mxu0 0.0
    %1352 = vmatprep.subr.mxu0 0.0
    %1353 = vmatpush1.msra.mxu0 0.0
    %1354 = vmatprep.subr.mxu0 0.0
    %1355 = vmatpush1.msra.mxu0 0.0
    %1356 = vmatprep.subr.mxu0 0.0
    %1357 = vmatpush1.msra.mxu0 0.0
    %1358 = vmatprep.subr.mxu0 0.0
    %1359 = vmatpush1.msra.mxu0 0.0
    %1360 = vmatprep.subr.mxu0 0.0
    %1361 = vmatpush1.msra.mxu0 0.0
    %1362 = vmatprep.subr.mxu0 0.0
    %1363 = vmatpush1.msra.mxu0 0.0
    %1364 = vmatprep.subr.mxu0 0.0
    %1365 = vmatpush1.msra.mxu0 %v508
    %1366 = vmatprep.subr.mxu0 0.0
    %1367 = vmatpush1.msra.mxu0 %v507
    %1368 = vmatprep.subr.mxu0 0.0
    %1369 = vmatpush1.msra.mxu0 %v506
    %1370 = vmatprep.subr.mxu0 0.0
    %1371 = vmatpush1.msra.mxu0 %v505
    %1372 = vmatprep.subr.mxu0 0.0
    %1373 = vmatpush2.msra.mxu0 0.0
    %1374 = vmatprep.subr.mxu0 0.0
    %1375 = vmatpush2.msra.mxu0 0.0
    %1376 = vmatprep.subr.mxu0 0.0
    %1377 = vmatpush2.msra.mxu0 0.0
    %1378 = vmatprep.subr.mxu0 0.0
    %1379 = vmatpush2.msra.mxu0 0.0
    %1380 = vmatprep.subr.mxu0 0.0
    %1381 = vmatpush2.msra.mxu0 0.0
    %1382 = vmatprep.subr.mxu0 0.0
    %1383 = vmatpush2.msra.mxu0 0.0
    %1384 = vmatprep.subr.mxu0 0.0
    %1385 = vmatpush2.msra.mxu0 0.0
    %1386 = vmatprep.subr.mxu0 0.0
    %1387 = vmatpush2.msra.mxu0 0.0
    %1388 = vmatprep.subr.mxu0 0.0
    %1389 = vmatpush2.msra.mxu0 0.0
    %1390 = vmatprep.subr.mxu0 0.0
    %1391 = vmatpush2.msra.mxu0 0.0
    %1392 = vmatprep.subr.mxu0 0.0
    %1393 = vmatpush2.msra.mxu0 0.0
    %1394 = vmatprep.subr.mxu0 0.0
    %1395 = vmatpush2.msra.mxu0 0.0
    %1396 = vmatprep.subr.mxu0 0.0
    %1397 = vmatpush2.msra.mxu0 0.0
    %1398 = vmatprep.subr.mxu0 0.0
    %1399 = vmatpush2.msra.mxu0 0.0
    %1400 = vmatprep.subr.mxu0 0.0
    %1401 = vmatpush2.msra.mxu0 0.0
    %1402 = vmatprep.subr.mxu0 0.0
    %1403 = vmatpush2.msra.mxu0 0.0
    %1404 = vmatprep.mubr.f32.mxu0 0.0
    %1405 = vmatmul.mubr.f32.gmra.mxu0 %v1338
    %v1406 = vpop.f32.mrf.mxu0
    %v1407 = vadd.f32 %v1337, %v1406
    %v1408 = vpop.f32.mrf.mxu0
    %1409 = vdwg.mxu0
    %v1410 = vxor.u32 %v1407, 2147483648
    %v1411 = vmul.f32 %v1410, 1.442695
    %v1412 = vpow.pop %v1411
    %v1413 = vadd.f32 %v1412, 1.0
    %v1414 = vrcp.pop %v1413
    %v1415 = vmul.f32 1.0, %v1414
    %v1416 = vtanh.pop %v1407
    %v1417 = vmul.f32 %v1415, %v1323
    %1419 = vrot.lane.b32.xlu0 %v1416, 64
    %v1420 = vpop.permute.xlu0 %1419
    %v1422 = vmul.f32 %v1415, %v1420
    %1424 = vrot.lane.b32.xlu0 %v1422, 32
    %v1425 = vpop.permute.xlu0 %1424
    %v1427 = vadd.f32 %v1417, %v1425
    %v1428 = vtanh.pop %v1427
    %1430 = vrot.lane.b32.xlu0 %v1428, 64
    %v1431 = vpop.permute.xlu0 %1430
    %v1433 = vmul.f32 %v1415, %v1431
    %1435 = vrot.lane.b32.xlu0 %v1433, 32
    %v1436 = vpop.permute.xlu0 %1435
    %s1438 = scalar_lea.vmem [#allocation2], 14
    %1439 = vst.msk [vmem:[%s1438] sm:$0x3] %vm710, %v1436
    %s1440 = scalar_lea.vmem [#allocation10], 32
    %v1441 = vld [vmem:[%s1440] sm:$0xff]
    %v1442 = vld [vmem:[%s1440 + $0x8] sm:$0xff]
    %v1443 = vld [vmem:[%s1440 + $0x10] sm:$0xff]
    %v1444 = vld [vmem:[%s1440 + $0x18] sm:$0xff]
    %v1445 = vld [vmem:[#allocation2] sm:$0xff]
    %v1446 = vld [vmem:[#allocation2 + $0x8] sm:$0xff]
    %s1447 = scalar_lea.vmem [#allocation9], 32
    %v1448 = vld [vmem:[%s1447] sm:$0xff]
    %v1449 = vld [vmem:[%s1447 + $0x8] sm:$0xff]
    %v1450 = vld [vmem:[%s1447 + $0x10] sm:$0xff]
    %v1451 = vld [vmem:[%s1447 + $0x18] sm:$0xff]
    %s1452 = scalar_lea.vmem %s6, 1
    %v1453 = vld [vmem:[%s1452] sm:$0x1]
    %v1455 = vlaneseq
    %v1456 = vshrl.u32 %v1455, 7
    %v1457 = vsub.s32 0, %v1456
    %v1458 = vrot.slane %v1453, %v1457
    %v1461 = vsel %vm244, %v1445, 0
    %v1464 = vsel %vm244, %v1446, 0
    %1466 = vmatprep.subr.mxu0 0.0
    %1467 = vmatpush1.msra.mxu0 0.0
    %1468 = vmatprep.subr.mxu0 0.0
    %1469 = vmatpush1.msra.mxu0 0.0
    %1470 = vmatprep.subr.mxu0 0.0
    %1471 = vmatpush1.msra.mxu0 0.0
    %1472 = vmatprep.subr.mxu0 0.0
    %1473 = vmatpush1.msra.mxu0 0.0
    %1474 = vmatprep.subr.mxu0 0.0
    %1475 = vmatpush1.msra.mxu0 0.0
    %1476 = vmatprep.subr.mxu0 0.0
    %1477 = vmatpush1.msra.mxu0 0.0
    %1478 = vmatprep.subr.mxu0 0.0
    %1479 = vmatpush1.msra.mxu0 0.0
    %1480 = vmatprep.subr.mxu0 0.0
    %1481 = vmatpush1.msra.mxu0 0.0
    %1482 = vmatprep.subr.mxu0 0.0
    %1483 = vmatpush1.msra.mxu0 0.0
    %1484 = vmatprep.subr.mxu0 0.0
    %1485 = vmatpush1.msra.mxu0 0.0
    %1486 = vmatprep.subr.mxu0 0.0
    %1487 = vmatpush1.msra.mxu0 0.0
    %1488 = vmatprep.subr.mxu0 0.0
    %1489 = vmatpush1.msra.mxu0 0.0
    %1490 = vmatprep.subr.mxu0 0.0
    %1491 = vmatpush1.msra.mxu0 %v1451
    %1492 = vmatprep.subr.mxu0 0.0
    %1493 = vmatpush1.msra.mxu0 %v1450
    %1494 = vmatprep.subr.mxu0 0.0
    %1495 = vmatpush1.msra.mxu0 %v1449
    %1496 = vmatprep.subr.mxu0 0.0
    %1497 = vmatpush1.msra.mxu0 %v1448
    %1498 = vmatprep.subr.mxu0 0.0
    %1499 = vmatpush2.msra.mxu0 0.0
    %1500 = vmatprep.subr.mxu0 0.0
    %1501 = vmatpush2.msra.mxu0 0.0
    %1502 = vmatprep.subr.mxu0 0.0
    %1503 = vmatpush2.msra.mxu0 0.0
    %1504 = vmatprep.subr.mxu0 0.0
    %1505 = vmatpush2.msra.mxu0 0.0
    %1506 = vmatprep.subr.mxu0 0.0
    %1507 = vmatpush2.msra.mxu0 0.0
    %1508 = vmatprep.subr.mxu0 0.0
    %1509 = vmatpush2.msra.mxu0 0.0
    %1510 = vmatprep.subr.mxu0 0.0
    %1511 = vmatpush2.msra.mxu0 0.0
    %1512 = vmatprep.subr.mxu0 0.0
    %1513 = vmatpush2.msra.mxu0 0.0
    %1514 = vmatprep.subr.mxu0 0.0
    %1515 = vmatpush2.msra.mxu0 0.0
    %1516 = vmatprep.subr.mxu0 0.0
    %1517 = vmatpush2.msra.mxu0 0.0
    %1518 = vmatprep.subr.mxu0 0.0
    %1519 = vmatpush2.msra.mxu0 0.0
    %1520 = vmatprep.subr.mxu0 0.0
    %1521 = vmatpush2.msra.mxu0 0.0
    %1522 = vmatprep.subr.mxu0 0.0
    %1523 = vmatpush2.msra.mxu0 0.0
    %1524 = vmatprep.subr.mxu0 0.0
    %1525 = vmatpush2.msra.mxu0 0.0
    %1526 = vmatprep.subr.mxu0 0.0
    %1527 = vmatpush2.msra.mxu0 0.0
    %1528 = vmatprep.subr.mxu0 0.0
    %1529 = vmatpush2.msra.mxu0 0.0
    %1530 = vmatprep.mubr.f32.mxu0 0.0
    %1531 = vmatmul.mubr.f32.gmra.mxu0 %v1461
    %v1532 = vpop.f32.mrf.mxu0
    %v1533 = vadd.f32 %v1458, %v1532
    %v1534 = vpop.f32.mrf.mxu0
    %1535 = vmatprep.mubr.f32.mxu0 0.0
    %1536 = vmatmul.mubr.f32.gmra.mxu0 %v1464
    %v1537 = vpop.f32.mrf.mxu0
    %v1538 = vadd.f32 %v1458, %v1537
    %v1539 = vpop.f32.mrf.mxu0
    %1540 = vdwg.mxu0
    %1541 = vst [vmem:[#allocation3] sm:$0xff] %v1533
    %1542 = vst [vmem:[#allocation3 + $0x8] sm:$0xff] %v1538
    %v1543 = vld [vmem:[#allocation3] sm:$0x3]
    %v1544 = vsel %vm244, %v687, 0
    %1546 = vmatprep.subr.mxu0 0.0
    %1547 = vmatpush1.msra.mxu0 0.0
    %1548 = vmatprep.subr.mxu0 0.0
    %1549 = vmatpush1.msra.mxu0 0.0
    %1550 = vmatprep.subr.mxu0 0.0
    %1551 = vmatpush1.msra.mxu0 0.0
    %1552 = vmatprep.subr.mxu0 0.0
    %1553 = vmatpush1.msra.mxu0 0.0
    %1554 = vmatprep.subr.mxu0 0.0
    %1555 = vmatpush1.msra.mxu0 0.0
    %1556 = vmatprep.subr.mxu0 0.0
    %1557 = vmatpush1.msra.mxu0 0.0
    %1558 = vmatprep.subr.mxu0 0.0
    %1559 = vmatpush1.msra.mxu0 0.0
    %1560 = vmatprep.subr.mxu0 0.0
    %1561 = vmatpush1.msra.mxu0 0.0
    %1562 = vmatprep.subr.mxu0 0.0
    %1563 = vmatpush1.msra.mxu0 0.0
    %1564 = vmatprep.subr.mxu0 0.0
    %1565 = vmatpush1.msra.mxu0 0.0
    %1566 = vmatprep.subr.mxu0 0.0
    %1567 = vmatpush1.msra.mxu0 0.0
    %1568 = vmatprep.subr.mxu0 0.0
    %1569 = vmatpush1.msra.mxu0 0.0
    %1570 = vmatprep.subr.mxu0 0.0
    %1571 = vmatpush1.msra.mxu0 %v1444
    %1572 = vmatprep.subr.mxu0 0.0
    %1573 = vmatpush1.msra.mxu0 %v1443
    %1574 = vmatprep.subr.mxu0 0.0
    %1575 = vmatpush1.msra.mxu0 %v1442
    %1576 = vmatprep.subr.mxu0 0.0
    %1577 = vmatpush1.msra.mxu0 %v1441
    %1578 = vmatprep.subr.mxu0 0.0
    %1579 = vmatpush2.msra.mxu0 0.0
    %1580 = vmatprep.subr.mxu0 0.0
    %1581 = vmatpush2.msra.mxu0 0.0
    %1582 = vmatprep.subr.mxu0 0.0
    %1583 = vmatpush2.msra.mxu0 0.0
    %1584 = vmatprep.subr.mxu0 0.0
    %1585 = vmatpush2.msra.mxu0 0.0
    %1586 = vmatprep.subr.mxu0 0.0
    %1587 = vmatpush2.msra.mxu0 0.0
    %1588 = vmatprep.subr.mxu0 0.0
    %1589 = vmatpush2.msra.mxu0 0.0
    %1590 = vmatprep.subr.mxu0 0.0
    %1591 = vmatpush2.msra.mxu0 0.0
    %1592 = vmatprep.subr.mxu0 0.0
    %1593 = vmatpush2.msra.mxu0 0.0
    %1594 = vmatprep.subr.mxu0 0.0
    %1595 = vmatpush2.msra.mxu0 0.0
    %1596 = vmatprep.subr.mxu0 0.0
    %1597 = vmatpush2.msra.mxu0 0.0
    %1598 = vmatprep.subr.mxu0 0.0
    %1599 = vmatpush2.msra.mxu0 0.0
    %1600 = vmatprep.subr.mxu0 0.0
    %1601 = vmatpush2.msra.mxu0 0.0
    %1602 = vmatprep.subr.mxu0 0.0
    %1603 = vmatpush2.msra.mxu0 0.0
    %1604 = vmatprep.subr.mxu0 0.0
    %1605 = vmatpush2.msra.mxu0 0.0
    %1606 = vmatprep.subr.mxu0 0.0
    %1607 = vmatpush2.msra.mxu0 0.0
    %1608 = vmatprep.subr.mxu0 0.0
    %1609 = vmatpush2.msra.mxu0 0.0
    %1610 = vmatprep.mubr.f32.mxu0 0.0
    %1611 = vmatmul.mubr.f32.gmra.mxu0 %v1544
    %v1612 = vpop.f32.mrf.mxu0
    %v1613 = vadd.f32 %v1543, %v1612
    %v1614 = vpop.f32.mrf.mxu0
    %1615 = vdwg.mxu0
    %v1616 = vxor.u32 %v1613, 2147483648
    %v1617 = vmul.f32 %v1616, 1.442695
    %v1618 = vpow.pop %v1617
    %v1619 = vadd.f32 %v1618, 1.0
    %v1620 = vrcp.pop %v1619
    %v1621 = vmul.f32 1.0, %v1620
    %v1622 = vtanh.pop %v1613
    %1623 = vrot.lane.b32.xlu0 %v405, 64
    %v1624 = vpop.permute.xlu0 %1623
    %v1626 = vmul.f32 %v1621, %v1624
    %1628 = vrot.lane.b32.xlu0 %v1622, 64
    %v1629 = vpop.permute.xlu0 %1628
    %v1631 = vmul.f32 %v1621, %v1629
    %1633 = vrot.lane.b32.xlu0 %v1631, 32
    %v1634 = vpop.permute.xlu0 %1633
    %v1636 = vadd.f32 %v1626, %v1634
    %v1637 = vtanh.pop %v1636
    %1639 = vrot.lane.b32.xlu0 %v1637, 64
    %v1640 = vpop.permute.xlu0 %1639
    %v1642 = vmul.f32 %v1621, %v1640
    %1644 = vrot.lane.b32.xlu0 %v1642, 32
    %v1645 = vpop.permute.xlu0 %1644
    %1647 = vst.msk [vmem:[#allocation2] sm:$0x3] %vm710, %v1645
    %v1648 = vld [vmem:[%s712] sm:$0x3]
    %v1649 = vsel %vm244, %v1645, 0
    %1651 = vmatprep.subr.mxu0 0.0
    %1652 = vmatpush1.msra.mxu0 0.0
    %1653 = vmatprep.subr.mxu0 0.0
    %1654 = vmatpush1.msra.mxu0 0.0
    %1655 = vmatprep.subr.mxu0 0.0
    %1656 = vmatpush1.msra.mxu0 0.0
    %1657 = vmatprep.subr.mxu0 0.0
    %1658 = vmatpush1.msra.mxu0 0.0
    %1659 = vmatprep.subr.mxu0 0.0
    %1660 = vmatpush1.msra.mxu0 0.0
    %1661 = vmatprep.subr.mxu0 0.0
    %1662 = vmatpush1.msra.mxu0 0.0
    %1663 = vmatprep.subr.mxu0 0.0
    %1664 = vmatpush1.msra.mxu0 0.0
    %1665 = vmatprep.subr.mxu0 0.0
    %1666 = vmatpush1.msra.mxu0 0.0
    %1667 = vmatprep.subr.mxu0 0.0
    %1668 = vmatpush1.msra.mxu0 0.0
    %1669 = vmatprep.subr.mxu0 0.0
    %1670 = vmatpush1.msra.mxu0 0.0
    %1671 = vmatprep.subr.mxu0 0.0
    %1672 = vmatpush1.msra.mxu0 0.0
    %1673 = vmatprep.subr.mxu0 0.0
    %1674 = vmatpush1.msra.mxu0 0.0
    %1675 = vmatprep.subr.mxu0 0.0
    %1676 = vmatpush1.msra.mxu0 %v1444
    %1677 = vmatprep.subr.mxu0 0.0
    %1678 = vmatpush1.msra.mxu0 %v1443
    %1679 = vmatprep.subr.mxu0 0.0
    %1680 = vmatpush1.msra.mxu0 %v1442
    %1681 = vmatprep.subr.mxu0 0.0
    %1682 = vmatpush1.msra.mxu0 %v1441
    %1683 = vmatprep.subr.mxu0 0.0
    %1684 = vmatpush2.msra.mxu0 0.0
    %1685 = vmatprep.subr.mxu0 0.0
    %1686 = vmatpush2.msra.mxu0 0.0
    %1687 = vmatprep.subr.mxu0 0.0
    %1688 = vmatpush2.msra.mxu0 0.0
    %1689 = vmatprep.subr.mxu0 0.0
    %1690 = vmatpush2.msra.mxu0 0.0
    %1691 = vmatprep.subr.mxu0 0.0
    %1692 = vmatpush2.msra.mxu0 0.0
    %1693 = vmatprep.subr.mxu0 0.0
    %1694 = vmatpush2.msra.mxu0 0.0
    %1695 = vmatprep.subr.mxu0 0.0
    %1696 = vmatpush2.msra.mxu0 0.0
    %1697 = vmatprep.subr.mxu0 0.0
    %1698 = vmatpush2.msra.mxu0 0.0
    %1699 = vmatprep.subr.mxu0 0.0
    %1700 = vmatpush2.msra.mxu0 0.0
    %1701 = vmatprep.subr.mxu0 0.0
    %1702 = vmatpush2.msra.mxu0 0.0
    %1703 = vmatprep.subr.mxu0 0.0
    %1704 = vmatpush2.msra.mxu0 0.0
    %1705 = vmatprep.subr.mxu0 0.0
    %1706 = vmatpush2.msra.mxu0 0.0
    %1707 = vmatprep.subr.mxu0 0.0
    %1708 = vmatpush2.msra.mxu0 0.0
    %1709 = vmatprep.subr.mxu0 0.0
    %1710 = vmatpush2.msra.mxu0 0.0
    %1711 = vmatprep.subr.mxu0 0.0
    %1712 = vmatpush2.msra.mxu0 0.0
    %1713 = vmatprep.subr.mxu0 0.0
    %1714 = vmatpush2.msra.mxu0 0.0
    %1715 = vmatprep.mubr.f32.mxu0 0.0
    %1716 = vmatmul.mubr.f32.gmra.mxu0 %v1649
    %v1717 = vpop.f32.mrf.mxu0
    %v1718 = vadd.f32 %v1648, %v1717
    %v1719 = vpop.f32.mrf.mxu0
    %1720 = vdwg.mxu0
    %v1721 = vxor.u32 %v1718, 2147483648
    %v1722 = vmul.f32 %v1721, 1.442695
    %v1723 = vpow.pop %v1722
    %v1724 = vadd.f32 %v1723, 1.0
    %v1725 = vrcp.pop %v1724
    %v1726 = vmul.f32 1.0, %v1725
    %v1727 = vtanh.pop %v1718
    %v1728 = vmul.f32 %v1726, %v1636
    %1730 = vrot.lane.b32.xlu0 %v1727, 64
    %v1731 = vpop.permute.xlu0 %1730
    %v1733 = vmul.f32 %v1726, %v1731
    %1735 = vrot.lane.b32.xlu0 %v1733, 32
    %v1736 = vpop.permute.xlu0 %1735
    %v1738 = vadd.f32 %v1728, %v1736
    %v1739 = vtanh.pop %v1738
    %1741 = vrot.lane.b32.xlu0 %v1739, 64
    %v1742 = vpop.permute.xlu0 %1741
    %v1744 = vmul.f32 %v1726, %v1742
    %1746 = vrot.lane.b32.xlu0 %v1744, 32
    %v1747 = vpop.permute.xlu0 %1746
    %1749 = vst.msk [vmem:[%s814] sm:$0x3] %vm710, %v1747
    %v1750 = vld [vmem:[%s816] sm:$0x3]
    %v1751 = vsel %vm244, %v1747, 0
    %1753 = vmatprep.subr.mxu0 0.0
    %1754 = vmatpush1.msra.mxu0 0.0
    %1755 = vmatprep.subr.mxu0 0.0
    %1756 = vmatpush1.msra.mxu0 0.0
    %1757 = vmatprep.subr.mxu0 0.0
    %1758 = vmatpush1.msra.mxu0 0.0
    %1759 = vmatprep.subr.mxu0 0.0
    %1760 = vmatpush1.msra.mxu0 0.0
    %1761 = vmatprep.subr.mxu0 0.0
    %1762 = vmatpush1.msra.mxu0 0.0
    %1763 = vmatprep.subr.mxu0 0.0
    %1764 = vmatpush1.msra.mxu0 0.0
    %1765 = vmatprep.subr.mxu0 0.0
    %1766 = vmatpush1.msra.mxu0 0.0
    %1767 = vmatprep.subr.mxu0 0.0
    %1768 = vmatpush1.msra.mxu0 0.0
    %1769 = vmatprep.subr.mxu0 0.0
    %1770 = vmatpush1.msra.mxu0 0.0
    %1771 = vmatprep.subr.mxu0 0.0
    %1772 = vmatpush1.msra.mxu0 0.0
    %1773 = vmatprep.subr.mxu0 0.0
    %1774 = vmatpush1.msra.mxu0 0.0
    %1775 = vmatprep.subr.mxu0 0.0
    %1776 = vmatpush1.msra.mxu0 0.0
    %1777 = vmatprep.subr.mxu0 0.0
    %1778 = vmatpush1.msra.mxu0 %v1444
    %1779 = vmatprep.subr.mxu0 0.0
    %1780 = vmatpush1.msra.mxu0 %v1443
    %1781 = vmatprep.subr.mxu0 0.0
    %1782 = vmatpush1.msra.mxu0 %v1442
    %1783 = vmatprep.subr.mxu0 0.0
    %1784 = vmatpush1.msra.mxu0 %v1441
    %1785 = vmatprep.subr.mxu0 0.0
    %1786 = vmatpush2.msra.mxu0 0.0
    %1787 = vmatprep.subr.mxu0 0.0
    %1788 = vmatpush2.msra.mxu0 0.0
    %1789 = vmatprep.subr.mxu0 0.0
    %1790 = vmatpush2.msra.mxu0 0.0
    %1791 = vmatprep.subr.mxu0 0.0
    %1792 = vmatpush2.msra.mxu0 0.0
    %1793 = vmatprep.subr.mxu0 0.0
    %1794 = vmatpush2.msra.mxu0 0.0
    %1795 = vmatprep.subr.mxu0 0.0
    %1796 = vmatpush2.msra.mxu0 0.0
    %1797 = vmatprep.subr.mxu0 0.0
    %1798 = vmatpush2.msra.mxu0 0.0
    %1799 = vmatprep.subr.mxu0 0.0
    %1800 = vmatpush2.msra.mxu0 0.0
    %1801 = vmatprep.subr.mxu0 0.0
    %1802 = vmatpush2.msra.mxu0 0.0
    %1803 = vmatprep.subr.mxu0 0.0
    %1804 = vmatpush2.msra.mxu0 0.0
    %1805 = vmatprep.subr.mxu0 0.0
    %1806 = vmatpush2.msra.mxu0 0.0
    %1807 = vmatprep.subr.mxu0 0.0
    %1808 = vmatpush2.msra.mxu0 0.0
    %1809 = vmatprep.subr.mxu0 0.0
    %1810 = vmatpush2.msra.mxu0 0.0
    %1811 = vmatprep.subr.mxu0 0.0
    %1812 = vmatpush2.msra.mxu0 0.0
    %1813 = vmatprep.subr.mxu0 0.0
    %1814 = vmatpush2.msra.mxu0 0.0
    %1815 = vmatprep.subr.mxu0 0.0
    %1816 = vmatpush2.msra.mxu0 0.0
    %1817 = vmatprep.mubr.f32.mxu0 0.0
    %1818 = vmatmul.mubr.f32.gmra.mxu0 %v1751
    %v1819 = vpop.f32.mrf.mxu0
    %v1820 = vadd.f32 %v1750, %v1819
    %v1821 = vpop.f32.mrf.mxu0
    %1822 = vdwg.mxu0
    %v1823 = vxor.u32 %v1820, 2147483648
    %v1824 = vmul.f32 %v1823, 1.442695
    %v1825 = vpow.pop %v1824
    %v1826 = vadd.f32 %v1825, 1.0
    %v1827 = vrcp.pop %v1826
    %v1828 = vmul.f32 1.0, %v1827
    %v1829 = vtanh.pop %v1820
    %v1830 = vmul.f32 %v1828, %v1738
    %1832 = vrot.lane.b32.xlu0 %v1829, 64
    %v1833 = vpop.permute.xlu0 %1832
    %v1835 = vmul.f32 %v1828, %v1833
    %1837 = vrot.lane.b32.xlu0 %v1835, 32
    %v1838 = vpop.permute.xlu0 %1837
    %v1840 = vadd.f32 %v1830, %v1838
    %v1841 = vtanh.pop %v1840
    %1843 = vrot.lane.b32.xlu0 %v1841, 64
    %v1844 = vpop.permute.xlu0 %1843
    %v1846 = vmul.f32 %v1828, %v1844
    %1848 = vrot.lane.b32.xlu0 %v1846, 32
    %v1849 = vpop.permute.xlu0 %1848
    %1851 = vst.msk [vmem:[%s918] sm:$0x3] %vm710, %v1849
    %v1852 = vld [vmem:[%s920] sm:$0x3]
    %v1853 = vsel %vm244, %v1849, 0
    %1855 = vmatprep.subr.mxu0 0.0
    %1856 = vmatpush1.msra.mxu0 0.0
    %1857 = vmatprep.subr.mxu0 0.0
    %1858 = vmatpush1.msra.mxu0 0.0
    %1859 = vmatprep.subr.mxu0 0.0
    %1860 = vmatpush1.msra.mxu0 0.0
    %1861 = vmatprep.subr.mxu0 0.0
    %1862 = vmatpush1.msra.mxu0 0.0
    %1863 = vmatprep.subr.mxu0 0.0
    %1864 = vmatpush1.msra.mxu0 0.0
    %1865 = vmatprep.subr.mxu0 0.0
    %1866 = vmatpush1.msra.mxu0 0.0
    %1867 = vmatprep.subr.mxu0 0.0
    %1868 = vmatpush1.msra.mxu0 0.0
    %1869 = vmatprep.subr.mxu0 0.0
    %1870 = vmatpush1.msra.mxu0 0.0
    %1871 = vmatprep.subr.mxu0 0.0
    %1872 = vmatpush1.msra.mxu0 0.0
    %1873 = vmatprep.subr.mxu0 0.0
    %1874 = vmatpush1.msra.mxu0 0.0
    %1875 = vmatprep.subr.mxu0 0.0
    %1876 = vmatpush1.msra.mxu0 0.0
    %1877 = vmatprep.subr.mxu0 0.0
    %1878 = vmatpush1.msra.mxu0 0.0
    %1879 = vmatprep.subr.mxu0 0.0
    %1880 = vmatpush1.msra.mxu0 %v1444
    %1881 = vmatprep.subr.mxu0 0.0
    %1882 = vmatpush1.msra.mxu0 %v1443
    %1883 = vmatprep.subr.mxu0 0.0
    %1884 = vmatpush1.msra.mxu0 %v1442
    %1885 = vmatprep.subr.mxu0 0.0
    %1886 = vmatpush1.msra.mxu0 %v1441
    %1887 = vmatprep.subr.mxu0 0.0
    %1888 = vmatpush2.msra.mxu0 0.0
    %1889 = vmatprep.subr.mxu0 0.0
    %1890 = vmatpush2.msra.mxu0 0.0
    %1891 = vmatprep.subr.mxu0 0.0
    %1892 = vmatpush2.msra.mxu0 0.0
    %1893 = vmatprep.subr.mxu0 0.0
    %1894 = vmatpush2.msra.mxu0 0.0
    %1895 = vmatprep.subr.mxu0 0.0
    %1896 = vmatpush2.msra.mxu0 0.0
    %1897 = vmatprep.subr.mxu0 0.0
    %1898 = vmatpush2.msra.mxu0 0.0
    %1899 = vmatprep.subr.mxu0 0.0
    %1900 = vmatpush2.msra.mxu0 0.0
    %1901 = vmatprep.subr.mxu0 0.0
    %1902 = vmatpush2.msra.mxu0 0.0
    %1903 = vmatprep.subr.mxu0 0.0
    %1904 = vmatpush2.msra.mxu0 0.0
    %1905 = vmatprep.subr.mxu0 0.0
    %1906 = vmatpush2.msra.mxu0 0.0
    %1907 = vmatprep.subr.mxu0 0.0
    %1908 = vmatpush2.msra.mxu0 0.0
    %1909 = vmatprep.subr.mxu0 0.0
    %1910 = vmatpush2.msra.mxu0 0.0
    %1911 = vmatprep.subr.mxu0 0.0
    %1912 = vmatpush2.msra.mxu0 0.0
    %1913 = vmatprep.subr.mxu0 0.0
    %1914 = vmatpush2.msra.mxu0 0.0
    %1915 = vmatprep.subr.mxu0 0.0
    %1916 = vmatpush2.msra.mxu0 0.0
    %1917 = vmatprep.subr.mxu0 0.0
    %1918 = vmatpush2.msra.mxu0 0.0
    %1919 = vmatprep.mubr.f32.mxu0 0.0
    %1920 = vmatmul.mubr.f32.gmra.mxu0 %v1853
    %v1921 = vpop.f32.mrf.mxu0
    %v1922 = vadd.f32 %v1852, %v1921
    %v1923 = vpop.f32.mrf.mxu0
    %1924 = vdwg.mxu0
    %v1925 = vxor.u32 %v1922, 2147483648
    %v1926 = vmul.f32 %v1925, 1.442695
    %v1927 = vpow.pop %v1926
    %v1928 = vadd.f32 %v1927, 1.0
    %v1929 = vrcp.pop %v1928
    %v1930 = vmul.f32 1.0, %v1929
    %v1931 = vtanh.pop %v1922
    %v1932 = vmul.f32 %v1930, %v1840
    %1934 = vrot.lane.b32.xlu0 %v1931, 64
    %v1935 = vpop.permute.xlu0 %1934
    %v1937 = vmul.f32 %v1930, %v1935
    %1939 = vrot.lane.b32.xlu0 %v1937, 32
    %v1940 = vpop.permute.xlu0 %1939
    %v1942 = vadd.f32 %v1932, %v1940
    %v1943 = vtanh.pop %v1942
    %1945 = vrot.lane.b32.xlu0 %v1943, 64
    %v1946 = vpop.permute.xlu0 %1945
    %v1948 = vmul.f32 %v1930, %v1946
    %1950 = vrot.lane.b32.xlu0 %v1948, 32
    %v1951 = vpop.permute.xlu0 %1950
    %1953 = vst.msk [vmem:[%s1022] sm:$0x3] %vm710, %v1951
    %v1954 = vld [vmem:[%s1024] sm:$0x3]
    %v1955 = vsel %vm244, %v1951, 0
    %1957 = vmatprep.subr.mxu0 0.0
    %1958 = vmatpush1.msra.mxu0 0.0
    %1959 = vmatprep.subr.mxu0 0.0
    %1960 = vmatpush1.msra.mxu0 0.0
    %1961 = vmatprep.subr.mxu0 0.0
    %1962 = vmatpush1.msra.mxu0 0.0
    %1963 = vmatprep.subr.mxu0 0.0
    %1964 = vmatpush1.msra.mxu0 0.0
    %1965 = vmatprep.subr.mxu0 0.0
    %1966 = vmatpush1.msra.mxu0 0.0
    %1967 = vmatprep.subr.mxu0 0.0
    %1968 = vmatpush1.msra.mxu0 0.0
    %1969 = vmatprep.subr.mxu0 0.0
    %1970 = vmatpush1.msra.mxu0 0.0
    %1971 = vmatprep.subr.mxu0 0.0
    %1972 = vmatpush1.msra.mxu0 0.0
    %1973 = vmatprep.subr.mxu0 0.0
    %1974 = vmatpush1.msra.mxu0 0.0
    %1975 = vmatprep.subr.mxu0 0.0
    %1976 = vmatpush1.msra.mxu0 0.0
    %1977 = vmatprep.subr.mxu0 0.0
    %1978 = vmatpush1.msra.mxu0 0.0
    %1979 = vmatprep.subr.mxu0 0.0
    %1980 = vmatpush1.msra.mxu0 0.0
    %1981 = vmatprep.subr.mxu0 0.0
    %1982 = vmatpush1.msra.mxu0 %v1444
    %1983 = vmatprep.subr.mxu0 0.0
    %1984 = vmatpush1.msra.mxu0 %v1443
    %1985 = vmatprep.subr.mxu0 0.0
    %1986 = vmatpush1.msra.mxu0 %v1442
    %1987 = vmatprep.subr.mxu0 0.0
    %1988 = vmatpush1.msra.mxu0 %v1441
    %1989 = vmatprep.subr.mxu0 0.0
    %1990 = vmatpush2.msra.mxu0 0.0
    %1991 = vmatprep.subr.mxu0 0.0
    %1992 = vmatpush2.msra.mxu0 0.0
    %1993 = vmatprep.subr.mxu0 0.0
    %1994 = vmatpush2.msra.mxu0 0.0
    %1995 = vmatprep.subr.mxu0 0.0
    %1996 = vmatpush2.msra.mxu0 0.0
    %1997 = vmatprep.subr.mxu0 0.0
    %1998 = vmatpush2.msra.mxu0 0.0
    %1999 = vmatprep.subr.mxu0 0.0
    %2000 = vmatpush2.msra.mxu0 0.0
    %2001 = vmatprep.subr.mxu0 0.0
    %2002 = vmatpush2.msra.mxu0 0.0
    %2003 = vmatprep.subr.mxu0 0.0
    %2004 = vmatpush2.msra.mxu0 0.0
    %2005 = vmatprep.subr.mxu0 0.0
    %2006 = vmatpush2.msra.mxu0 0.0
    %2007 = vmatprep.subr.mxu0 0.0
    %2008 = vmatpush2.msra.mxu0 0.0
    %2009 = vmatprep.subr.mxu0 0.0
    %2010 = vmatpush2.msra.mxu0 0.0
    %2011 = vmatprep.subr.mxu0 0.0
    %2012 = vmatpush2.msra.mxu0 0.0
    %2013 = vmatprep.subr.mxu0 0.0
    %2014 = vmatpush2.msra.mxu0 0.0
    %2015 = vmatprep.subr.mxu0 0.0
    %2016 = vmatpush2.msra.mxu0 0.0
    %2017 = vmatprep.subr.mxu0 0.0
    %2018 = vmatpush2.msra.mxu0 0.0
    %2019 = vmatprep.subr.mxu0 0.0
    %2020 = vmatpush2.msra.mxu0 0.0
    %2021 = vmatprep.mubr.f32.mxu0 0.0
    %2022 = vmatmul.mubr.f32.gmra.mxu0 %v1955
    %v2023 = vpop.f32.mrf.mxu0
    %v2024 = vadd.f32 %v1954, %v2023
    %v2025 = vpop.f32.mrf.mxu0
    %2026 = vdwg.mxu0
    %v2027 = vxor.u32 %v2024, 2147483648
    %v2028 = vmul.f32 %v2027, 1.442695
    %v2029 = vpow.pop %v2028
    %v2030 = vadd.f32 %v2029, 1.0
    %v2031 = vrcp.pop %v2030
    %v2032 = vmul.f32 1.0, %v2031
    %v2033 = vtanh.pop %v2024
    %v2034 = vmul.f32 %v2032, %v1942
    %2036 = vrot.lane.b32.xlu0 %v2033, 64
    %v2037 = vpop.permute.xlu0 %2036
    %v2039 = vmul.f32 %v2032, %v2037
    %2041 = vrot.lane.b32.xlu0 %v2039, 32
    %v2042 = vpop.permute.xlu0 %2041
    %v2044 = vadd.f32 %v2034, %v2042
    %v2045 = vtanh.pop %v2044
    %2047 = vrot.lane.b32.xlu0 %v2045, 64
    %v2048 = vpop.permute.xlu0 %2047
    %v2050 = vmul.f32 %v2032, %v2048
    %2052 = vrot.lane.b32.xlu0 %v2050, 32
    %v2053 = vpop.permute.xlu0 %2052
    %2055 = vst.msk [vmem:[%s1126] sm:$0x3] %vm710, %v2053
    %v2056 = vld [vmem:[%s1128] sm:$0x3]
    %v2057 = vsel %vm244, %v2053, 0
    %2059 = vmatprep.subr.mxu0 0.0
    %2060 = vmatpush1.msra.mxu0 0.0
    %2061 = vmatprep.subr.mxu0 0.0
    %2062 = vmatpush1.msra.mxu0 0.0
    %2063 = vmatprep.subr.mxu0 0.0
    %2064 = vmatpush1.msra.mxu0 0.0
    %2065 = vmatprep.subr.mxu0 0.0
    %2066 = vmatpush1.msra.mxu0 0.0
    %2067 = vmatprep.subr.mxu0 0.0
    %2068 = vmatpush1.msra.mxu0 0.0
    %2069 = vmatprep.subr.mxu0 0.0
    %2070 = vmatpush1.msra.mxu0 0.0
    %2071 = vmatprep.subr.mxu0 0.0
    %2072 = vmatpush1.msra.mxu0 0.0
    %2073 = vmatprep.subr.mxu0 0.0
    %2074 = vmatpush1.msra.mxu0 0.0
    %2075 = vmatprep.subr.mxu0 0.0
    %2076 = vmatpush1.msra.mxu0 0.0
    %2077 = vmatprep.subr.mxu0 0.0
    %2078 = vmatpush1.msra.mxu0 0.0
    %2079 = vmatprep.subr.mxu0 0.0
    %2080 = vmatpush1.msra.mxu0 0.0
    %2081 = vmatprep.subr.mxu0 0.0
    %2082 = vmatpush1.msra.mxu0 0.0
    %2083 = vmatprep.subr.mxu0 0.0
    %2084 = vmatpush1.msra.mxu0 %v1444
    %2085 = vmatprep.subr.mxu0 0.0
    %2086 = vmatpush1.msra.mxu0 %v1443
    %2087 = vmatprep.subr.mxu0 0.0
    %2088 = vmatpush1.msra.mxu0 %v1442
    %2089 = vmatprep.subr.mxu0 0.0
    %2090 = vmatpush1.msra.mxu0 %v1441
    %2091 = vmatprep.subr.mxu0 0.0
    %2092 = vmatpush2.msra.mxu0 0.0
    %2093 = vmatprep.subr.mxu0 0.0
    %2094 = vmatpush2.msra.mxu0 0.0
    %2095 = vmatprep.subr.mxu0 0.0
    %2096 = vmatpush2.msra.mxu0 0.0
    %2097 = vmatprep.subr.mxu0 0.0
    %2098 = vmatpush2.msra.mxu0 0.0
    %2099 = vmatprep.subr.mxu0 0.0
    %2100 = vmatpush2.msra.mxu0 0.0
    %2101 = vmatprep.subr.mxu0 0.0
    %2102 = vmatpush2.msra.mxu0 0.0
    %2103 = vmatprep.subr.mxu0 0.0
    %2104 = vmatpush2.msra.mxu0 0.0
    %2105 = vmatprep.subr.mxu0 0.0
    %2106 = vmatpush2.msra.mxu0 0.0
    %2107 = vmatprep.subr.mxu0 0.0
    %2108 = vmatpush2.msra.mxu0 0.0
    %2109 = vmatprep.subr.mxu0 0.0
    %2110 = vmatpush2.msra.mxu0 0.0
    %2111 = vmatprep.subr.mxu0 0.0
    %2112 = vmatpush2.msra.mxu0 0.0
    %2113 = vmatprep.subr.mxu0 0.0
    %2114 = vmatpush2.msra.mxu0 0.0
    %2115 = vmatprep.subr.mxu0 0.0
    %2116 = vmatpush2.msra.mxu0 0.0
    %2117 = vmatprep.subr.mxu0 0.0
    %2118 = vmatpush2.msra.mxu0 0.0
    %2119 = vmatprep.subr.mxu0 0.0
    %2120 = vmatpush2.msra.mxu0 0.0
    %2121 = vmatprep.subr.mxu0 0.0
    %2122 = vmatpush2.msra.mxu0 0.0
    %2123 = vmatprep.mubr.f32.mxu0 0.0
    %2124 = vmatmul.mubr.f32.gmra.mxu0 %v2057
    %v2125 = vpop.f32.mrf.mxu0
    %v2126 = vadd.f32 %v2056, %v2125
    %v2127 = vpop.f32.mrf.mxu0
    %2128 = vdwg.mxu0
    %v2129 = vxor.u32 %v2126, 2147483648
    %v2130 = vmul.f32 %v2129, 1.442695
    %v2131 = vpow.pop %v2130
    %v2132 = vadd.f32 %v2131, 1.0
    %v2133 = vrcp.pop %v2132
    %v2134 = vmul.f32 1.0, %v2133
    %v2135 = vtanh.pop %v2126
    %v2136 = vmul.f32 %v2134, %v2044
    %2138 = vrot.lane.b32.xlu0 %v2135, 64
    %v2139 = vpop.permute.xlu0 %2138
    %v2141 = vmul.f32 %v2134, %v2139
    %2143 = vrot.lane.b32.xlu0 %v2141, 32
    %v2144 = vpop.permute.xlu0 %2143
    %v2146 = vadd.f32 %v2136, %v2144
    %v2147 = vtanh.pop %v2146
    %2149 = vrot.lane.b32.xlu0 %v2147, 64
    %v2150 = vpop.permute.xlu0 %2149
    %v2152 = vmul.f32 %v2134, %v2150
    %2154 = vrot.lane.b32.xlu0 %v2152, 32
    %v2155 = vpop.permute.xlu0 %2154
    %2157 = vst.msk [vmem:[%s1230] sm:$0x3] %vm710, %v2155
    %v2158 = vld [vmem:[%s1232] sm:$0x3]
    %v2159 = vsel %vm244, %v2155, 0
    %2161 = vmatprep.subr.mxu0 0.0
    %2162 = vmatpush1.msra.mxu0 0.0
    %2163 = vmatprep.subr.mxu0 0.0
    %2164 = vmatpush1.msra.mxu0 0.0
    %2165 = vmatprep.subr.mxu0 0.0
    %2166 = vmatpush1.msra.mxu0 0.0
    %2167 = vmatprep.subr.mxu0 0.0
    %2168 = vmatpush1.msra.mxu0 0.0
    %2169 = vmatprep.subr.mxu0 0.0
    %2170 = vmatpush1.msra.mxu0 0.0
    %2171 = vmatprep.subr.mxu0 0.0
    %2172 = vmatpush1.msra.mxu0 0.0
    %2173 = vmatprep.subr.mxu0 0.0
    %2174 = vmatpush1.msra.mxu0 0.0
    %2175 = vmatprep.subr.mxu0 0.0
    %2176 = vmatpush1.msra.mxu0 0.0
    %2177 = vmatprep.subr.mxu0 0.0
    %2178 = vmatpush1.msra.mxu0 0.0
    %2179 = vmatprep.subr.mxu0 0.0
    %2180 = vmatpush1.msra.mxu0 0.0
    %2181 = vmatprep.subr.mxu0 0.0
    %2182 = vmatpush1.msra.mxu0 0.0
    %2183 = vmatprep.subr.mxu0 0.0
    %2184 = vmatpush1.msra.mxu0 0.0
    %2185 = vmatprep.subr.mxu0 0.0
    %2186 = vmatpush1.msra.mxu0 %v1444
    %2187 = vmatprep.subr.mxu0 0.0
    %2188 = vmatpush1.msra.mxu0 %v1443
    %2189 = vmatprep.subr.mxu0 0.0
    %2190 = vmatpush1.msra.mxu0 %v1442
    %2191 = vmatprep.subr.mxu0 0.0
    %2192 = vmatpush1.msra.mxu0 %v1441
    %2193 = vmatprep.subr.mxu0 0.0
    %2194 = vmatpush2.msra.mxu0 0.0
    %2195 = vmatprep.subr.mxu0 0.0
    %2196 = vmatpush2.msra.mxu0 0.0
    %2197 = vmatprep.subr.mxu0 0.0
    %2198 = vmatpush2.msra.mxu0 0.0
    %2199 = vmatprep.subr.mxu0 0.0
    %2200 = vmatpush2.msra.mxu0 0.0
    %2201 = vmatprep.subr.mxu0 0.0
    %2202 = vmatpush2.msra.mxu0 0.0
    %2203 = vmatprep.subr.mxu0 0.0
    %2204 = vmatpush2.msra.mxu0 0.0
    %2205 = vmatprep.subr.mxu0 0.0
    %2206 = vmatpush2.msra.mxu0 0.0
    %2207 = vmatprep.subr.mxu0 0.0
    %2208 = vmatpush2.msra.mxu0 0.0
    %2209 = vmatprep.subr.mxu0 0.0
    %2210 = vmatpush2.msra.mxu0 0.0
    %2211 = vmatprep.subr.mxu0 0.0
    %2212 = vmatpush2.msra.mxu0 0.0
    %2213 = vmatprep.subr.mxu0 0.0
    %2214 = vmatpush2.msra.mxu0 0.0
    %2215 = vmatprep.subr.mxu0 0.0
    %2216 = vmatpush2.msra.mxu0 0.0
    %2217 = vmatprep.subr.mxu0 0.0
    %2218 = vmatpush2.msra.mxu0 0.0
    %2219 = vmatprep.subr.mxu0 0.0
    %2220 = vmatpush2.msra.mxu0 0.0
    %2221 = vmatprep.subr.mxu0 0.0
    %2222 = vmatpush2.msra.mxu0 0.0
    %2223 = vmatprep.subr.mxu0 0.0
    %2224 = vmatpush2.msra.mxu0 0.0
    %2225 = vmatprep.mubr.f32.mxu0 0.0
    %2226 = vmatmul.mubr.f32.gmra.mxu0 %v2159
    %v2227 = vpop.f32.mrf.mxu0
    %v2228 = vadd.f32 %v2158, %v2227
    %v2229 = vpop.f32.mrf.mxu0
    %2230 = vdwg.mxu0
    %v2231 = vxor.u32 %v2228, 2147483648
    %v2232 = vmul.f32 %v2231, 1.442695
    %v2233 = vpow.pop %v2232
    %v2234 = vadd.f32 %v2233, 1.0
    %v2235 = vrcp.pop %v2234
    %v2236 = vmul.f32 1.0, %v2235
    %v2237 = vtanh.pop %v2228
    %v2238 = vmul.f32 %v2236, %v2146
    %2240 = vrot.lane.b32.xlu0 %v2237, 64
    %v2241 = vpop.permute.xlu0 %2240
    %v2243 = vmul.f32 %v2236, %v2241
    %2245 = vrot.lane.b32.xlu0 %v2243, 32
    %v2246 = vpop.permute.xlu0 %2245
    %v2248 = vadd.f32 %v2238, %v2246
    %v2249 = vtanh.pop %v2248
    %2251 = vrot.lane.b32.xlu0 %v2249, 64
    %v2252 = vpop.permute.xlu0 %2251
    %v2254 = vmul.f32 %v2236, %v2252
    %2256 = vrot.lane.b32.xlu0 %v2254, 32
    %v2257 = vpop.permute.xlu0 %2256
    %2259 = vst.msk [vmem:[%s1334] sm:$0x3] %vm710, %v2257
    %v2260 = vld [vmem:[%s1336] sm:$0x3]
    %v2261 = vsel %vm244, %v2257, 0
    %2263 = vmatprep.subr.mxu0 0.0
    %2264 = vmatpush1.msra.mxu0 0.0
    %2265 = vmatprep.subr.mxu0 0.0
    %2266 = vmatpush1.msra.mxu0 0.0
    %2267 = vmatprep.subr.mxu0 0.0
    %2268 = vmatpush1.msra.mxu0 0.0
    %2269 = vmatprep.subr.mxu0 0.0
    %2270 = vmatpush1.msra.mxu0 0.0
    %2271 = vmatprep.subr.mxu0 0.0
    %2272 = vmatpush1.msra.mxu0 0.0
    %2273 = vmatprep.subr.mxu0 0.0
    %2274 = vmatpush1.msra.mxu0 0.0
    %2275 = vmatprep.subr.mxu0 0.0
    %2276 = vmatpush1.msra.mxu0 0.0
    %2277 = vmatprep.subr.mxu0 0.0
    %2278 = vmatpush1.msra.mxu0 0.0
    %2279 = vmatprep.subr.mxu0 0.0
    %2280 = vmatpush1.msra.mxu0 0.0
    %2281 = vmatprep.subr.mxu0 0.0
    %2282 = vmatpush1.msra.mxu0 0.0
    %2283 = vmatprep.subr.mxu0 0.0
    %2284 = vmatpush1.msra.mxu0 0.0
    %2285 = vmatprep.subr.mxu0 0.0
    %2286 = vmatpush1.msra.mxu0 0.0
    %2287 = vmatprep.subr.mxu0 0.0
    %2288 = vmatpush1.msra.mxu0 %v1444
    %2289 = vmatprep.subr.mxu0 0.0
    %2290 = vmatpush1.msra.mxu0 %v1443
    %2291 = vmatprep.subr.mxu0 0.0
    %2292 = vmatpush1.msra.mxu0 %v1442
    %2293 = vmatprep.subr.mxu0 0.0
    %2294 = vmatpush1.msra.mxu0 %v1441
    %2295 = vmatprep.subr.mxu0 0.0
    %2296 = vmatpush2.msra.mxu0 0.0
    %2297 = vmatprep.subr.mxu0 0.0
    %2298 = vmatpush2.msra.mxu0 0.0
    %2299 = vmatprep.subr.mxu0 0.0
    %2300 = vmatpush2.msra.mxu0 0.0
    %2301 = vmatprep.subr.mxu0 0.0
    %2302 = vmatpush2.msra.mxu0 0.0
    %2303 = vmatprep.subr.mxu0 0.0
    %2304 = vmatpush2.msra.mxu0 0.0
    %2305 = vmatprep.subr.mxu0 0.0
    %2306 = vmatpush2.msra.mxu0 0.0
    %2307 = vmatprep.subr.mxu0 0.0
    %2308 = vmatpush2.msra.mxu0 0.0
    %2309 = vmatprep.subr.mxu0 0.0
    %2310 = vmatpush2.msra.mxu0 0.0
    %2311 = vmatprep.subr.mxu0 0.0
    %2312 = vmatpush2.msra.mxu0 0.0
    %2313 = vmatprep.subr.mxu0 0.0
    %2314 = vmatpush2.msra.mxu0 0.0
    %2315 = vmatprep.subr.mxu0 0.0
    %2316 = vmatpush2.msra.mxu0 0.0
    %2317 = vmatprep.subr.mxu0 0.0
    %2318 = vmatpush2.msra.mxu0 0.0
    %2319 = vmatprep.subr.mxu0 0.0
    %2320 = vmatpush2.msra.mxu0 0.0
    %2321 = vmatprep.subr.mxu0 0.0
    %2322 = vmatpush2.msra.mxu0 0.0
    %2323 = vmatprep.subr.mxu0 0.0
    %2324 = vmatpush2.msra.mxu0 0.0
    %2325 = vmatprep.subr.mxu0 0.0
    %2326 = vmatpush2.msra.mxu0 0.0
    %2327 = vmatprep.mubr.f32.mxu0 0.0
    %2328 = vmatmul.mubr.f32.gmra.mxu0 %v2261
    %v2329 = vpop.f32.mrf.mxu0
    %v2330 = vadd.f32 %v2260, %v2329
    %v2331 = vpop.f32.mrf.mxu0
    %2332 = vdwg.mxu0
    %v2333 = vxor.u32 %v2330, 2147483648
    %v2334 = vmul.f32 %v2333, 1.442695
    %v2335 = vpow.pop %v2334
    %v2336 = vadd.f32 %v2335, 1.0
    %v2337 = vrcp.pop %v2336
    %v2338 = vmul.f32 1.0, %v2337
    %v2339 = vtanh.pop %v2330
    %v2340 = vmul.f32 %v2338, %v2248
    %2342 = vrot.lane.b32.xlu0 %v2339, 64
    %v2343 = vpop.permute.xlu0 %2342
    %v2345 = vmul.f32 %v2338, %v2343
    %2347 = vrot.lane.b32.xlu0 %v2345, 32
    %v2348 = vpop.permute.xlu0 %2347
    %v2350 = vadd.f32 %v2340, %v2348
    %v2351 = vtanh.pop %v2350
    %2353 = vrot.lane.b32.xlu0 %v2351, 64
    %v2354 = vpop.permute.xlu0 %2353
    %v2356 = vmul.f32 %v2338, %v2354
    %2358 = vrot.lane.b32.xlu0 %v2356, 32
    %v2359 = vpop.permute.xlu0 %2358
    %2361 = vst.msk [vmem:[%s1438] sm:$0x3] %vm710, %v2359
    %v2362 = vld [vmem:[#allocation2] sm:$0xff]
    %v2363 = vld [vmem:[#allocation2 + $0x8] sm:$0xff]
    %v2364 = vld [vmem:[%s7] sm:$0xff]
    %v2365 = vld [vmem:[%s7 + $0x8] sm:$0xff]
    %v2366 = vld [vmem:[%s7 + $0x10] sm:$0xff]
    %v2367 = vld [vmem:[%s7 + $0x18] sm:$0xff]
    %v2368 = vld [vmem:[%s8] sm:$0x1]
    %v2370 = vlaneseq
    %v2371 = vshrl.u32 %v2370, 7
    %v2372 = vsub.s32 0, %v2371
    %v2373 = vrot.slane %v2368, %v2372
    %v2376 = vsel %vm244, %v2362, 0
    %v2379 = vsel %vm244, %v2363, 0
    %2381 = vmatprep.subr.mxu0 0.0
    %2382 = vmatpush1.msra.mxu0 0.0
    %2383 = vmatprep.subr.mxu0 0.0
    %2384 = vmatpush1.msra.mxu0 0.0
    %2385 = vmatprep.subr.mxu0 0.0
    %2386 = vmatpush1.msra.mxu0 0.0
    %2387 = vmatprep.subr.mxu0 0.0
    %2388 = vmatpush1.msra.mxu0 0.0
    %2389 = vmatprep.subr.mxu0 0.0
    %2390 = vmatpush1.msra.mxu0 0.0
    %2391 = vmatprep.subr.mxu0 0.0
    %2392 = vmatpush1.msra.mxu0 0.0
    %2393 = vmatprep.subr.mxu0 0.0
    %2394 = vmatpush1.msra.mxu0 0.0
    %2395 = vmatprep.subr.mxu0 0.0
    %2396 = vmatpush1.msra.mxu0 0.0
    %2397 = vmatprep.subr.mxu0 0.0
    %2398 = vmatpush1.msra.mxu0 0.0
    %2399 = vmatprep.subr.mxu0 0.0
    %2400 = vmatpush1.msra.mxu0 0.0
    %2401 = vmatprep.subr.mxu0 0.0
    %2402 = vmatpush1.msra.mxu0 0.0
    %2403 = vmatprep.subr.mxu0 0.0
    %2404 = vmatpush1.msra.mxu0 0.0
    %2405 = vmatprep.subr.mxu0 0.0
    %2406 = vmatpush1.msra.mxu0 %v2367
    %2407 = vmatprep.subr.mxu0 0.0
    %2408 = vmatpush1.msra.mxu0 %v2366
    %2409 = vmatprep.subr.mxu0 0.0
    %2410 = vmatpush1.msra.mxu0 %v2365
    %2411 = vmatprep.subr.mxu0 0.0
    %2412 = vmatpush1.msra.mxu0 %v2364
    %2413 = vmatprep.subr.mxu0 0.0
    %2414 = vmatpush2.msra.mxu0 0.0
    %2415 = vmatprep.subr.mxu0 0.0
    %2416 = vmatpush2.msra.mxu0 0.0
    %2417 = vmatprep.subr.mxu0 0.0
    %2418 = vmatpush2.msra.mxu0 0.0
    %2419 = vmatprep.subr.mxu0 0.0
    %2420 = vmatpush2.msra.mxu0 0.0
    %2421 = vmatprep.subr.mxu0 0.0
    %2422 = vmatpush2.msra.mxu0 0.0
    %2423 = vmatprep.subr.mxu0 0.0
    %2424 = vmatpush2.msra.mxu0 0.0
    %2425 = vmatprep.subr.mxu0 0.0
    %2426 = vmatpush2.msra.mxu0 0.0
    %2427 = vmatprep.subr.mxu0 0.0
    %2428 = vmatpush2.msra.mxu0 0.0
    %2429 = vmatprep.subr.mxu0 0.0
    %2430 = vmatpush2.msra.mxu0 0.0
    %2431 = vmatprep.subr.mxu0 0.0
    %2432 = vmatpush2.msra.mxu0 0.0
    %2433 = vmatprep.subr.mxu0 0.0
    %2434 = vmatpush2.msra.mxu0 0.0
    %2435 = vmatprep.subr.mxu0 0.0
    %2436 = vmatpush2.msra.mxu0 0.0
    %2437 = vmatprep.subr.mxu0 0.0
    %2438 = vmatpush2.msra.mxu0 0.0
    %2439 = vmatprep.subr.mxu0 0.0
    %2440 = vmatpush2.msra.mxu0 0.0
    %2441 = vmatprep.subr.mxu0 0.0
    %2442 = vmatpush2.msra.mxu0 0.0
    %2443 = vmatprep.subr.mxu0 0.0
    %2444 = vmatpush2.msra.mxu0 0.0
    %2445 = vmatprep.mubr.f32.mxu0 0.0
    %2446 = vmatmul.mubr.f32.gmra.mxu0 %v2376
    %v2447 = vpop.f32.mrf.mxu0
    %v2448 = vadd.f32 %v2373, %v2447
    %v2449 = vpop.f32.mrf.mxu0
    %2450 = vmatprep.mubr.f32.mxu0 0.0
    %2451 = vmatmul.mubr.f32.gmra.mxu0 %v2379
    %v2452 = vpop.f32.mrf.mxu0
    %v2453 = vadd.f32 %v2373, %v2452
    %v2454 = vpop.f32.mrf.mxu0
    %2455 = vdwg.mxu0
    %2456 = vst.msk [vmem:[#allocation16] sm:$0xff] %vm154, %v2448
    %2457 = vst.msk [vmem:[#allocation16 + $0x8] sm:$0xff] %vm154, %v2453
    // Predicated region
    $region90: #{tpu_custom_call.1} parent=1 // pred_check
      _
    $region91: #{tpu_custom_call.1} parent=1 // pred_check_branch
      %2459 = sbr.rel (0) target = $region93
    $region92: #{tpu_custom_call.1} parent=1 // pred_region
      %s2461 = ssub.s32 256, 256
      %2462 = vsyncadd [#allocation6], %s2461
      %s2463 = sshll.u32 [#allocation16], 4
      %s2464 = int_to_ptr.vmem [resolvable:$true] %s2463
      %2469 = dma.vmem_to_hbm [thread:$0]  %s2464, 256, %s15, [#allocation6], 128, 128, 8
    $region93: #{tpu_custom_call.1} parent=1 // pred_fallthru
      _
    // Predicated region
    $region94: #{tpu_custom_call.1} parent=1 // pred_check
      _
    $region95: #{tpu_custom_call.1} parent=1 // pred_check_branch
      %2471 = sbr.rel (0) target = $region97
    $region96: #{tpu_custom_call.1} parent=1 // pred_region
      %2472 = dma.done [#allocation6], 256
    $region97: #{tpu_custom_call.1} parent=1 // pred_fallthru
      _
    %2473 = vsyncpa [#allocation5], 1
    %2474 = vsyncpa [#allocation8], 1
    %2475 = vsyncpa [#allocation11], 1
    %2476 = vsyncpa [#allocation14], 1
    %2477 = vsyncpa [#allocation6], 1

</llo_original>
